<compile_context>
chip_gen: v7x
topology: tpu7x:2x2x1
jax: 0.10.0
libtpu: 0.0.40
codegen_flags: <defaults>
</compile_context>

<pallas_src>
import functools

import jax
import jax.numpy as jnp
import numpy as np
from jax.experimental import pallas as pl
from jax.experimental.pallas import tpu as pltpu


def _round_up(v, m):
    return ((v + m - 1) // m) * m


# ---------------------------------------------------------------------------
# Fused Pallas kernel: whole Headtails forward, B samples per grid step
# ---------------------------------------------------------------------------
def _headtails_kernel(coef_ref, x_ref, w1_ref, b1_ref, bw1_ref, bb1_ref,
                      bw2_ref, bb2_ref, s2_ref, t2_ref, w2_ref, b2_ref,
                      o_ref, tap_scr, *, H, W, B, layers, cin_pad, cmid_pad,
                      cmax):
    HW = H * W
    BHW = B * HW

    # ---- per-sample boundary masks, built & pre-broadcast ONCE --------------
    # Local position q = p % HW guarantees rolls over the batched lane axis
    # never read across sample boundaries (those taps are masked to zero).
    p = jax.lax.broadcasted_iota(jnp.int32, (1, BHW), 1)
    q = p % HW                          # position within the sample
    xcol = q % W                        # column within the sample

    def tap_mask(dy, dx):
        conds = []
        if dy == -1:
            conds.append(q >= W)
        elif dy == 1:
            conds.append(q < (H - 1) * W)
        if dx == -1:
            conds.append(xcol >= 1)
        elif dx == 1:
            conds.append(xcol <= W - 2)
        if not conds:
            return None
        ok = conds[0]
        for c in conds[1:]:
            ok = jnp.logical_and(ok, c)
        # pre-broadcast to the working channel height (broadcast_in_dim is
        # not CSE'd, so do it once here instead of inside every conv call)
        return jnp.broadcast_to(ok.astype(jnp.float32), (cmax, BHW))

    masks = {(dy, dx): tap_mask(dy, dx)
             for dy in (-1, 0, 1) for dx in (-1, 0, 1)}

    # ---- 3x3 same-pad conv as ONE MXU matmul over a 9*cpad contraction ------
    # Taps go into a persistent, sublane-aligned f32 VMEM scratch (cpad is a
    # multiple of 8), then one bf16 matmul with f32 accumulation.
    def conv3x3(xv, w, b, cpad):
        ti = 0
        for dy in (-1, 0, 1):
            for dx in (-1, 0, 1):
                off = dy * W + dx
                sh = xv if off == 0 else pltpu.roll(
                    xv, shift=(-off) % BHW, axis=1)
                m = masks[(dy, dx)]
                if m is not None:
                    mm = m if cpad == cmax else m[:cpad]
                    sh = sh * mm
                tap_scr[ti * cpad:(ti + 1) * cpad, :] = sh
                ti += 1
        big = tap_scr[...] if 9 * cpad == tap_scr.shape[0] \
            else tap_scr[0:9 * cpad, :]
        return jnp.dot(w, big.astype(jnp.bfloat16),
                       preferred_element_type=jnp.float32) + b

    # ---- forward -------------------------------------------------------------
    x = x_ref[...].astype(jnp.float32)                      # (cin_pad, BHW)

    # head: bn1 already folded into (w1, b1)
    h = conv3x3(x, w1_ref[...], b1_ref[...], cin_pad)       # (cmid_pad, BHW)
    reaction = h
    out = h

    # Interlayers, eval mode: prlayers_num == layers_num.
    # TODO(synk): training-mode stochastic depth (HalfNormal sample) not modeled.
    # TODO(synk): at production L/Cmid on v7x, stream block weights over a second
    #   "arbitrary" grid axis instead of this fully unrolled Python loop.
    for i in range(layers):
        c1 = coef_ref[2 * i]
        c2 = coef_ref[2 * i + 1]
        t = jnp.maximum(conv3x3(out, bw1_ref[i], bb1_ref[i], cmid_pad), 0.0)
        t2 = conv3x3(t, bw2_ref[i], bb2_ref[i], cmid_pad)
        out = c1 * t2 + c2 * (reaction - out) + out          # fused VPU epilogue

    # tail: bn2 as per-channel affine (exact w.r.t. conv2's zero padding)
    out = out * s2_ref[...] + t2_ref[...]
    y = conv3x3(out, w2_ref[...], b2_ref[...], cmid_pad)     # (cout_pad, BHW)
    o_ref[...] = y.astype(o_ref.dtype)


# ---------------------------------------------------------------------------
# Wrapper: parameter folding / padding + single pallas_call
# ---------------------------------------------------------------------------
def _pick_batch_block(N, HW, lane_budget=4096):
    """Samples per grid step: widest lane-dense block under the lane budget.

    At large N this keeps >= 2 grid steps (both v7x TensorCores busy); at tiny
    N we prefer a single maximally lane-dense step.
    """
    B = max(1, min(N, lane_budget // HW))
    while N % B:
        B -= 1
    if B < N and (B * HW) % 128 != 0:
        B = N                          # full-axis block is always legal
    return B


def headtails_forward(x_nchw, params, eps=1e-5):
    N, Cin, H, W = x_nchw.shape
    HW = H * W
    Cmid = params["conv1_w"].shape[-1]
    Cout = params["conv2_w"].shape[-1]
    L = len(params["blocks"])

    cin_pad = _round_up(Cin, 8)
    cmid_pad = _round_up(Cmid, 8)
    cout_pad = _round_up(Cout, 8)
    cmax = max(cin_pad, cmid_pad)

    B = _pick_batch_block(N, HW)
    BHW = B * HW
    steps = N // B

    wdtype = jnp.bfloat16              # MXU-native operands, f32 accumulation

    def wmat(w_hwio, cin_p, cout_p):
        # (3,3,cin,cout) -> (cout_p, 9*cin_p); column = tap*cin_p + ci,
        # zero-padded so every tap slab lands on a sublane-tile boundary.
        kh, kw, cin, cout = w_hwio.shape
        w = jnp.zeros((kh * kw, cin_p, cout_p), jnp.float32)
        w = w.at[:, :cin, :cout].set(w_hwio.reshape(kh * kw, cin, cout))
        return w.reshape(kh * kw * cin_p, cout_p).T

    def padvec(v, n):
        return jnp.pad(v, (0, n - v.shape[0]))

    # fold bn1 into conv1 (exact: BN applied right after the conv)
    g1, be1, m1, v1 = params["bn1"]
    s1 = g1 * jax.lax.rsqrt(v1 + eps)
    w1 = wmat(params["conv1_w"] * s1[None, None, None, :], cin_pad,
              cmid_pad).astype(wdtype)
    b1 = padvec(s1 * (params["conv1_b"] - m1) + be1, cmid_pad)[:, None]

    # bn2 kept as per-channel affine (applied in-kernel before conv2)
    g2, be2, m2, v2 = params["bn2"]
    s2v = g2 * jax.lax.rsqrt(v2 + eps)
    s2 = padvec(s2v, cmid_pad)[:, None]
    t2 = padvec(be2 - m2 * s2v, cmid_pad)[:, None]

    w2 = wmat(params["conv2_w"], cmid_pad, cout_pad).astype(wdtype)
    b2 = padvec(params["conv2_b"], cout_pad)[:, None]

    bw1 = jnp.stack([wmat(blk["w1"], cmid_pad, cmid_pad)
                     for blk in params["blocks"]]).astype(wdtype)
    bb1 = jnp.stack([padvec(blk["b1"], cmid_pad)[:, None]
                     for blk in params["blocks"]])
    bw2 = jnp.stack([wmat(blk["w2"], cmid_pad, cmid_pad)
                     for blk in params["blocks"]]).astype(wdtype)
    bb2 = jnp.stack([padvec(blk["b2"], cmid_pad)[:, None]
                     for blk in params["blocks"]])

    # scalar reaction coefficients per block -> flat 1-D SMEM table
    sig_a = jax.nn.sigmoid(params["alpha1"])[0]
    sig_b = jax.nn.sigmoid(params["beta1"])[0]
    tc1 = jnp.tanh(params["c1"])[0]
    tcc1 = jnp.tanh(params["cc1"])[0]
    cvals = []
    for i, blk in enumerate(params["blocks"]):
        phi = tc1 * (i + 1.0) ** (-sig_a)
        psi = tcc1 * (i + 1.0) ** (-sig_b)
        cvals.append(blk["alpha"][0] * jnp.tanh(-phi))
        cvals.append(blk["beta"][0] * psi * jnp.tanh(psi))
    coefs = jnp.stack(cvals).astype(jnp.float32)              # (2*L,)

    # channel-major, batched lane layout: (cin_pad, N*HW)
    x2 = jnp.transpose(x_nchw, (1, 0, 2, 3)).reshape(Cin, N * HW)
    x2 = jnp.pad(x2, ((0, cin_pad - Cin), (0, 0)))

    # explicit VMEM bound (matters on v7x's 64 MiB VMEM)
    resident = sum(int(a.size) * a.dtype.itemsize
                   for a in (w1, b1, bw1, bb1, bw2, bb2, s2, t2, w2, b2))
    blocks_b = 2 * 4 * BHW * (cin_pad + cout_pad)   # dbl-buffered in/out blocks
    scratch_b = 4 * 9 * cmax * BHW
    act_b = 8 * 4 * cmid_pad * BHW                  # live activation headroom
    vmem_limit = int(min(max(2 * (2 * resident + blocks_b + scratch_b + act_b),
                             32 * 2 ** 20), 64 * 2 ** 20))

    kernel = functools.partial(
        _headtails_kernel, H=H, W=W, B=B, layers=L,
        cin_pad=cin_pad, cmid_pad=cmid_pad, cmax=cmax)

    y = pl.pallas_call(
        kernel,
        out_shape=jax.ShapeDtypeStruct((cout_pad, N * HW), x_nchw.dtype),
        grid=(steps,),
        in_specs=[
            pl.BlockSpec(memory_space=pltpu.MemorySpace.SMEM),           # coefs
            pl.BlockSpec((cin_pad, BHW), lambda n: (0, n)),              # x
            pl.BlockSpec((cmid_pad, 9 * cin_pad), lambda n: (0, 0)),     # w1
            pl.BlockSpec((cmid_pad, 1), lambda n: (0, 0)),               # b1
            pl.BlockSpec((L, cmid_pad, 9 * cmid_pad), lambda n: (0, 0, 0)),  # blk w1
            pl.BlockSpec((L, cmid_pad, 1), lambda n: (0, 0, 0)),             # blk b1
            pl.BlockSpec((L, cmid_pad, 9 * cmid_pad), lambda n: (0, 0, 0)),  # blk w2
            pl.BlockSpec((L, cmid_pad, 1), lambda n: (0, 0, 0)),             # blk b2
            pl.BlockSpec((cmid_pad, 1), lambda n: (0, 0)),               # bn2 scale
            pl.BlockSpec((cmid_pad, 1), lambda n: (0, 0)),               # bn2 shift
            pl.BlockSpec((cout_pad, 9 * cmid_pad), lambda n: (0, 0)),    # w2
            pl.BlockSpec((cout_pad, 1), lambda n: (0, 0)),               # b2
        ],
        out_specs=pl.BlockSpec((cout_pad, BHW), lambda n: (0, n)),
        scratch_shapes=[pltpu.VMEM((9 * cmax, BHW), jnp.float32)],
        compiler_params=pltpu.CompilerParams(
            dimension_semantics=("parallel",),
            vmem_limit_bytes=vmem_limit),
    )(coefs, x2, w1, b1, bw1, bb1, bw2, bb2, s2, t2, w2, b2)

    y = y[:Cout].reshape(Cout, N, H, W)
    return jnp.transpose(y, (1, 0, 2, 3))                      # NCHW


# ---------------------------------------------------------------------------
# Pure-JAX reference (for correctness check)
# ---------------------------------------------------------------------------
def _conv3x3_ref(x_nhwc, w_hwio, b):
    y = jax.lax.conv_general_dilated(
        x_nhwc, w_hwio, window_strides=(1, 1), padding="SAME",
        dimension_numbers=("NHWC", "HWIO", "NHWC"))
    return y + b[None, None, None, :]


def headtails_ref(x_nchw, params):
    x = jnp.transpose(x_nchw, (0, 2, 3, 1))

    def bn(v, p):
        g, be, m, va = p
        return (v - m) / jnp.sqrt(va + 1e-5) * g + be

    h = bn(_conv3x3_ref(x, params["conv1_w"], params["conv1_b"]), params["bn1"])
    reaction = h
    out = h
    for i, blk in enumerate(params["blocks"]):
        phi = jnp.tanh(params["c1"]) * (i + 1.0) ** (-jax.nn.sigmoid(params["alpha1"]))
        psi = jnp.tanh(params["cc1"]) * (i + 1.0) ** (-jax.nn.sigmoid(params["beta1"]))
        t = jax.nn.relu(_conv3x3_ref(out, blk["w1"], blk["b1"]))
        t2 = _conv3x3_ref(t, blk["w2"], blk["b2"])
        out = (blk["alpha"] * jnp.tanh(-phi) * t2
               + blk["beta"] * psi * jnp.tanh(psi) * (reaction - out) + out)
    out = bn(out, params["bn2"])
    y = _conv3x3_ref(out, params["conv2_w"], params["conv2_b"])
    return jnp.transpose(y, (0, 3, 1, 2))


# ---------------------------------------------------------------------------
# Deterministic parameter init (synthetic)
# ---------------------------------------------------------------------------
def init_params(key, in_ch, mid_ch, layers_num):
    keys = jax.random.split(key, 6 + 4 * layers_num)

    def conv_w(k, cin, cout):
        return 0.1 * jax.random.normal(k, (3, 3, cin, cout), jnp.float32)

    def bn_params(k, c):
        k1, k2, k3, k4 = jax.random.split(k, 4)
        gamma = 1.0 + 0.1 * jax.random.normal(k1, (c,), jnp.float32)
        beta = 0.1 * jax.random.normal(k2, (c,), jnp.float32)
        mean = 0.1 * jax.random.normal(k3, (c,), jnp.float32)
        var = 1.0 + 0.1 * jnp.abs(jax.random.normal(k4, (c,), jnp.float32))
        return (gamma, beta, mean, var)

    p = {
        "conv1_w": conv_w(keys[0], in_ch, mid_ch),
        "conv1_b": 0.05 * jax.random.normal(keys[1], (mid_ch,), jnp.float32),
        "conv2_w": conv_w(keys[2], mid_ch, in_ch),
        "conv2_b": 0.05 * jax.random.normal(keys[3], (in_ch,), jnp.float32),
        "bn1": bn_params(keys[4], mid_ch),
        "bn2": bn_params(keys[5], mid_ch),
        "alpha1": jnp.array([0.5], jnp.float32),
        "beta1": jnp.array([0.5], jnp.float32),
        "c1": jnp.array([1.0], jnp.float32),
        "cc1": jnp.array([1.0], jnp.float32),
        "blocks": [],
    }
    for i in range(layers_num):
        kw1, kb1, kw2, kb2 = keys[6 + 4 * i: 10 + 4 * i]
        p["blocks"].append({
            "w1": conv_w(kw1, mid_ch, mid_ch),
            "b1": 0.05 * jax.random.normal(kb1, (mid_ch,), jnp.float32),
            "w2": conv_w(kw2, mid_ch, mid_ch),
            "b2": 0.05 * jax.random.normal(kb2, (mid_ch,), jnp.float32),
            "alpha": jnp.array([1.0], jnp.float32),   # Block.alpha init = 1
            "beta": jnp.array([1.0], jnp.float32),    # Block.beta  init = 1
        })
    return p


if __name__ == "__main__":
    key = jax.random.PRNGKey(0)
    kx, kp = jax.random.split(key)

    N, Cin, H, W = 2, 4, 16, 16           # in_channels == 4 -> out_channels == 4
    mid_ch, layers_num = 8, 2

    x = jax.random.normal(kx, (N, Cin, H, W), jnp.float32)
    params = init_params(kp, Cin, mid_ch, layers_num)

    y = jax.block_until_ready(headtails_forward(x, params))
    y_ref = jax.block_until_ready(headtails_ref(x, params))

    assert y.shape == (N, Cin, H, W), y.shape
    # bf16 MXU operands (f32 accumulation) through 2+2L cascaded convs ->
    # looser tolerance than the pure-f32 variant.
    np.testing.assert_allclose(np.asarray(y), np.asarray(y_ref),
                               rtol=1e-1, atol=1e-1)
    print("KERNEL_OK")
</pallas_src>

<mosaic_0001>
module attributes {stable_mosaic.version = 11 : i64} {
  func.func @_headtails_kernel(%arg0: i32, %arg1: memref<4xf32, #tpu.memory_space<smem>>, %arg2: memref<8x512xf32, #tpu.memory_space<vmem>>, %arg3: memref<8x72xbf16, #tpu.memory_space<vmem>>, %arg4: memref<8x1xf32, #tpu.memory_space<vmem>>, %arg5: memref<2x8x72xbf16, #tpu.memory_space<vmem>>, %arg6: memref<2x8x1xf32, #tpu.memory_space<vmem>>, %arg7: memref<2x8x72xbf16, #tpu.memory_space<vmem>>, %arg8: memref<2x8x1xf32, #tpu.memory_space<vmem>>, %arg9: memref<8x1xf32, #tpu.memory_space<vmem>>, %arg10: memref<8x1xf32, #tpu.memory_space<vmem>>, %arg11: memref<8x72xbf16, #tpu.memory_space<vmem>>, %arg12: memref<8x1xf32, #tpu.memory_space<vmem>>, %arg13: memref<8x512xf32, #tpu.memory_space<vmem>>, %arg14: memref<72x512xf32, #tpu.memory_space<vmem>>) attributes {dimension_semantics = [#tpu.dimension_semantics<parallel>], iteration_bounds = array<i64: 1>, scalar_prefetch = 0 : i64, scratch_operands = 1 : i64, tpu.core_type = #tpu.core_type<tc>, window_params = [{transform_indices = @transform_0, window_bounds = array<i64: 4>}, {transform_indices = @transform_1, window_bounds = array<i64: 8, 512>}, {pipeline_mode = #tpu.pipeline_mode<synchronous>, transform_indices = @transform_2, window_bounds = array<i64: 8, 72>}, {pipeline_mode = #tpu.pipeline_mode<synchronous>, transform_indices = @transform_3, window_bounds = array<i64: 8, 1>}, {pipeline_mode = #tpu.pipeline_mode<synchronous>, transform_indices = @transform_4, window_bounds = array<i64: 2, 8, 72>}, {pipeline_mode = #tpu.pipeline_mode<synchronous>, transform_indices = @transform_5, window_bounds = array<i64: 2, 8, 1>}, {pipeline_mode = #tpu.pipeline_mode<synchronous>, transform_indices = @transform_6, window_bounds = array<i64: 2, 8, 72>}, {pipeline_mode = #tpu.pipeline_mode<synchronous>, transform_indices = @transform_7, window_bounds = array<i64: 2, 8, 1>}, {pipeline_mode = #tpu.pipeline_mode<synchronous>, transform_indices = @transform_8, window_bounds = array<i64: 8, 1>}, {pipeline_mode = #tpu.pipeline_mode<synchronous>, transform_indices = @transform_9, window_bounds = array<i64: 8, 1>}, {pipeline_mode = #tpu.pipeline_mode<synchronous>, transform_indices = @transform_10, window_bounds = array<i64: 8, 72>}, {pipeline_mode = #tpu.pipeline_mode<synchronous>, transform_indices = @transform_11, window_bounds = array<i64: 8, 1>}, {transform_indices = @transform_12, window_bounds = array<i64: 8, 512>}]} {
    %0 = tpu.iota {dimensions = array<i32: 1>} : vector<1x512xi32>
    %c256_i32 = arith.constant 256 : i32
    %c0_i32 = arith.constant 0 : i32
    %1 = arith.cmpi eq, %c256_i32, %c0_i32 : i32
    %c1_i32 = arith.constant 1 : i32
    %2 = arith.select %1, %c1_i32, %c256_i32 : i32
    %3 = vector.broadcast %2 : i32 to vector<1x512xi32>
    %4 = arith.remsi %0, %3 : vector<1x512xi32>
    %c0_i32_0 = arith.constant 0 : i32
    %5 = vector.broadcast %c0_i32_0 : i32 to vector<1x512xi32>
    %6 = arith.cmpi ne, %4, %5 : vector<1x512xi32>
    %c0_i32_1 = arith.constant 0 : i32
    %7 = vector.broadcast %c0_i32_1 : i32 to vector<1x512xi32>
    %8 = arith.cmpi slt, %4, %7 : vector<1x512xi32>
    %c0_i32_2 = arith.constant 0 : i32
    %9 = arith.cmpi slt, %2, %c0_i32_2 : i32
    %10 = vector.broadcast %9 : i1 to vector<1x512xi1>
    %11 = vector.broadcast %10 : vector<1x512xi1> to vector<1x512xi1>
    %12 = arith.xori %8, %11 : vector<1x512xi1>
    %13 = arith.andi %12, %6 : vector<1x512xi1>
    %14 = vector.broadcast %2 : i32 to vector<1x512xi32>
    %15 = arith.addi %4, %14 : vector<1x512xi32>
    %16 = arith.select %13, %15, %4 : vector<1x512xi1>, vector<1x512xi32>
    %c16_i32 = arith.constant 16 : i32
    %c0_i32_3 = arith.constant 0 : i32
    %17 = arith.cmpi eq, %c16_i32, %c0_i32_3 : i32
    %c1_i32_4 = arith.constant 1 : i32
    %18 = arith.select %17, %c1_i32_4, %c16_i32 : i32
    %19 = vector.broadcast %18 : i32 to vector<1x512xi32>
    %20 = arith.remsi %16, %19 : vector<1x512xi32>
    %c0_i32_5 = arith.constant 0 : i32
    %21 = vector.broadcast %c0_i32_5 : i32 to vector<1x512xi32>
    %22 = arith.cmpi ne, %20, %21 : vector<1x512xi32>
    %c0_i32_6 = arith.constant 0 : i32
    %23 = vector.broadcast %c0_i32_6 : i32 to vector<1x512xi32>
    %24 = arith.cmpi slt, %20, %23 : vector<1x512xi32>
    %c0_i32_7 = arith.constant 0 : i32
    %25 = arith.cmpi slt, %18, %c0_i32_7 : i32
    %26 = vector.broadcast %25 : i1 to vector<1x512xi1>
    %27 = vector.broadcast %26 : vector<1x512xi1> to vector<1x512xi1>
    %28 = arith.xori %24, %27 : vector<1x512xi1>
    %29 = arith.andi %28, %22 : vector<1x512xi1>
    %30 = vector.broadcast %18 : i32 to vector<1x512xi32>
    %31 = arith.addi %20, %30 : vector<1x512xi32>
    %32 = arith.select %29, %31, %20 : vector<1x512xi1>, vector<1x512xi32>
    %c16_i32_8 = arith.constant 16 : i32
    %33 = vector.broadcast %c16_i32_8 : i32 to vector<1x512xi32>
    %34 = arith.cmpi sge, %16, %33 : vector<1x512xi32>
    %c1_i32_9 = arith.constant 1 : i32
    %35 = vector.broadcast %c1_i32_9 : i32 to vector<1x512xi32>
    %36 = arith.cmpi sge, %32, %35 : vector<1x512xi32>
    %37 = arith.andi %34, %36 : vector<1x512xi1>
    %38 = arith.extui %37 : vector<1x512xi1> to vector<1x512xi32>
    %39 = arith.sitofp %38 : vector<1x512xi32> to vector<1x512xf32>
    %40 = vector.shape_cast %39 : vector<1x512xf32> to vector<1x512xf32>
    %41 = vector.broadcast %40 : vector<1x512xf32> to vector<8x512xf32>
    %c16_i32_10 = arith.constant 16 : i32
    %42 = vector.broadcast %c16_i32_10 : i32 to vector<1x512xi32>
    %43 = arith.cmpi sge, %16, %42 : vector<1x512xi32>
    %44 = arith.extui %43 : vector<1x512xi1> to vector<1x512xi32>
    %45 = arith.sitofp %44 : vector<1x512xi32> to vector<1x512xf32>
    %46 = vector.shape_cast %45 : vector<1x512xf32> to vector<1x512xf32>
    %47 = vector.broadcast %46 : vector<1x512xf32> to vector<8x512xf32>
    %c16_i32_11 = arith.constant 16 : i32
    %48 = vector.broadcast %c16_i32_11 : i32 to vector<1x512xi32>
    %49 = arith.cmpi sge, %16, %48 : vector<1x512xi32>
    %c14_i32 = arith.constant 14 : i32
    %50 = vector.broadcast %c14_i32 : i32 to vector<1x512xi32>
    %51 = arith.cmpi sle, %32, %50 : vector<1x512xi32>
    %52 = arith.andi %49, %51 : vector<1x512xi1>
    %53 = arith.extui %52 : vector<1x512xi1> to vector<1x512xi32>
    %54 = arith.sitofp %53 : vector<1x512xi32> to vector<1x512xf32>
    %55 = vector.shape_cast %54 : vector<1x512xf32> to vector<1x512xf32>
    %56 = vector.broadcast %55 : vector<1x512xf32> to vector<8x512xf32>
    %c1_i32_12 = arith.constant 1 : i32
    %57 = vector.broadcast %c1_i32_12 : i32 to vector<1x512xi32>
    %58 = arith.cmpi sge, %32, %57 : vector<1x512xi32>
    %59 = arith.extui %58 : vector<1x512xi1> to vector<1x512xi32>
    %60 = arith.sitofp %59 : vector<1x512xi32> to vector<1x512xf32>
    %61 = vector.shape_cast %60 : vector<1x512xf32> to vector<1x512xf32>
    %62 = vector.broadcast %61 : vector<1x512xf32> to vector<8x512xf32>
    %c14_i32_13 = arith.constant 14 : i32
    %63 = vector.broadcast %c14_i32_13 : i32 to vector<1x512xi32>
    %64 = arith.cmpi sle, %32, %63 : vector<1x512xi32>
    %65 = arith.extui %64 : vector<1x512xi1> to vector<1x512xi32>
    %66 = arith.sitofp %65 : vector<1x512xi32> to vector<1x512xf32>
    %67 = vector.shape_cast %66 : vector<1x512xf32> to vector<1x512xf32>
    %68 = vector.broadcast %67 : vector<1x512xf32> to vector<8x512xf32>
    %c240_i32 = arith.constant 240 : i32
    %69 = vector.broadcast %c240_i32 : i32 to vector<1x512xi32>
    %70 = arith.cmpi slt, %16, %69 : vector<1x512xi32>
    %c1_i32_14 = arith.constant 1 : i32
    %71 = vector.broadcast %c1_i32_14 : i32 to vector<1x512xi32>
    %72 = arith.cmpi sge, %32, %71 : vector<1x512xi32>
    %73 = arith.andi %70, %72 : vector<1x512xi1>
    %74 = arith.extui %73 : vector<1x512xi1> to vector<1x512xi32>
    %75 = arith.sitofp %74 : vector<1x512xi32> to vector<1x512xf32>
    %76 = vector.shape_cast %75 : vector<1x512xf32> to vector<1x512xf32>
    %77 = vector.broadcast %76 : vector<1x512xf32> to vector<8x512xf32>
    %c240_i32_15 = arith.constant 240 : i32
    %78 = vector.broadcast %c240_i32_15 : i32 to vector<1x512xi32>
    %79 = arith.cmpi slt, %16, %78 : vector<1x512xi32>
    %80 = arith.extui %79 : vector<1x512xi1> to vector<1x512xi32>
    %81 = arith.sitofp %80 : vector<1x512xi32> to vector<1x512xf32>
    %82 = vector.shape_cast %81 : vector<1x512xf32> to vector<1x512xf32>
    %83 = vector.broadcast %82 : vector<1x512xf32> to vector<8x512xf32>
    %c240_i32_16 = arith.constant 240 : i32
    %84 = vector.broadcast %c240_i32_16 : i32 to vector<1x512xi32>
    %85 = arith.cmpi slt, %16, %84 : vector<1x512xi32>
    %c14_i32_17 = arith.constant 14 : i32
    %86 = vector.broadcast %c14_i32_17 : i32 to vector<1x512xi32>
    %87 = arith.cmpi sle, %32, %86 : vector<1x512xi32>
    %88 = arith.andi %85, %87 : vector<1x512xi1>
    %89 = arith.extui %88 : vector<1x512xi1> to vector<1x512xi32>
    %90 = arith.sitofp %89 : vector<1x512xi32> to vector<1x512xf32>
    %91 = vector.shape_cast %90 : vector<1x512xf32> to vector<1x512xf32>
    %92 = vector.broadcast %91 : vector<1x512xf32> to vector<8x512xf32>
    %c0 = arith.constant 0 : index
    %c0_18 = arith.constant 0 : index
    %93 = vector.load %arg2[%c0, %c0_18] : memref<8x512xf32, #tpu.memory_space<vmem>>, vector<8x512xf32>
    %c0_19 = arith.constant 0 : index
    %c0_20 = arith.constant 0 : index
    %94 = vector.load %arg3[%c0_19, %c0_20] : memref<8x72xbf16, #tpu.memory_space<vmem>>, vector<8x72xbf16>
    %c0_21 = arith.constant 0 : index
    %c0_22 = arith.constant 0 : index
    %95 = vector.load %arg4[%c0_21, %c0_22] : memref<8x1xf32, #tpu.memory_space<vmem>>, vector<8x1xf32>
    %c17_i32 = arith.constant 17 : i32
    %96 = tpu.dynamic_rotate %93 by %c17_i32 dim 1 : vector<8x512xf32>, i32 -> vector<8x512xf32>
    %97 = arith.mulf %96, %41 : vector<8x512xf32>
    %c0_23 = arith.constant 0 : index
    %c0_24 = arith.constant 0 : index
    %98 = vector.load %arg14[%c0_23, %c0_24] : memref<72x512xf32, #tpu.memory_space<vmem>>, vector<8x512xf32>
    tpu.vector_store %arg14[%c0_23, %c0_24], %97 {strides = array<i32>} : memref<72x512xf32, #tpu.memory_space<vmem>>, vector<8x512xf32>,
    %c16_i32_25 = arith.constant 16 : i32
    %99 = tpu.dynamic_rotate %93 by %c16_i32_25 dim 1 : vector<8x512xf32>, i32 -> vector<8x512xf32>
    %100 = arith.mulf %99, %47 : vector<8x512xf32>
    %c8 = arith.constant 8 : index
    %c0_26 = arith.constant 0 : index
    %101 = vector.load %arg14[%c8, %c0_26] : memref<72x512xf32, #tpu.memory_space<vmem>>, vector<8x512xf32>
    tpu.vector_store %arg14[%c8, %c0_26], %100 {strides = array<i32>} : memref<72x512xf32, #tpu.memory_space<vmem>>, vector<8x512xf32>,
    %c15_i32 = arith.constant 15 : i32
    %102 = tpu.dynamic_rotate %93 by %c15_i32 dim 1 : vector<8x512xf32>, i32 -> vector<8x512xf32>
    %103 = arith.mulf %102, %56 : vector<8x512xf32>
    %c16 = arith.constant 16 : index
    %c0_27 = arith.constant 0 : index
    %104 = vector.load %arg14[%c16, %c0_27] : memref<72x512xf32, #tpu.memory_space<vmem>>, vector<8x512xf32>
    tpu.vector_store %arg14[%c16, %c0_27], %103 {strides = array<i32>} : memref<72x512xf32, #tpu.memory_space<vmem>>, vector<8x512xf32>,
    %c1_i32_28 = arith.constant 1 : i32
    %105 = tpu.dynamic_rotate %93 by %c1_i32_28 dim 1 : vector<8x512xf32>, i32 -> vector<8x512xf32>
    %106 = arith.mulf %105, %62 : vector<8x512xf32>
    %c24 = arith.constant 24 : index
    %c0_29 = arith.constant 0 : index
    %107 = vector.load %arg14[%c24, %c0_29] : memref<72x512xf32, #tpu.memory_space<vmem>>, vector<8x512xf32>
    tpu.vector_store %arg14[%c24, %c0_29], %106 {strides = array<i32>} : memref<72x512xf32, #tpu.memory_space<vmem>>, vector<8x512xf32>,
    %c32 = arith.constant 32 : index
    %c0_30 = arith.constant 0 : index
    %108 = vector.load %arg14[%c32, %c0_30] : memref<72x512xf32, #tpu.memory_space<vmem>>, vector<8x512xf32>
    tpu.vector_store %arg14[%c32, %c0_30], %93 {strides = array<i32>} : memref<72x512xf32, #tpu.memory_space<vmem>>, vector<8x512xf32>,
    %c511_i32 = arith.constant 511 : i32
    %109 = tpu.dynamic_rotate %93 by %c511_i32 dim 1 : vector<8x512xf32>, i32 -> vector<8x512xf32>
    %110 = arith.mulf %109, %68 : vector<8x512xf32>
    %c40 = arith.constant 40 : index
    %c0_31 = arith.constant 0 : index
    %111 = vector.load %arg14[%c40, %c0_31] : memref<72x512xf32, #tpu.memory_space<vmem>>, vector<8x512xf32>
    tpu.vector_store %arg14[%c40, %c0_31], %110 {strides = array<i32>} : memref<72x512xf32, #tpu.memory_space<vmem>>, vector<8x512xf32>,
    %c497_i32 = arith.constant 497 : i32
    %112 = tpu.dynamic_rotate %93 by %c497_i32 dim 1 : vector<8x512xf32>, i32 -> vector<8x512xf32>
    %113 = arith.mulf %112, %77 : vector<8x512xf32>
    %c48 = arith.constant 48 : index
    %c0_32 = arith.constant 0 : index
    %114 = vector.load %arg14[%c48, %c0_32] : memref<72x512xf32, #tpu.memory_space<vmem>>, vector<8x512xf32>
    tpu.vector_store %arg14[%c48, %c0_32], %113 {strides = array<i32>} : memref<72x512xf32, #tpu.memory_space<vmem>>, vector<8x512xf32>,
    %c496_i32 = arith.constant 496 : i32
    %115 = tpu.dynamic_rotate %93 by %c496_i32 dim 1 : vector<8x512xf32>, i32 -> vector<8x512xf32>
    %116 = arith.mulf %115, %83 : vector<8x512xf32>
    %c56 = arith.constant 56 : index
    %c0_33 = arith.constant 0 : index
    %117 = vector.load %arg14[%c56, %c0_33] : memref<72x512xf32, #tpu.memory_space<vmem>>, vector<8x512xf32>
    tpu.vector_store %arg14[%c56, %c0_33], %116 {strides = array<i32>} : memref<72x512xf32, #tpu.memory_space<vmem>>, vector<8x512xf32>,
    %c495_i32 = arith.constant 495 : i32
    %118 = tpu.dynamic_rotate %93 by %c495_i32 dim 1 : vector<8x512xf32>, i32 -> vector<8x512xf32>
    %119 = arith.mulf %118, %92 : vector<8x512xf32>
    %c64 = arith.constant 64 : index
    %c0_34 = arith.constant 0 : index
    %120 = vector.load %arg14[%c64, %c0_34] : memref<72x512xf32, #tpu.memory_space<vmem>>, vector<8x512xf32>
    tpu.vector_store %arg14[%c64, %c0_34], %119 {strides = array<i32>} : memref<72x512xf32, #tpu.memory_space<vmem>>, vector<8x512xf32>,
    %c0_35 = arith.constant 0 : index
    %c0_36 = arith.constant 0 : index
    %121 = vector.load %arg14[%c0_35, %c0_36] : memref<72x512xf32, #tpu.memory_space<vmem>>, vector<72x512xf32>
    %122 = arith.truncf %121 : vector<72x512xf32> to vector<72x512xbf16>
    %cst = arith.constant dense<0.000000e+00> : vector<8x512xf32>
    %123 = tpu.matmul %94, %122, %cst {dimension_numbers = #tpu.dot_dimension_numbers<[1], [0], [0], [1], [0, 0, 1, 1], [], []>} : vector<8x72xbf16>, vector<72x512xbf16>, vector<8x512xf32> -> vector<8x512xf32>
    %124 = vector.broadcast %95 : vector<8x1xf32> to vector<8x512xf32>
    %125 = arith.addf %123, %124 : vector<8x512xf32>
    %c0_37 = arith.constant 0 : index
    %126 = memref.load %arg1[%c0_37] : memref<4xf32, #tpu.memory_space<smem>>
    %c1 = arith.constant 1 : index
    %127 = memref.load %arg1[%c1] : memref<4xf32, #tpu.memory_space<smem>>
    %c0_38 = arith.constant 0 : index
    %c0_39 = arith.constant 0 : index
    %c0_40 = arith.constant 0 : index
    %128 = vector.load %arg5[%c0_38, %c0_39, %c0_40] : memref<2x8x72xbf16, #tpu.memory_space<vmem>>, vector<1x8x72xbf16>
    %129 = vector.shape_cast %128 : vector<1x8x72xbf16> to vector<8x72xbf16>
    %c0_41 = arith.constant 0 : index
    %c0_42 = arith.constant 0 : index
    %c0_43 = arith.constant 0 : index
    %130 = vector.load %arg6[%c0_41, %c0_42, %c0_43] : memref<2x8x1xf32, #tpu.memory_space<vmem>>, vector<1x8x1xf32>
    %131 = vector.shape_cast %130 : vector<1x8x1xf32> to vector<8x1xf32>
    %c17_i32_44 = arith.constant 17 : i32
    %132 = tpu.dynamic_rotate %125 by %c17_i32_44 dim 1 : vector<8x512xf32>, i32 -> vector<8x512xf32>
    %133 = arith.mulf %132, %41 : vector<8x512xf32>
    %c0_45 = arith.constant 0 : index
    %c0_46 = arith.constant 0 : index
    %134 = vector.load %arg14[%c0_45, %c0_46] : memref<72x512xf32, #tpu.memory_space<vmem>>, vector<8x512xf32>
    tpu.vector_store %arg14[%c0_45, %c0_46], %133 {strides = array<i32>} : memref<72x512xf32, #tpu.memory_space<vmem>>, vector<8x512xf32>,
    %c16_i32_47 = arith.constant 16 : i32
    %135 = tpu.dynamic_rotate %125 by %c16_i32_47 dim 1 : vector<8x512xf32>, i32 -> vector<8x512xf32>
    %136 = arith.mulf %135, %47 : vector<8x512xf32>
    %c8_48 = arith.constant 8 : index
    %c0_49 = arith.constant 0 : index
    %137 = vector.load %arg14[%c8_48, %c0_49] : memref<72x512xf32, #tpu.memory_space<vmem>>, vector<8x512xf32>
    tpu.vector_store %arg14[%c8_48, %c0_49], %136 {strides = array<i32>} : memref<72x512xf32, #tpu.memory_space<vmem>>, vector<8x512xf32>,
    %c15_i32_50 = arith.constant 15 : i32
    %138 = tpu.dynamic_rotate %125 by %c15_i32_50 dim 1 : vector<8x512xf32>, i32 -> vector<8x512xf32>
    %139 = arith.mulf %138, %56 : vector<8x512xf32>
    %c16_51 = arith.constant 16 : index
    %c0_52 = arith.constant 0 : index
    %140 = vector.load %arg14[%c16_51, %c0_52] : memref<72x512xf32, #tpu.memory_space<vmem>>, vector<8x512xf32>
    tpu.vector_store %arg14[%c16_51, %c0_52], %139 {strides = array<i32>} : memref<72x512xf32, #tpu.memory_space<vmem>>, vector<8x512xf32>,
    %c1_i32_53 = arith.constant 1 : i32
    %141 = tpu.dynamic_rotate %125 by %c1_i32_53 dim 1 : vector<8x512xf32>, i32 -> vector<8x512xf32>
    %142 = arith.mulf %141, %62 : vector<8x512xf32>
    %c24_54 = arith.constant 24 : index
    %c0_55 = arith.constant 0 : index
    %143 = vector.load %arg14[%c24_54, %c0_55] : memref<72x512xf32, #tpu.memory_space<vmem>>, vector<8x512xf32>
    tpu.vector_store %arg14[%c24_54, %c0_55], %142 {strides = array<i32>} : memref<72x512xf32, #tpu.memory_space<vmem>>, vector<8x512xf32>,
    %c32_56 = arith.constant 32 : index
    %c0_57 = arith.constant 0 : index
    %144 = vector.load %arg14[%c32_56, %c0_57] : memref<72x512xf32, #tpu.memory_space<vmem>>, vector<8x512xf32>
    tpu.vector_store %arg14[%c32_56, %c0_57], %125 {strides = array<i32>} : memref<72x512xf32, #tpu.memory_space<vmem>>, vector<8x512xf32>,
    %c511_i32_58 = arith.constant 511 : i32
    %145 = tpu.dynamic_rotate %125 by %c511_i32_58 dim 1 : vector<8x512xf32>, i32 -> vector<8x512xf32>
    %146 = arith.mulf %145, %68 : vector<8x512xf32>
    %c40_59 = arith.constant 40 : index
    %c0_60 = arith.constant 0 : index
    %147 = vector.load %arg14[%c40_59, %c0_60] : memref<72x512xf32, #tpu.memory_space<vmem>>, vector<8x512xf32>
    tpu.vector_store %arg14[%c40_59, %c0_60], %146 {strides = array<i32>} : memref<72x512xf32, #tpu.memory_space<vmem>>, vector<8x512xf32>,
    %c497_i32_61 = arith.constant 497 : i32
    %148 = tpu.dynamic_rotate %125 by %c497_i32_61 dim 1 : vector<8x512xf32>, i32 -> vector<8x512xf32>
    %149 = arith.mulf %148, %77 : vector<8x512xf32>
    %c48_62 = arith.constant 48 : index
    %c0_63 = arith.constant 0 : index
    %150 = vector.load %arg14[%c48_62, %c0_63] : memref<72x512xf32, #tpu.memory_space<vmem>>, vector<8x512xf32>
    tpu.vector_store %arg14[%c48_62, %c0_63], %149 {strides = array<i32>} : memref<72x512xf32, #tpu.memory_space<vmem>>, vector<8x512xf32>,
    %c496_i32_64 = arith.constant 496 : i32
    %151 = tpu.dynamic_rotate %125 by %c496_i32_64 dim 1 : vector<8x512xf32>, i32 -> vector<8x512xf32>
    %152 = arith.mulf %151, %83 : vector<8x512xf32>
    %c56_65 = arith.constant 56 : index
    %c0_66 = arith.constant 0 : index
    %153 = vector.load %arg14[%c56_65, %c0_66] : memref<72x512xf32, #tpu.memory_space<vmem>>, vector<8x512xf32>
    tpu.vector_store %arg14[%c56_65, %c0_66], %152 {strides = array<i32>} : memref<72x512xf32, #tpu.memory_space<vmem>>, vector<8x512xf32>,
    %c495_i32_67 = arith.constant 495 : i32
    %154 = tpu.dynamic_rotate %125 by %c495_i32_67 dim 1 : vector<8x512xf32>, i32 -> vector<8x512xf32>
    %155 = arith.mulf %154, %92 : vector<8x512xf32>
    %c64_68 = arith.constant 64 : index
    %c0_69 = arith.constant 0 : index
    %156 = vector.load %arg14[%c64_68, %c0_69] : memref<72x512xf32, #tpu.memory_space<vmem>>, vector<8x512xf32>
    tpu.vector_store %arg14[%c64_68, %c0_69], %155 {strides = array<i32>} : memref<72x512xf32, #tpu.memory_space<vmem>>, vector<8x512xf32>,
    %c0_70 = arith.constant 0 : index
    %c0_71 = arith.constant 0 : index
    %157 = vector.load %arg14[%c0_70, %c0_71] : memref<72x512xf32, #tpu.memory_space<vmem>>, vector<72x512xf32>
    %158 = arith.truncf %157 : vector<72x512xf32> to vector<72x512xbf16>
    %cst_72 = arith.constant dense<0.000000e+00> : vector<8x512xf32>
    %159 = tpu.matmul %129, %158, %cst_72 {dimension_numbers = #tpu.dot_dimension_numbers<[1], [0], [0], [1], [0, 0, 1, 1], [], []>} : vector<8x72xbf16>, vector<72x512xbf16>, vector<8x512xf32> -> vector<8x512xf32>
    %160 = vector.broadcast %131 : vector<8x1xf32> to vector<8x512xf32>
    %161 = arith.addf %159, %160 : vector<8x512xf32>
    %cst_73 = arith.constant 0.000000e+00 : f32
    %162 = vector.broadcast %cst_73 : f32 to vector<8x512xf32>
    %163 = arith.maximumf %161, %162 : vector<8x512xf32>
    %c0_74 = arith.constant 0 : index
    %c0_75 = arith.constant 0 : index
    %c0_76 = arith.constant 0 : index
    %164 = vector.load %arg7[%c0_74, %c0_75, %c0_76] : memref<2x8x72xbf16, #tpu.memory_space<vmem>>, vector<1x8x72xbf16>
    %165 = vector.shape_cast %164 : vector<1x8x72xbf16> to vector<8x72xbf16>
    %c0_77 = arith.constant 0 : index
    %c0_78 = arith.constant 0 : index
    %c0_79 = arith.constant 0 : index
    %166 = vector.load %arg8[%c0_77, %c0_78, %c0_79] : memref<2x8x1xf32, #tpu.memory_space<vmem>>, vector<1x8x1xf32>
    %167 = vector.shape_cast %166 : vector<1x8x1xf32> to vector<8x1xf32>
    %c17_i32_80 = arith.constant 17 : i32
    %168 = tpu.dynamic_rotate %163 by %c17_i32_80 dim 1 : vector<8x512xf32>, i32 -> vector<8x512xf32>
    %169 = arith.mulf %168, %41 : vector<8x512xf32>
    %c0_81 = arith.constant 0 : index
    %c0_82 = arith.constant 0 : index
    %170 = vector.load %arg14[%c0_81, %c0_82] : memref<72x512xf32, #tpu.memory_space<vmem>>, vector<8x512xf32>
    tpu.vector_store %arg14[%c0_81, %c0_82], %169 {strides = array<i32>} : memref<72x512xf32, #tpu.memory_space<vmem>>, vector<8x512xf32>,
    %c16_i32_83 = arith.constant 16 : i32
    %171 = tpu.dynamic_rotate %163 by %c16_i32_83 dim 1 : vector<8x512xf32>, i32 -> vector<8x512xf32>
    %172 = arith.mulf %171, %47 : vector<8x512xf32>
    %c8_84 = arith.constant 8 : index
    %c0_85 = arith.constant 0 : index
    %173 = vector.load %arg14[%c8_84, %c0_85] : memref<72x512xf32, #tpu.memory_space<vmem>>, vector<8x512xf32>
    tpu.vector_store %arg14[%c8_84, %c0_85], %172 {strides = array<i32>} : memref<72x512xf32, #tpu.memory_space<vmem>>, vector<8x512xf32>,
    %c15_i32_86 = arith.constant 15 : i32
    %174 = tpu.dynamic_rotate %163 by %c15_i32_86 dim 1 : vector<8x512xf32>, i32 -> vector<8x512xf32>
    %175 = arith.mulf %174, %56 : vector<8x512xf32>
    %c16_87 = arith.constant 16 : index
    %c0_88 = arith.constant 0 : index
    %176 = vector.load %arg14[%c16_87, %c0_88] : memref<72x512xf32, #tpu.memory_space<vmem>>, vector<8x512xf32>
    tpu.vector_store %arg14[%c16_87, %c0_88], %175 {strides = array<i32>} : memref<72x512xf32, #tpu.memory_space<vmem>>, vector<8x512xf32>,
    %c1_i32_89 = arith.constant 1 : i32
    %177 = tpu.dynamic_rotate %163 by %c1_i32_89 dim 1 : vector<8x512xf32>, i32 -> vector<8x512xf32>
    %178 = arith.mulf %177, %62 : vector<8x512xf32>
    %c24_90 = arith.constant 24 : index
    %c0_91 = arith.constant 0 : index
    %179 = vector.load %arg14[%c24_90, %c0_91] : memref<72x512xf32, #tpu.memory_space<vmem>>, vector<8x512xf32>
    tpu.vector_store %arg14[%c24_90, %c0_91], %178 {strides = array<i32>} : memref<72x512xf32, #tpu.memory_space<vmem>>, vector<8x512xf32>,
    %c32_92 = arith.constant 32 : index
    %c0_93 = arith.constant 0 : index
    %180 = vector.load %arg14[%c32_92, %c0_93] : memref<72x512xf32, #tpu.memory_space<vmem>>, vector<8x512xf32>
    tpu.vector_store %arg14[%c32_92, %c0_93], %163 {strides = array<i32>} : memref<72x512xf32, #tpu.memory_space<vmem>>, vector<8x512xf32>,
    %c511_i32_94 = arith.constant 511 : i32
    %181 = tpu.dynamic_rotate %163 by %c511_i32_94 dim 1 : vector<8x512xf32>, i32 -> vector<8x512xf32>
    %182 = arith.mulf %181, %68 : vector<8x512xf32>
    %c40_95 = arith.constant 40 : index
    %c0_96 = arith.constant 0 : index
    %183 = vector.load %arg14[%c40_95, %c0_96] : memref<72x512xf32, #tpu.memory_space<vmem>>, vector<8x512xf32>
    tpu.vector_store %arg14[%c40_95, %c0_96], %182 {strides = array<i32>} : memref<72x512xf32, #tpu.memory_space<vmem>>, vector<8x512xf32>,
    %c497_i32_97 = arith.constant 497 : i32
    %184 = tpu.dynamic_rotate %163 by %c497_i32_97 dim 1 : vector<8x512xf32>, i32 -> vector<8x512xf32>
    %185 = arith.mulf %184, %77 : vector<8x512xf32>
    %c48_98 = arith.constant 48 : index
    %c0_99 = arith.constant 0 : index
    %186 = vector.load %arg14[%c48_98, %c0_99] : memref<72x512xf32, #tpu.memory_space<vmem>>, vector<8x512xf32>
    tpu.vector_store %arg14[%c48_98, %c0_99], %185 {strides = array<i32>} : memref<72x512xf32, #tpu.memory_space<vmem>>, vector<8x512xf32>,
    %c496_i32_100 = arith.constant 496 : i32
    %187 = tpu.dynamic_rotate %163 by %c496_i32_100 dim 1 : vector<8x512xf32>, i32 -> vector<8x512xf32>
    %188 = arith.mulf %187, %83 : vector<8x512xf32>
    %c56_101 = arith.constant 56 : index
    %c0_102 = arith.constant 0 : index
    %189 = vector.load %arg14[%c56_101, %c0_102] : memref<72x512xf32, #tpu.memory_space<vmem>>, vector<8x512xf32>
    tpu.vector_store %arg14[%c56_101, %c0_102], %188 {strides = array<i32>} : memref<72x512xf32, #tpu.memory_space<vmem>>, vector<8x512xf32>,
    %c495_i32_103 = arith.constant 495 : i32
    %190 = tpu.dynamic_rotate %163 by %c495_i32_103 dim 1 : vector<8x512xf32>, i32 -> vector<8x512xf32>
    %191 = arith.mulf %190, %92 : vector<8x512xf32>
    %c64_104 = arith.constant 64 : index
    %c0_105 = arith.constant 0 : index
    %192 = vector.load %arg14[%c64_104, %c0_105] : memref<72x512xf32, #tpu.memory_space<vmem>>, vector<8x512xf32>
    tpu.vector_store %arg14[%c64_104, %c0_105], %191 {strides = array<i32>} : memref<72x512xf32, #tpu.memory_space<vmem>>, vector<8x512xf32>,
    %c0_106 = arith.constant 0 : index
    %c0_107 = arith.constant 0 : index
    %193 = vector.load %arg14[%c0_106, %c0_107] : memref<72x512xf32, #tpu.memory_space<vmem>>, vector<72x512xf32>
    %194 = arith.truncf %193 : vector<72x512xf32> to vector<72x512xbf16>
    %cst_108 = arith.constant dense<0.000000e+00> : vector<8x512xf32>
    %195 = tpu.matmul %165, %194, %cst_108 {dimension_numbers = #tpu.dot_dimension_numbers<[1], [0], [0], [1], [0, 0, 1, 1], [], []>} : vector<8x72xbf16>, vector<72x512xbf16>, vector<8x512xf32> -> vector<8x512xf32>
    %196 = vector.broadcast %167 : vector<8x1xf32> to vector<8x512xf32>
    %197 = arith.addf %195, %196 : vector<8x512xf32>
    %198 = vector.broadcast %126 : f32 to vector<8x512xf32>
    %199 = arith.mulf %198, %197 : vector<8x512xf32>
    %200 = arith.subf %125, %125 : vector<8x512xf32>
    %201 = vector.broadcast %127 : f32 to vector<8x512xf32>
    %202 = arith.mulf %201, %200 : vector<8x512xf32>
    %203 = arith.addf %199, %202 : vector<8x512xf32>
    %204 = arith.addf %203, %125 : vector<8x512xf32>
    %c2 = arith.constant 2 : index
    %205 = memref.load %arg1[%c2] : memref<4xf32, #tpu.memory_space<smem>>
    %c3 = arith.constant 3 : index
    %206 = memref.load %arg1[%c3] : memref<4xf32, #tpu.memory_space<smem>>
    %c1_109 = arith.constant 1 : index
    %c0_110 = arith.constant 0 : index
    %c0_111 = arith.constant 0 : index
    %207 = vector.load %arg5[%c1_109, %c0_110, %c0_111] : memref<2x8x72xbf16, #tpu.memory_space<vmem>>, vector<1x8x72xbf16>
    %208 = vector.shape_cast %207 : vector<1x8x72xbf16> to vector<8x72xbf16>
    %c1_112 = arith.constant 1 : index
    %c0_113 = arith.constant 0 : index
    %c0_114 = arith.constant 0 : index
    %209 = vector.load %arg6[%c1_112, %c0_113, %c0_114] : memref<2x8x1xf32, #tpu.memory_space<vmem>>, vector<1x8x1xf32>
    %210 = vector.shape_cast %209 : vector<1x8x1xf32> to vector<8x1xf32>
    %c17_i32_115 = arith.constant 17 : i32
    %211 = tpu.dynamic_rotate %204 by %c17_i32_115 dim 1 : vector<8x512xf32>, i32 -> vector<8x512xf32>
    %212 = arith.mulf %211, %41 : vector<8x512xf32>
    %c0_116 = arith.constant 0 : index
    %c0_117 = arith.constant 0 : index
    %213 = vector.load %arg14[%c0_116, %c0_117] : memref<72x512xf32, #tpu.memory_space<vmem>>, vector<8x512xf32>
    tpu.vector_store %arg14[%c0_116, %c0_117], %212 {strides = array<i32>} : memref<72x512xf32, #tpu.memory_space<vmem>>, vector<8x512xf32>,
    %c16_i32_118 = arith.constant 16 : i32
    %214 = tpu.dynamic_rotate %204 by %c16_i32_118 dim 1 : vector<8x512xf32>, i32 -> vector<8x512xf32>
    %215 = arith.mulf %214, %47 : vector<8x512xf32>
    %c8_119 = arith.constant 8 : index
    %c0_120 = arith.constant 0 : index
    %216 = vector.load %arg14[%c8_119, %c0_120] : memref<72x512xf32, #tpu.memory_space<vmem>>, vector<8x512xf32>
    tpu.vector_store %arg14[%c8_119, %c0_120], %215 {strides = array<i32>} : memref<72x512xf32, #tpu.memory_space<vmem>>, vector<8x512xf32>,
    %c15_i32_121 = arith.constant 15 : i32
    %217 = tpu.dynamic_rotate %204 by %c15_i32_121 dim 1 : vector<8x512xf32>, i32 -> vector<8x512xf32>
    %218 = arith.mulf %217, %56 : vector<8x512xf32>
    %c16_122 = arith.constant 16 : index
    %c0_123 = arith.constant 0 : index
    %219 = vector.load %arg14[%c16_122, %c0_123] : memref<72x512xf32, #tpu.memory_space<vmem>>, vector<8x512xf32>
    tpu.vector_store %arg14[%c16_122, %c0_123], %218 {strides = array<i32>} : memref<72x512xf32, #tpu.memory_space<vmem>>, vector<8x512xf32>,
    %c1_i32_124 = arith.constant 1 : i32
    %220 = tpu.dynamic_rotate %204 by %c1_i32_124 dim 1 : vector<8x512xf32>, i32 -> vector<8x512xf32>
    %221 = arith.mulf %220, %62 : vector<8x512xf32>
    %c24_125 = arith.constant 24 : index
    %c0_126 = arith.constant 0 : index
    %222 = vector.load %arg14[%c24_125, %c0_126] : memref<72x512xf32, #tpu.memory_space<vmem>>, vector<8x512xf32>
    tpu.vector_store %arg14[%c24_125, %c0_126], %221 {strides = array<i32>} : memref<72x512xf32, #tpu.memory_space<vmem>>, vector<8x512xf32>,
    %c32_127 = arith.constant 32 : index
    %c0_128 = arith.constant 0 : index
    %223 = vector.load %arg14[%c32_127, %c0_128] : memref<72x512xf32, #tpu.memory_space<vmem>>, vector<8x512xf32>
    tpu.vector_store %arg14[%c32_127, %c0_128], %204 {strides = array<i32>} : memref<72x512xf32, #tpu.memory_space<vmem>>, vector<8x512xf32>,
    %c511_i32_129 = arith.constant 511 : i32
    %224 = tpu.dynamic_rotate %204 by %c511_i32_129 dim 1 : vector<8x512xf32>, i32 -> vector<8x512xf32>
    %225 = arith.mulf %224, %68 : vector<8x512xf32>
    %c40_130 = arith.constant 40 : index
    %c0_131 = arith.constant 0 : index
    %226 = vector.load %arg14[%c40_130, %c0_131] : memref<72x512xf32, #tpu.memory_space<vmem>>, vector<8x512xf32>
    tpu.vector_store %arg14[%c40_130, %c0_131], %225 {strides = array<i32>} : memref<72x512xf32, #tpu.memory_space<vmem>>, vector<8x512xf32>,
    %c497_i32_132 = arith.constant 497 : i32
    %227 = tpu.dynamic_rotate %204 by %c497_i32_132 dim 1 : vector<8x512xf32>, i32 -> vector<8x512xf32>
    %228 = arith.mulf %227, %77 : vector<8x512xf32>
    %c48_133 = arith.constant 48 : index
    %c0_134 = arith.constant 0 : index
    %229 = vector.load %arg14[%c48_133, %c0_134] : memref<72x512xf32, #tpu.memory_space<vmem>>, vector<8x512xf32>
    tpu.vector_store %arg14[%c48_133, %c0_134], %228 {strides = array<i32>} : memref<72x512xf32, #tpu.memory_space<vmem>>, vector<8x512xf32>,
    %c496_i32_135 = arith.constant 496 : i32
    %230 = tpu.dynamic_rotate %204 by %c496_i32_135 dim 1 : vector<8x512xf32>, i32 -> vector<8x512xf32>
    %231 = arith.mulf %230, %83 : vector<8x512xf32>
    %c56_136 = arith.constant 56 : index
    %c0_137 = arith.constant 0 : index
    %232 = vector.load %arg14[%c56_136, %c0_137] : memref<72x512xf32, #tpu.memory_space<vmem>>, vector<8x512xf32>
    tpu.vector_store %arg14[%c56_136, %c0_137], %231 {strides = array<i32>} : memref<72x512xf32, #tpu.memory_space<vmem>>, vector<8x512xf32>,
    %c495_i32_138 = arith.constant 495 : i32
    %233 = tpu.dynamic_rotate %204 by %c495_i32_138 dim 1 : vector<8x512xf32>, i32 -> vector<8x512xf32>
    %234 = arith.mulf %233, %92 : vector<8x512xf32>
    %c64_139 = arith.constant 64 : index
    %c0_140 = arith.constant 0 : index
    %235 = vector.load %arg14[%c64_139, %c0_140] : memref<72x512xf32, #tpu.memory_space<vmem>>, vector<8x512xf32>
    tpu.vector_store %arg14[%c64_139, %c0_140], %234 {strides = array<i32>} : memref<72x512xf32, #tpu.memory_space<vmem>>, vector<8x512xf32>,
    %c0_141 = arith.constant 0 : index
    %c0_142 = arith.constant 0 : index
    %236 = vector.load %arg14[%c0_141, %c0_142] : memref<72x512xf32, #tpu.memory_space<vmem>>, vector<72x512xf32>
    %237 = arith.truncf %236 : vector<72x512xf32> to vector<72x512xbf16>
    %cst_143 = arith.constant dense<0.000000e+00> : vector<8x512xf32>
    %238 = tpu.matmul %208, %237, %cst_143 {dimension_numbers = #tpu.dot_dimension_numbers<[1], [0], [0], [1], [0, 0, 1, 1], [], []>} : vector<8x72xbf16>, vector<72x512xbf16>, vector<8x512xf32> -> vector<8x512xf32>
    %239 = vector.broadcast %210 : vector<8x1xf32> to vector<8x512xf32>
    %240 = arith.addf %238, %239 : vector<8x512xf32>
    %cst_144 = arith.constant 0.000000e+00 : f32
    %241 = vector.broadcast %cst_144 : f32 to vector<8x512xf32>
    %242 = arith.maximumf %240, %241 : vector<8x512xf32>
    %c1_145 = arith.constant 1 : index
    %c0_146 = arith.constant 0 : index
    %c0_147 = arith.constant 0 : index
    %243 = vector.load %arg7[%c1_145, %c0_146, %c0_147] : memref<2x8x72xbf16, #tpu.memory_space<vmem>>, vector<1x8x72xbf16>
    %244 = vector.shape_cast %243 : vector<1x8x72xbf16> to vector<8x72xbf16>
    %c1_148 = arith.constant 1 : index
    %c0_149 = arith.constant 0 : index
    %c0_150 = arith.constant 0 : index
    %245 = vector.load %arg8[%c1_148, %c0_149, %c0_150] : memref<2x8x1xf32, #tpu.memory_space<vmem>>, vector<1x8x1xf32>
    %246 = vector.shape_cast %245 : vector<1x8x1xf32> to vector<8x1xf32>
    %c17_i32_151 = arith.constant 17 : i32
    %247 = tpu.dynamic_rotate %242 by %c17_i32_151 dim 1 : vector<8x512xf32>, i32 -> vector<8x512xf32>
    %248 = arith.mulf %247, %41 : vector<8x512xf32>
    %c0_152 = arith.constant 0 : index
    %c0_153 = arith.constant 0 : index
    %249 = vector.load %arg14[%c0_152, %c0_153] : memref<72x512xf32, #tpu.memory_space<vmem>>, vector<8x512xf32>
    tpu.vector_store %arg14[%c0_152, %c0_153], %248 {strides = array<i32>} : memref<72x512xf32, #tpu.memory_space<vmem>>, vector<8x512xf32>,
    %c16_i32_154 = arith.constant 16 : i32
    %250 = tpu.dynamic_rotate %242 by %c16_i32_154 dim 1 : vector<8x512xf32>, i32 -> vector<8x512xf32>
    %251 = arith.mulf %250, %47 : vector<8x512xf32>
    %c8_155 = arith.constant 8 : index
    %c0_156 = arith.constant 0 : index
    %252 = vector.load %arg14[%c8_155, %c0_156] : memref<72x512xf32, #tpu.memory_space<vmem>>, vector<8x512xf32>
    tpu.vector_store %arg14[%c8_155, %c0_156], %251 {strides = array<i32>} : memref<72x512xf32, #tpu.memory_space<vmem>>, vector<8x512xf32>,
    %c15_i32_157 = arith.constant 15 : i32
    %253 = tpu.dynamic_rotate %242 by %c15_i32_157 dim 1 : vector<8x512xf32>, i32 -> vector<8x512xf32>
    %254 = arith.mulf %253, %56 : vector<8x512xf32>
    %c16_158 = arith.constant 16 : index
    %c0_159 = arith.constant 0 : index
    %255 = vector.load %arg14[%c16_158, %c0_159] : memref<72x512xf32, #tpu.memory_space<vmem>>, vector<8x512xf32>
    tpu.vector_store %arg14[%c16_158, %c0_159], %254 {strides = array<i32>} : memref<72x512xf32, #tpu.memory_space<vmem>>, vector<8x512xf32>,
    %c1_i32_160 = arith.constant 1 : i32
    %256 = tpu.dynamic_rotate %242 by %c1_i32_160 dim 1 : vector<8x512xf32>, i32 -> vector<8x512xf32>
    %257 = arith.mulf %256, %62 : vector<8x512xf32>
    %c24_161 = arith.constant 24 : index
    %c0_162 = arith.constant 0 : index
    %258 = vector.load %arg14[%c24_161, %c0_162] : memref<72x512xf32, #tpu.memory_space<vmem>>, vector<8x512xf32>
    tpu.vector_store %arg14[%c24_161, %c0_162], %257 {strides = array<i32>} : memref<72x512xf32, #tpu.memory_space<vmem>>, vector<8x512xf32>,
    %c32_163 = arith.constant 32 : index
    %c0_164 = arith.constant 0 : index
    %259 = vector.load %arg14[%c32_163, %c0_164] : memref<72x512xf32, #tpu.memory_space<vmem>>, vector<8x512xf32>
    tpu.vector_store %arg14[%c32_163, %c0_164], %242 {strides = array<i32>} : memref<72x512xf32, #tpu.memory_space<vmem>>, vector<8x512xf32>,
    %c511_i32_165 = arith.constant 511 : i32
    %260 = tpu.dynamic_rotate %242 by %c511_i32_165 dim 1 : vector<8x512xf32>, i32 -> vector<8x512xf32>
    %261 = arith.mulf %260, %68 : vector<8x512xf32>
    %c40_166 = arith.constant 40 : index
    %c0_167 = arith.constant 0 : index
    %262 = vector.load %arg14[%c40_166, %c0_167] : memref<72x512xf32, #tpu.memory_space<vmem>>, vector<8x512xf32>
    tpu.vector_store %arg14[%c40_166, %c0_167], %261 {strides = array<i32>} : memref<72x512xf32, #tpu.memory_space<vmem>>, vector<8x512xf32>,
    %c497_i32_168 = arith.constant 497 : i32
    %263 = tpu.dynamic_rotate %242 by %c497_i32_168 dim 1 : vector<8x512xf32>, i32 -> vector<8x512xf32>
    %264 = arith.mulf %263, %77 : vector<8x512xf32>
    %c48_169 = arith.constant 48 : index
    %c0_170 = arith.constant 0 : index
    %265 = vector.load %arg14[%c48_169, %c0_170] : memref<72x512xf32, #tpu.memory_space<vmem>>, vector<8x512xf32>
    tpu.vector_store %arg14[%c48_169, %c0_170], %264 {strides = array<i32>} : memref<72x512xf32, #tpu.memory_space<vmem>>, vector<8x512xf32>,
    %c496_i32_171 = arith.constant 496 : i32
    %266 = tpu.dynamic_rotate %242 by %c496_i32_171 dim 1 : vector<8x512xf32>, i32 -> vector<8x512xf32>
    %267 = arith.mulf %266, %83 : vector<8x512xf32>
    %c56_172 = arith.constant 56 : index
    %c0_173 = arith.constant 0 : index
    %268 = vector.load %arg14[%c56_172, %c0_173] : memref<72x512xf32, #tpu.memory_space<vmem>>, vector<8x512xf32>
    tpu.vector_store %arg14[%c56_172, %c0_173], %267 {strides = array<i32>} : memref<72x512xf32, #tpu.memory_space<vmem>>, vector<8x512xf32>,
    %c495_i32_174 = arith.constant 495 : i32
    %269 = tpu.dynamic_rotate %242 by %c495_i32_174 dim 1 : vector<8x512xf32>, i32 -> vector<8x512xf32>
    %270 = arith.mulf %269, %92 : vector<8x512xf32>
    %c64_175 = arith.constant 64 : index
    %c0_176 = arith.constant 0 : index
    %271 = vector.load %arg14[%c64_175, %c0_176] : memref<72x512xf32, #tpu.memory_space<vmem>>, vector<8x512xf32>
    tpu.vector_store %arg14[%c64_175, %c0_176], %270 {strides = array<i32>} : memref<72x512xf32, #tpu.memory_space<vmem>>, vector<8x512xf32>,
    %c0_177 = arith.constant 0 : index
    %c0_178 = arith.constant 0 : index
    %272 = vector.load %arg14[%c0_177, %c0_178] : memref<72x512xf32, #tpu.memory_space<vmem>>, vector<72x512xf32>
    %273 = arith.truncf %272 : vector<72x512xf32> to vector<72x512xbf16>
    %cst_179 = arith.constant dense<0.000000e+00> : vector<8x512xf32>
    %274 = tpu.matmul %244, %273, %cst_179 {dimension_numbers = #tpu.dot_dimension_numbers<[1], [0], [0], [1], [0, 0, 1, 1], [], []>} : vector<8x72xbf16>, vector<72x512xbf16>, vector<8x512xf32> -> vector<8x512xf32>
    %275 = vector.broadcast %246 : vector<8x1xf32> to vector<8x512xf32>
    %276 = arith.addf %274, %275 : vector<8x512xf32>
    %277 = vector.broadcast %205 : f32 to vector<8x512xf32>
    %278 = arith.mulf %277, %276 : vector<8x512xf32>
    %279 = arith.subf %125, %204 : vector<8x512xf32>
    %280 = vector.broadcast %206 : f32 to vector<8x512xf32>
    %281 = arith.mulf %280, %279 : vector<8x512xf32>
    %282 = arith.addf %278, %281 : vector<8x512xf32>
    %283 = arith.addf %282, %204 : vector<8x512xf32>
    %c0_180 = arith.constant 0 : index
    %c0_181 = arith.constant 0 : index
    %284 = vector.load %arg9[%c0_180, %c0_181] : memref<8x1xf32, #tpu.memory_space<vmem>>, vector<8x1xf32>
    %285 = vector.broadcast %284 : vector<8x1xf32> to vector<8x512xf32>
    %286 = arith.mulf %283, %285 : vector<8x512xf32>
    %c0_182 = arith.constant 0 : index
    %c0_183 = arith.constant 0 : index
    %287 = vector.load %arg10[%c0_182, %c0_183] : memref<8x1xf32, #tpu.memory_space<vmem>>, vector<8x1xf32>
    %288 = vector.broadcast %287 : vector<8x1xf32> to vector<8x512xf32>
    %289 = arith.addf %286, %288 : vector<8x512xf32>
    %c0_184 = arith.constant 0 : index
    %c0_185 = arith.constant 0 : index
    %290 = vector.load %arg11[%c0_184, %c0_185] : memref<8x72xbf16, #tpu.memory_space<vmem>>, vector<8x72xbf16>
    %c0_186 = arith.constant 0 : index
    %c0_187 = arith.constant 0 : index
    %291 = vector.load %arg12[%c0_186, %c0_187] : memref<8x1xf32, #tpu.memory_space<vmem>>, vector<8x1xf32>
    %c17_i32_188 = arith.constant 17 : i32
    %292 = tpu.dynamic_rotate %289 by %c17_i32_188 dim 1 : vector<8x512xf32>, i32 -> vector<8x512xf32>
    %293 = arith.mulf %292, %41 : vector<8x512xf32>
    %c0_189 = arith.constant 0 : index
    %c0_190 = arith.constant 0 : index
    %294 = vector.load %arg14[%c0_189, %c0_190] : memref<72x512xf32, #tpu.memory_space<vmem>>, vector<8x512xf32>
    tpu.vector_store %arg14[%c0_189, %c0_190], %293 {strides = array<i32>} : memref<72x512xf32, #tpu.memory_space<vmem>>, vector<8x512xf32>,
    %c16_i32_191 = arith.constant 16 : i32
    %295 = tpu.dynamic_rotate %289 by %c16_i32_191 dim 1 : vector<8x512xf32>, i32 -> vector<8x512xf32>
    %296 = arith.mulf %295, %47 : vector<8x512xf32>
    %c8_192 = arith.constant 8 : index
    %c0_193 = arith.constant 0 : index
    %297 = vector.load %arg14[%c8_192, %c0_193] : memref<72x512xf32, #tpu.memory_space<vmem>>, vector<8x512xf32>
    tpu.vector_store %arg14[%c8_192, %c0_193], %296 {strides = array<i32>} : memref<72x512xf32, #tpu.memory_space<vmem>>, vector<8x512xf32>,
    %c15_i32_194 = arith.constant 15 : i32
    %298 = tpu.dynamic_rotate %289 by %c15_i32_194 dim 1 : vector<8x512xf32>, i32 -> vector<8x512xf32>
    %299 = arith.mulf %298, %56 : vector<8x512xf32>
    %c16_195 = arith.constant 16 : index
    %c0_196 = arith.constant 0 : index
    %300 = vector.load %arg14[%c16_195, %c0_196] : memref<72x512xf32, #tpu.memory_space<vmem>>, vector<8x512xf32>
    tpu.vector_store %arg14[%c16_195, %c0_196], %299 {strides = array<i32>} : memref<72x512xf32, #tpu.memory_space<vmem>>, vector<8x512xf32>,
    %c1_i32_197 = arith.constant 1 : i32
    %301 = tpu.dynamic_rotate %289 by %c1_i32_197 dim 1 : vector<8x512xf32>, i32 -> vector<8x512xf32>
    %302 = arith.mulf %301, %62 : vector<8x512xf32>
    %c24_198 = arith.constant 24 : index
    %c0_199 = arith.constant 0 : index
    %303 = vector.load %arg14[%c24_198, %c0_199] : memref<72x512xf32, #tpu.memory_space<vmem>>, vector<8x512xf32>
    tpu.vector_store %arg14[%c24_198, %c0_199], %302 {strides = array<i32>} : memref<72x512xf32, #tpu.memory_space<vmem>>, vector<8x512xf32>,
    %c32_200 = arith.constant 32 : index
    %c0_201 = arith.constant 0 : index
    %304 = vector.load %arg14[%c32_200, %c0_201] : memref<72x512xf32, #tpu.memory_space<vmem>>, vector<8x512xf32>
    tpu.vector_store %arg14[%c32_200, %c0_201], %289 {strides = array<i32>} : memref<72x512xf32, #tpu.memory_space<vmem>>, vector<8x512xf32>,
    %c511_i32_202 = arith.constant 511 : i32
    %305 = tpu.dynamic_rotate %289 by %c511_i32_202 dim 1 : vector<8x512xf32>, i32 -> vector<8x512xf32>
    %306 = arith.mulf %305, %68 : vector<8x512xf32>
    %c40_203 = arith.constant 40 : index
    %c0_204 = arith.constant 0 : index
    %307 = vector.load %arg14[%c40_203, %c0_204] : memref<72x512xf32, #tpu.memory_space<vmem>>, vector<8x512xf32>
    tpu.vector_store %arg14[%c40_203, %c0_204], %306 {strides = array<i32>} : memref<72x512xf32, #tpu.memory_space<vmem>>, vector<8x512xf32>,
    %c497_i32_205 = arith.constant 497 : i32
    %308 = tpu.dynamic_rotate %289 by %c497_i32_205 dim 1 : vector<8x512xf32>, i32 -> vector<8x512xf32>
    %309 = arith.mulf %308, %77 : vector<8x512xf32>
    %c48_206 = arith.constant 48 : index
    %c0_207 = arith.constant 0 : index
    %310 = vector.load %arg14[%c48_206, %c0_207] : memref<72x512xf32, #tpu.memory_space<vmem>>, vector<8x512xf32>
    tpu.vector_store %arg14[%c48_206, %c0_207], %309 {strides = array<i32>} : memref<72x512xf32, #tpu.memory_space<vmem>>, vector<8x512xf32>,
    %c496_i32_208 = arith.constant 496 : i32
    %311 = tpu.dynamic_rotate %289 by %c496_i32_208 dim 1 : vector<8x512xf32>, i32 -> vector<8x512xf32>
    %312 = arith.mulf %311, %83 : vector<8x512xf32>
    %c56_209 = arith.constant 56 : index
    %c0_210 = arith.constant 0 : index
    %313 = vector.load %arg14[%c56_209, %c0_210] : memref<72x512xf32, #tpu.memory_space<vmem>>, vector<8x512xf32>
    tpu.vector_store %arg14[%c56_209, %c0_210], %312 {strides = array<i32>} : memref<72x512xf32, #tpu.memory_space<vmem>>, vector<8x512xf32>,
    %c495_i32_211 = arith.constant 495 : i32
    %314 = tpu.dynamic_rotate %289 by %c495_i32_211 dim 1 : vector<8x512xf32>, i32 -> vector<8x512xf32>
    %315 = arith.mulf %314, %92 : vector<8x512xf32>
    %c64_212 = arith.constant 64 : index
    %c0_213 = arith.constant 0 : index
    %316 = vector.load %arg14[%c64_212, %c0_213] : memref<72x512xf32, #tpu.memory_space<vmem>>, vector<8x512xf32>
    tpu.vector_store %arg14[%c64_212, %c0_213], %315 {strides = array<i32>} : memref<72x512xf32, #tpu.memory_space<vmem>>, vector<8x512xf32>,
    %c0_214 = arith.constant 0 : index
    %c0_215 = arith.constant 0 : index
    %317 = vector.load %arg14[%c0_214, %c0_215] : memref<72x512xf32, #tpu.memory_space<vmem>>, vector<72x512xf32>
    %318 = arith.truncf %317 : vector<72x512xf32> to vector<72x512xbf16>
    %cst_216 = arith.constant dense<0.000000e+00> : vector<8x512xf32>
    %319 = tpu.matmul %290, %318, %cst_216 {dimension_numbers = #tpu.dot_dimension_numbers<[1], [0], [0], [1], [0, 0, 1, 1], [], []>} : vector<8x72xbf16>, vector<72x512xbf16>, vector<8x512xf32> -> vector<8x512xf32>
    %320 = vector.broadcast %291 : vector<8x1xf32> to vector<8x512xf32>
    %321 = arith.addf %319, %320 : vector<8x512xf32>
    %c0_217 = arith.constant 0 : index
    %c0_218 = arith.constant 0 : index
    %322 = vector.load %arg13[%c0_217, %c0_218] : memref<8x512xf32, #tpu.memory_space<vmem>>, vector<8x512xf32>
    tpu.vector_store %arg13[%c0_217, %c0_218], %321 {strides = array<i32>} : memref<8x512xf32, #tpu.memory_space<vmem>>, vector<8x512xf32>,
    return
  }
  func.func @transform_0(%arg0: i32) -> i32 {
    %c0_i32 = arith.constant 0 : i32
    %c0_i32_0 = arith.constant 0 : i32
    return %c0_i32 : i32
  }
  func.func @transform_1(%arg0: i32) -> (i32, i32) {
    %c0_i32 = arith.constant 0 : i32
    %c0_i32_0 = arith.constant 0 : i32
    return %c0_i32, %arg0 : i32, i32
  }
  func.func @transform_2(%arg0: i32) -> (i32, i32) {
    %c0_i32 = arith.constant 0 : i32
    %c0_i32_0 = arith.constant 0 : i32
    %c0_i32_1 = arith.constant 0 : i32
    return %c0_i32, %c0_i32_0 : i32, i32
  }
  func.func @transform_3(%arg0: i32) -> (i32, i32) {
    %c0_i32 = arith.constant 0 : i32
    %c0_i32_0 = arith.constant 0 : i32
    %c0_i32_1 = arith.constant 0 : i32
    return %c0_i32, %c0_i32_0 : i32, i32
  }
  func.func @transform_4(%arg0: i32) -> (i32, i32, i32) {
    %c0_i32 = arith.constant 0 : i32
    %c0_i32_0 = arith.constant 0 : i32
    %c0_i32_1 = arith.constant 0 : i32
    %c0_i32_2 = arith.constant 0 : i32
    return %c0_i32, %c0_i32_0, %c0_i32_1 : i32, i32, i32
  }
  func.func @transform_5(%arg0: i32) -> (i32, i32, i32) {
    %c0_i32 = arith.constant 0 : i32
    %c0_i32_0 = arith.constant 0 : i32
    %c0_i32_1 = arith.constant 0 : i32
    %c0_i32_2 = arith.constant 0 : i32
    return %c0_i32, %c0_i32_0, %c0_i32_1 : i32, i32, i32
  }
  func.func @transform_6(%arg0: i32) -> (i32, i32, i32) {
    %c0_i32 = arith.constant 0 : i32
    %c0_i32_0 = arith.constant 0 : i32
    %c0_i32_1 = arith.constant 0 : i32
    %c0_i32_2 = arith.constant 0 : i32
    return %c0_i32, %c0_i32_0, %c0_i32_1 : i32, i32, i32
  }
  func.func @transform_7(%arg0: i32) -> (i32, i32, i32) {
    %c0_i32 = arith.constant 0 : i32
    %c0_i32_0 = arith.constant 0 : i32
    %c0_i32_1 = arith.constant 0 : i32
    %c0_i32_2 = arith.constant 0 : i32
    return %c0_i32, %c0_i32_0, %c0_i32_1 : i32, i32, i32
  }
  func.func @transform_8(%arg0: i32) -> (i32, i32) {
    %c0_i32 = arith.constant 0 : i32
    %c0_i32_0 = arith.constant 0 : i32
    %c0_i32_1 = arith.constant 0 : i32
    return %c0_i32, %c0_i32_0 : i32, i32
  }
  func.func @transform_9(%arg0: i32) -> (i32, i32) {
    %c0_i32 = arith.constant 0 : i32
    %c0_i32_0 = arith.constant 0 : i32
    %c0_i32_1 = arith.constant 0 : i32
    return %c0_i32, %c0_i32_0 : i32, i32
  }
  func.func @transform_10(%arg0: i32) -> (i32, i32) {
    %c0_i32 = arith.constant 0 : i32
    %c0_i32_0 = arith.constant 0 : i32
    %c0_i32_1 = arith.constant 0 : i32
    return %c0_i32, %c0_i32_0 : i32, i32
  }
  func.func @transform_11(%arg0: i32) -> (i32, i32) {
    %c0_i32 = arith.constant 0 : i32
    %c0_i32_0 = arith.constant 0 : i32
    %c0_i32_1 = arith.constant 0 : i32
    return %c0_i32, %c0_i32_0 : i32, i32
  }
  func.func @transform_12(%arg0: i32) -> (i32, i32) {
    %c0_i32 = arith.constant 0 : i32
    %c0_i32_0 = arith.constant 0 : i32
    return %c0_i32, %arg0 : i32, i32
  }
}

</mosaic_0001>

<llo_original>
// kernel: tpu_custom_call.1
$region0: #{tpu_custom_call.1}
  #allocation0 [shape = 'u32[]', space=smem, size = 0x4, offset = 0x4, fixed_abs, tag = 'smem constant byte address 0x4 - core index']
  #allocation1 [shape = 'u32[144,128]{1,0:T(1,128)}', space=vmem, size = 0x12000, scoped, tag = 'internal scratch']
  #allocation2 [shape = 'f32[72,512]{1,0:T(8,128)}', space=vmem, size = 0x24000, scoped, tag = 'scratch operand']
  %s0 = inlined_call_operand.vmem [shape: f32[4], index: 0, kind: input, shape index: {}]
  %s1 = inlined_call_operand.vmem [shape: f32[8,512], index: 1, kind: input, shape index: {}]
  %s2 = inlined_call_operand.vmem [shape: bf16[8,72], index: 2, kind: input, shape index: {}]
  %s3 = inlined_call_operand.vmem [shape: f32[8,1], index: 3, kind: input, shape index: {}]
  %s4 = inlined_call_operand.vmem [shape: bf16[2,8,72], index: 4, kind: input, shape index: {}]
  %s5 = inlined_call_operand.vmem [shape: f32[2,8,1], index: 5, kind: input, shape index: {}]
  %s6 = inlined_call_operand.vmem [shape: bf16[2,8,72], index: 6, kind: input, shape index: {}]
  %s7 = inlined_call_operand.vmem [shape: f32[2,8,1], index: 7, kind: input, shape index: {}]
  %s8 = inlined_call_operand.vmem [shape: f32[8,1], index: 8, kind: input, shape index: {}]
  %s9 = inlined_call_operand.vmem [shape: f32[8,1], index: 9, kind: input, shape index: {}]
  %s10 = inlined_call_operand.vmem [shape: bf16[8,72], index: 10, kind: input, shape index: {}]
  %s11 = inlined_call_operand.vmem [shape: f32[8,1], index: 11, kind: input, shape index: {}]
  %s12 = inlined_call_operand.hbm [shape: f32[8,512], index: 12, kind: output, shape index: {}]
  %s13 = sld [smem:[#allocation0]]
  $region62: #{tpu_custom_call.1} parent=0
    _
  %s15 = ssub.s32 1, %s13
  %s16 = scalar_select 0, %s15, %s13
  $region1: #{tpu_custom_call.1} parent=0
    #allocation3 [shape = 'u8[512]{0}', space=smem, size = 0x200, scoped, tag = 'input window, operand 0, single buffered']
    #allocation4 [shape = 's32[1]{0}', space=sflag, size = 0x4, scoped, tag = 'scoped memory for tpu_custom_call.1']
    #allocation5 [shape = 's32[1]{0}', space=sflag, size = 0x4, scoped, tag = 'scoped memory for tpu_custom_call.1']
    #allocation6 [shape = 'u8[16384]{0}', space=vmem, size = 0x4000, scoped, tag = 'output window, operand 0, single buffered']
    %17 = vsyncpa [#allocation5], 0
    %18 = vsyncpa [#allocation4], 0
    // Predicated region
    $region2: #{tpu_custom_call.1} parent=1 // pred_check
      _
    $region3: #{tpu_custom_call.1} parent=1 // pred_check_branch
      %20 = sbr.rel (0) target = $region5
    $region4: #{tpu_custom_call.1} parent=1 // pred_region
      %s22 = ssub.s32 16, 16
      %23 = vsyncadd [#allocation5], %s22
      %s25 = sshll.u32 %s0, 4
      %s26 = int_to_ptr.vmem [resolvable:$true] %s25
      %28 = dma.vmem_to_smem %s26, 16, [#allocation3], [#allocation5]
    $region5: #{tpu_custom_call.1} parent=1 // pred_fallthru
      _
    // Predicated region
    $region6: #{tpu_custom_call.1} parent=1 // pred_check
      _
    $region7: #{tpu_custom_call.1} parent=1 // pred_check_branch
      %30 = sbr.rel (0) target = $region9
    $region8: #{tpu_custom_call.1} parent=1 // pred_region
      _
    $region9: #{tpu_custom_call.1} parent=1 // pred_fallthru
      _
    // Predicated region
    $region10: #{tpu_custom_call.1} parent=1 // pred_check
      _
    $region11: #{tpu_custom_call.1} parent=1 // pred_check_branch
      %32 = sbr.rel (0) target = $region13
    $region12: #{tpu_custom_call.1} parent=1 // pred_region
      _
    $region13: #{tpu_custom_call.1} parent=1 // pred_fallthru
      _
    // Predicated region
    $region14: #{tpu_custom_call.1} parent=1 // pred_check
      _
    $region15: #{tpu_custom_call.1} parent=1 // pred_check_branch
      %34 = sbr.rel (0) target = $region17
    $region16: #{tpu_custom_call.1} parent=1 // pred_region
      _
    $region17: #{tpu_custom_call.1} parent=1 // pred_fallthru
      _
    // Predicated region
    $region18: #{tpu_custom_call.1} parent=1 // pred_check
      _
    $region19: #{tpu_custom_call.1} parent=1 // pred_check_branch
      %36 = sbr.rel (0) target = $region21
    $region20: #{tpu_custom_call.1} parent=1 // pred_region
      _
    $region21: #{tpu_custom_call.1} parent=1 // pred_fallthru
      _
    // Predicated region
    $region22: #{tpu_custom_call.1} parent=1 // pred_check
      _
    $region23: #{tpu_custom_call.1} parent=1 // pred_check_branch
      %38 = sbr.rel (0) target = $region25
    $region24: #{tpu_custom_call.1} parent=1 // pred_region
      _
    $region25: #{tpu_custom_call.1} parent=1 // pred_fallthru
      _
    // Predicated region
    $region26: #{tpu_custom_call.1} parent=1 // pred_check
      _
    $region27: #{tpu_custom_call.1} parent=1 // pred_check_branch
      %40 = sbr.rel (0) target = $region29
    $region28: #{tpu_custom_call.1} parent=1 // pred_region
      _
    $region29: #{tpu_custom_call.1} parent=1 // pred_fallthru
      _
    // Predicated region
    $region30: #{tpu_custom_call.1} parent=1 // pred_check
      _
    $region31: #{tpu_custom_call.1} parent=1 // pred_check_branch
      %42 = sbr.rel (0) target = $region33
    $region32: #{tpu_custom_call.1} parent=1 // pred_region
      _
    $region33: #{tpu_custom_call.1} parent=1 // pred_fallthru
      _
    // Predicated region
    $region34: #{tpu_custom_call.1} parent=1 // pred_check
      _
    $region35: #{tpu_custom_call.1} parent=1 // pred_check_branch
      %44 = sbr.rel (0) target = $region37
    $region36: #{tpu_custom_call.1} parent=1 // pred_region
      _
    $region37: #{tpu_custom_call.1} parent=1 // pred_fallthru
      _
    // Predicated region
    $region38: #{tpu_custom_call.1} parent=1 // pred_check
      _
    $region39: #{tpu_custom_call.1} parent=1 // pred_check_branch
      %46 = sbr.rel (0) target = $region41
    $region40: #{tpu_custom_call.1} parent=1 // pred_region
      _
    $region41: #{tpu_custom_call.1} parent=1 // pred_fallthru
      _
    // Predicated region
    $region42: #{tpu_custom_call.1} parent=1 // pred_check
      _
    $region43: #{tpu_custom_call.1} parent=1 // pred_check_branch
      %48 = sbr.rel (0) target = $region45
    $region44: #{tpu_custom_call.1} parent=1 // pred_region
      _
    $region45: #{tpu_custom_call.1} parent=1 // pred_fallthru
      _
    // Predicated region
    $region46: #{tpu_custom_call.1} parent=1 // pred_check
      _
    $region47: #{tpu_custom_call.1} parent=1 // pred_check_branch
      %50 = sbr.rel (0) target = $region49
    $region48: #{tpu_custom_call.1} parent=1 // pred_region
      _
    $region49: #{tpu_custom_call.1} parent=1 // pred_fallthru
      _
    // Predicated region
    $region50: #{tpu_custom_call.1} parent=1 // pred_check
      _
    $region51: #{tpu_custom_call.1} parent=1 // pred_check_branch
      %52 = sbr.rel (0) target = $region53
    $region52: #{tpu_custom_call.1} parent=1 // pred_region
      %53 = dma.done [#allocation5], 16
    $region53: #{tpu_custom_call.1} parent=1 // pred_fallthru
      _
    %54 = sfence
    %v56 = vlaneseq
    %v57 = vand.u32 %v56, 127
    %v58 = vadd.s32 %v57, 128
    %v59 = vadd.s32 %v57, 256
    %v60 = vadd.s32 %v57, 384
    %vm61 = vcmp.lt.s32.totalorder %v57, 0
    %v62 = vsub.s32 0, %v57
    %v63 = vsel %vm61, %v62, %v57
    %v64 = vshrl.u32 %v63, 8
    %v65 = vand.u32 %v63, 255
    %v66 = vsub.s32 0, %v65
    %v67 = vsel %vm61, %v66, %v65
    %vm68 = vcmp.lt.s32.totalorder %v58, 0
    %v69 = vsub.s32 0, %v58
    %v70 = vsel %vm68, %v69, %v58
    %v71 = vshrl.u32 %v70, 8
    %v72 = vand.u32 %v70, 255
    %v73 = vsub.s32 0, %v72
    %v74 = vsel %vm68, %v73, %v72
    %vm75 = vcmp.lt.s32.totalorder %v59, 0
    %v76 = vsub.s32 0, %v59
    %v77 = vsel %vm75, %v76, %v59
    %v78 = vshrl.u32 %v77, 8
    %v79 = vand.u32 %v77, 255
    %v80 = vsub.s32 0, %v79
    %v81 = vsel %vm75, %v80, %v79
    %vm82 = vcmp.lt.s32.totalorder %v60, 0
    %v83 = vsub.s32 0, %v60
    %v84 = vsel %vm82, %v83, %v60
    %v85 = vshrl.u32 %v84, 8
    %v86 = vand.u32 %v84, 255
    %v87 = vsub.s32 0, %v86
    %v88 = vsel %vm82, %v87, %v86
    %vm89 = vcmp.ne.s32.totalorder %v67, 0
    %vm90 = vcmp.ne.s32.totalorder %v74, 0
    %vm91 = vcmp.ne.s32.totalorder %v81, 0
    %vm92 = vcmp.ne.s32.totalorder %v88, 0
    %vm93 = vcmp.lt.s32.totalorder %v67, 0
    %vm94 = vcmp.lt.s32.totalorder %v74, 0
    %vm95 = vcmp.lt.s32.totalorder %v81, 0
    %vm96 = vcmp.lt.s32.totalorder %v88, 0
    %vm97 = vmand %vm93, %vm89
    %vm98 = vmand %vm94, %vm90
    %vm99 = vmand %vm95, %vm91
    %vm100 = vmand %vm96, %vm92
    %v101 = vadd.s32 %v67, 256
    %v102 = vadd.s32 %v74, 256
    %v103 = vadd.s32 %v81, 256
    %v104 = vadd.s32 %v88, 256
    %v105 = vsel %vm97, %v101, %v67
    %v106 = vsel %vm98, %v102, %v74
    %v107 = vsel %vm99, %v103, %v81
    %v108 = vsel %vm100, %v104, %v88
    %vm109 = vcmp.lt.s32.totalorder %v105, 0
    %v110 = vsub.s32 0, %v105
    %v111 = vsel %vm109, %v110, %v105
    %v112 = vshrl.u32 %v111, 4
    %v113 = vand.u32 %v111, 15
    %v114 = vsub.s32 0, %v113
    %v115 = vsel %vm109, %v114, %v113
    %vm116 = vcmp.lt.s32.totalorder %v106, 0
    %v117 = vsub.s32 0, %v106
    %v118 = vsel %vm116, %v117, %v106
    %v119 = vshrl.u32 %v118, 4
    %v120 = vand.u32 %v118, 15
    %v121 = vsub.s32 0, %v120
    %v122 = vsel %vm116, %v121, %v120
    %vm123 = vcmp.lt.s32.totalorder %v107, 0
    %v124 = vsub.s32 0, %v107
    %v125 = vsel %vm123, %v124, %v107
    %v126 = vshrl.u32 %v125, 4
    %v127 = vand.u32 %v125, 15
    %v128 = vsub.s32 0, %v127
    %v129 = vsel %vm123, %v128, %v127
    %vm130 = vcmp.lt.s32.totalorder %v108, 0
    %v131 = vsub.s32 0, %v108
    %v132 = vsel %vm130, %v131, %v108
    %v133 = vshrl.u32 %v132, 4
    %v134 = vand.u32 %v132, 15
    %v135 = vsub.s32 0, %v134
    %v136 = vsel %vm130, %v135, %v134
    %vm137 = vcmp.ne.s32.totalorder %v115, 0
    %vm138 = vcmp.ne.s32.totalorder %v122, 0
    %vm139 = vcmp.ne.s32.totalorder %v129, 0
    %vm140 = vcmp.ne.s32.totalorder %v136, 0
    %vm141 = vcmp.lt.s32.totalorder %v115, 0
    %vm142 = vcmp.lt.s32.totalorder %v122, 0
    %vm143 = vcmp.lt.s32.totalorder %v129, 0
    %vm144 = vcmp.lt.s32.totalorder %v136, 0
    %vm145 = vmand %vm141, %vm137
    %vm146 = vmand %vm142, %vm138
    %vm147 = vmand %vm143, %vm139
    %vm148 = vmand %vm144, %vm140
    %v149 = vadd.s32 %v115, 16
    %v150 = vadd.s32 %v122, 16
    %v151 = vadd.s32 %v129, 16
    %v152 = vadd.s32 %v136, 16
    %v153 = vsel %vm145, %v149, %v115
    %v154 = vsel %vm146, %v150, %v122
    %v155 = vsel %vm147, %v151, %v129
    %v156 = vsel %vm148, %v152, %v136
    %vm157 = vcmp.ge.s32.totalorder %v105, 16
    %vm158 = vcmp.ge.s32.totalorder %v106, 16
    %vm159 = vcmp.ge.s32.totalorder %v107, 16
    %vm160 = vcmp.ge.s32.totalorder %v108, 16
    %vm161 = vcmp.ge.s32.totalorder %v153, 1
    %vm162 = vcmp.ge.s32.totalorder %v154, 1
    %vm163 = vcmp.ge.s32.totalorder %v155, 1
    %vm164 = vcmp.ge.s32.totalorder %v156, 1
    %vm165 = vmand %vm157, %vm161
    %vm166 = vmand %vm158, %vm162
    %vm167 = vmand %vm159, %vm163
    %vm168 = vmand %vm160, %vm164
    %v169 = vsel %vm165, 1, 0
    %v170 = vsel %vm166, 1, 0
    %v171 = vsel %vm167, 1, 0
    %v172 = vsel %vm168, 1, 0
    %v173 = vcvt.s32.f32 %v169
    %v174 = vcvt.s32.f32 %v170
    %v175 = vcvt.s32.f32 %v171
    %v176 = vcvt.s32.f32 %v172
    %v177 = vsel %vm157, 1, 0
    %v178 = vsel %vm158, 1, 0
    %v179 = vsel %vm159, 1, 0
    %v180 = vsel %vm160, 1, 0
    %v181 = vcvt.s32.f32 %v177
    %v182 = vcvt.s32.f32 %v178
    %v183 = vcvt.s32.f32 %v179
    %v184 = vcvt.s32.f32 %v180
    %vm185 = vcmp.le.s32.totalorder %v153, 14
    %vm186 = vcmp.le.s32.totalorder %v154, 14
    %vm187 = vcmp.le.s32.totalorder %v155, 14
    %vm188 = vcmp.le.s32.totalorder %v156, 14
    %vm189 = vmand %vm157, %vm185
    %vm190 = vmand %vm158, %vm186
    %vm191 = vmand %vm159, %vm187
    %vm192 = vmand %vm160, %vm188
    %v193 = vsel %vm189, 1, 0
    %v194 = vsel %vm190, 1, 0
    %v195 = vsel %vm191, 1, 0
    %v196 = vsel %vm192, 1, 0
    %v197 = vcvt.s32.f32 %v193
    %v198 = vcvt.s32.f32 %v194
    %v199 = vcvt.s32.f32 %v195
    %v200 = vcvt.s32.f32 %v196
    %v201 = vsel %vm161, 1, 0
    %v202 = vsel %vm162, 1, 0
    %v203 = vsel %vm163, 1, 0
    %v204 = vsel %vm164, 1, 0
    %v205 = vcvt.s32.f32 %v201
    %v206 = vcvt.s32.f32 %v202
    %v207 = vcvt.s32.f32 %v203
    %v208 = vcvt.s32.f32 %v204
    %v209 = vsel %vm185, 1, 0
    %v210 = vsel %vm186, 1, 0
    %v211 = vsel %vm187, 1, 0
    %v212 = vsel %vm188, 1, 0
    %v213 = vcvt.s32.f32 %v209
    %v214 = vcvt.s32.f32 %v210
    %v215 = vcvt.s32.f32 %v211
    %v216 = vcvt.s32.f32 %v212
    %vm217 = vcmp.lt.s32.totalorder %v105, 240
    %vm218 = vcmp.lt.s32.totalorder %v106, 240
    %vm219 = vcmp.lt.s32.totalorder %v107, 240
    %vm220 = vcmp.lt.s32.totalorder %v108, 240
    %vm221 = vmand %vm217, %vm161
    %vm222 = vmand %vm218, %vm162
    %vm223 = vmand %vm219, %vm163
    %vm224 = vmand %vm220, %vm164
    %v225 = vsel %vm221, 1, 0
    %v226 = vsel %vm222, 1, 0
    %v227 = vsel %vm223, 1, 0
    %v228 = vsel %vm224, 1, 0
    %v229 = vcvt.s32.f32 %v225
    %v230 = vcvt.s32.f32 %v226
    %v231 = vcvt.s32.f32 %v227
    %v232 = vcvt.s32.f32 %v228
    %v233 = vsel %vm217, 1, 0
    %v234 = vsel %vm218, 1, 0
    %v235 = vsel %vm219, 1, 0
    %v236 = vsel %vm220, 1, 0
    %v237 = vcvt.s32.f32 %v233
    %v238 = vcvt.s32.f32 %v234
    %v239 = vcvt.s32.f32 %v235
    %v240 = vcvt.s32.f32 %v236
    %vm241 = vmand %vm217, %vm185
    %vm242 = vmand %vm218, %vm186
    %vm243 = vmand %vm219, %vm187
    %vm244 = vmand %vm220, %vm188
    %v245 = vsel %vm241, 1, 0
    %v246 = vsel %vm242, 1, 0
    %v247 = vsel %vm243, 1, 0
    %v248 = vsel %vm244, 1, 0
    %v249 = vcvt.s32.f32 %v245
    %v250 = vcvt.s32.f32 %v246
    %v251 = vcvt.s32.f32 %v247
    %v252 = vcvt.s32.f32 %v248
    %v253 = vld [vmem:[%s1] sm:$0xff]
    %v254 = vld [vmem:[%s1 + $0x8] sm:$0xff]
    %v255 = vld [vmem:[%s1 + $0x10] sm:$0xff]
    %v256 = vld [vmem:[%s1 + $0x18] sm:$0xff]
    %v257 = vld [vmem:[%s2] sm:$0xf]
    %v258 = vld [vmem:[%s3] sm:$0xff]
    %259 = vrot.lane.b32.xlu0 %v253, 17
    %v260 = vpop.permute.xlu0 %259
    %261 = vrot.lane.b32.xlu0 %v254, 17
    %v262 = vpop.permute.xlu0 %261
    %263 = vrot.lane.b32.xlu0 %v255, 17
    %v264 = vpop.permute.xlu0 %263
    %265 = vrot.lane.b32.xlu0 %v256, 17
    %v266 = vpop.permute.xlu0 %265
    %vm267 = vcmp.lt.s32.totalorder %v57, 17
    %v268 = vsel %vm267, %v264, %v266
    %v269 = vsel %vm267, %v262, %v264
    %v270 = vsel %vm267, %v260, %v262
    %v271 = vsel %vm267, %v266, %v260
    %v272 = vmul.f32 %v271, %v173
    %v273 = vmul.f32 %v270, %v174
    %v274 = vmul.f32 %v269, %v175
    %v275 = vmul.f32 %v268, %v176
    %276 = vst [vmem:[#allocation2] sm:$0xff] %v272
    %277 = vst [vmem:[#allocation2 + $0x8] sm:$0xff] %v273
    %278 = vst [vmem:[#allocation2 + $0x10] sm:$0xff] %v274
    %279 = vst [vmem:[#allocation2 + $0x18] sm:$0xff] %v275
    %280 = vrot.lane.b32.xlu0 %v253, 16
    %v281 = vpop.permute.xlu0 %280
    %282 = vrot.lane.b32.xlu0 %v254, 16
    %v283 = vpop.permute.xlu0 %282
    %284 = vrot.lane.b32.xlu0 %v255, 16
    %v285 = vpop.permute.xlu0 %284
    %286 = vrot.lane.b32.xlu0 %v256, 16
    %v287 = vpop.permute.xlu0 %286
    %vm288 = vcmp.lt.s32.totalorder %v57, 16
    %v289 = vsel %vm288, %v285, %v287
    %v290 = vsel %vm288, %v283, %v285
    %v291 = vsel %vm288, %v281, %v283
    %v292 = vsel %vm288, %v287, %v281
    %v293 = vmul.f32 %v292, %v181
    %v294 = vmul.f32 %v291, %v182
    %v295 = vmul.f32 %v290, %v183
    %v296 = vmul.f32 %v289, %v184
    %297 = vst [vmem:[#allocation2 + $0x20] sm:$0xff] %v293
    %298 = vst [vmem:[#allocation2 + $0x28] sm:$0xff] %v294
    %299 = vst [vmem:[#allocation2 + $0x30] sm:$0xff] %v295
    %300 = vst [vmem:[#allocation2 + $0x38] sm:$0xff] %v296
    %301 = vrot.lane.b32.xlu0 %v253, 15
    %v302 = vpop.permute.xlu0 %301
    %303 = vrot.lane.b32.xlu0 %v254, 15
    %v304 = vpop.permute.xlu0 %303
    %305 = vrot.lane.b32.xlu0 %v255, 15
    %v306 = vpop.permute.xlu0 %305
    %307 = vrot.lane.b32.xlu0 %v256, 15
    %v308 = vpop.permute.xlu0 %307
    %vm309 = vcmp.lt.s32.totalorder %v57, 15
    %v310 = vsel %vm309, %v306, %v308
    %v311 = vsel %vm309, %v304, %v306
    %v312 = vsel %vm309, %v302, %v304
    %v313 = vsel %vm309, %v308, %v302
    %v314 = vmul.f32 %v313, %v197
    %v315 = vmul.f32 %v312, %v198
    %v316 = vmul.f32 %v311, %v199
    %v317 = vmul.f32 %v310, %v200
    %318 = vst [vmem:[#allocation2 + $0x40] sm:$0xff] %v314
    %319 = vst [vmem:[#allocation2 + $0x48] sm:$0xff] %v315
    %320 = vst [vmem:[#allocation2 + $0x50] sm:$0xff] %v316
    %321 = vst [vmem:[#allocation2 + $0x58] sm:$0xff] %v317
    %322 = vrot.lane.b32.xlu0 %v253, 1
    %v323 = vpop.permute.xlu0 %322
    %324 = vrot.lane.b32.xlu0 %v254, 1
    %v325 = vpop.permute.xlu0 %324
    %326 = vrot.lane.b32.xlu0 %v255, 1
    %v327 = vpop.permute.xlu0 %326
    %328 = vrot.lane.b32.xlu0 %v256, 1
    %v329 = vpop.permute.xlu0 %328
    %vm330 = vcmp.lt.s32.totalorder %v57, 1
    %v331 = vsel %vm330, %v327, %v329
    %v332 = vsel %vm330, %v325, %v327
    %v333 = vsel %vm330, %v323, %v325
    %v334 = vsel %vm330, %v329, %v323
    %v335 = vmul.f32 %v334, %v205
    %v336 = vmul.f32 %v333, %v206
    %v337 = vmul.f32 %v332, %v207
    %v338 = vmul.f32 %v331, %v208
    %339 = vst [vmem:[#allocation2 + $0x60] sm:$0xff] %v335
    %340 = vst [vmem:[#allocation2 + $0x68] sm:$0xff] %v336
    %341 = vst [vmem:[#allocation2 + $0x70] sm:$0xff] %v337
    %342 = vst [vmem:[#allocation2 + $0x78] sm:$0xff] %v338
    %343 = vst [vmem:[#allocation2 + $0x80] sm:$0xff] %v253
    %344 = vst [vmem:[#allocation2 + $0x88] sm:$0xff] %v254
    %345 = vst [vmem:[#allocation2 + $0x90] sm:$0xff] %v255
    %346 = vst [vmem:[#allocation2 + $0x98] sm:$0xff] %v256
    %347 = vrot.lane.b32.xlu0 %v253, 127
    %v348 = vpop.permute.xlu0 %347
    %349 = vrot.lane.b32.xlu0 %v254, 127
    %v350 = vpop.permute.xlu0 %349
    %351 = vrot.lane.b32.xlu0 %v255, 127
    %v352 = vpop.permute.xlu0 %351
    %353 = vrot.lane.b32.xlu0 %v256, 127
    %v354 = vpop.permute.xlu0 %353
    %vm355 = vcmp.lt.s32.totalorder %v57, 127
    %v356 = vsel %vm355, %v352, %v354
    %v357 = vsel %vm355, %v350, %v352
    %v358 = vsel %vm355, %v348, %v350
    %v359 = vsel %vm355, %v354, %v348
    %v360 = vmul.f32 %v358, %v213
    %v361 = vmul.f32 %v357, %v214
    %v362 = vmul.f32 %v356, %v215
    %v363 = vmul.f32 %v359, %v216
    %364 = vst [vmem:[#allocation2 + $0xa0] sm:$0xff] %v360
    %365 = vst [vmem:[#allocation2 + $0xa8] sm:$0xff] %v361
    %366 = vst [vmem:[#allocation2 + $0xb0] sm:$0xff] %v362
    %367 = vst [vmem:[#allocation2 + $0xb8] sm:$0xff] %v363
    %368 = vrot.lane.b32.xlu0 %v253, 113
    %v369 = vpop.permute.xlu0 %368
    %370 = vrot.lane.b32.xlu0 %v254, 113
    %v371 = vpop.permute.xlu0 %370
    %372 = vrot.lane.b32.xlu0 %v255, 113
    %v373 = vpop.permute.xlu0 %372
    %374 = vrot.lane.b32.xlu0 %v256, 113
    %v375 = vpop.permute.xlu0 %374
    %vm376 = vcmp.lt.s32.totalorder %v57, 113
    %v377 = vsel %vm376, %v373, %v375
    %v378 = vsel %vm376, %v371, %v373
    %v379 = vsel %vm376, %v369, %v371
    %v380 = vsel %vm376, %v375, %v369
    %v381 = vmul.f32 %v379, %v229
    %v382 = vmul.f32 %v378, %v230
    %v383 = vmul.f32 %v377, %v231
    %v384 = vmul.f32 %v380, %v232
    %385 = vst [vmem:[#allocation2 + $0xc0] sm:$0xff] %v381
    %386 = vst [vmem:[#allocation2 + $0xc8] sm:$0xff] %v382
    %387 = vst [vmem:[#allocation2 + $0xd0] sm:$0xff] %v383
    %388 = vst [vmem:[#allocation2 + $0xd8] sm:$0xff] %v384
    %389 = vrot.lane.b32.xlu0 %v253, 112
    %v390 = vpop.permute.xlu0 %389
    %391 = vrot.lane.b32.xlu0 %v254, 112
    %v392 = vpop.permute.xlu0 %391
    %393 = vrot.lane.b32.xlu0 %v255, 112
    %v394 = vpop.permute.xlu0 %393
    %395 = vrot.lane.b32.xlu0 %v256, 112
    %v396 = vpop.permute.xlu0 %395
    %vm397 = vcmp.lt.s32.totalorder %v57, 112
    %v398 = vsel %vm397, %v394, %v396
    %v399 = vsel %vm397, %v392, %v394
    %v400 = vsel %vm397, %v390, %v392
    %v401 = vsel %vm397, %v396, %v390
    %v402 = vmul.f32 %v400, %v237
    %v403 = vmul.f32 %v399, %v238
    %v404 = vmul.f32 %v398, %v239
    %v405 = vmul.f32 %v401, %v240
    %406 = vst [vmem:[#allocation2 + $0xe0] sm:$0xff] %v402
    %407 = vst [vmem:[#allocation2 + $0xe8] sm:$0xff] %v403
    %408 = vst [vmem:[#allocation2 + $0xf0] sm:$0xff] %v404
    %409 = vst [vmem:[#allocation2 + $0xf8] sm:$0xff] %v405
    %410 = vrot.lane.b32.xlu0 %v253, 111
    %v411 = vpop.permute.xlu0 %410
    %412 = vrot.lane.b32.xlu0 %v254, 111
    %v413 = vpop.permute.xlu0 %412
    %414 = vrot.lane.b32.xlu0 %v255, 111
    %v415 = vpop.permute.xlu0 %414
    %416 = vrot.lane.b32.xlu0 %v256, 111
    %v417 = vpop.permute.xlu0 %416
    %vm418 = vcmp.lt.s32.totalorder %v57, 111
    %v419 = vsel %vm418, %v415, %v417
    %v420 = vsel %vm418, %v413, %v415
    %v421 = vsel %vm418, %v411, %v413
    %v422 = vsel %vm418, %v417, %v411
    %v423 = vmul.f32 %v421, %v249
    %v424 = vmul.f32 %v420, %v250
    %v425 = vmul.f32 %v419, %v251
    %v426 = vmul.f32 %v422, %v252
    %427 = vst [vmem:[#allocation2 + $0x100] sm:$0xff] %v423
    %428 = vst [vmem:[#allocation2 + $0x108] sm:$0xff] %v424
    %429 = vst [vmem:[#allocation2 + $0x110] sm:$0xff] %v425
    %430 = vst [vmem:[#allocation2 + $0x118] sm:$0xff] %v426
    %v431 = vld [vmem:[#allocation2] sm:$0xff]
    %v432 = vld [vmem:[#allocation2 + $0x8] sm:$0xff]
    %v433 = vld [vmem:[#allocation2 + $0x10] sm:$0xff]
    %v434 = vld [vmem:[#allocation2 + $0x18] sm:$0xff]
    %v435 = vld [vmem:[#allocation2 + $0x20] sm:$0xff]
    %v436 = vld [vmem:[#allocation2 + $0x28] sm:$0xff]
    %v437 = vld [vmem:[#allocation2 + $0x30] sm:$0xff]
    %v438 = vld [vmem:[#allocation2 + $0x38] sm:$0xff]
    %v439 = vld [vmem:[#allocation2 + $0x40] sm:$0xff]
    %v440 = vld [vmem:[#allocation2 + $0x48] sm:$0xff]
    %v441 = vld [vmem:[#allocation2 + $0x50] sm:$0xff]
    %v442 = vld [vmem:[#allocation2 + $0x58] sm:$0xff]
    %v443 = vld [vmem:[#allocation2 + $0x60] sm:$0xff]
    %v444 = vld [vmem:[#allocation2 + $0x68] sm:$0xff]
    %v445 = vld [vmem:[#allocation2 + $0x70] sm:$0xff]
    %v446 = vld [vmem:[#allocation2 + $0x78] sm:$0xff]
    %v447 = vld [vmem:[#allocation2 + $0x80] sm:$0xff]
    %v448 = vld [vmem:[#allocation2 + $0x88] sm:$0xff]
    %v449 = vld [vmem:[#allocation2 + $0x90] sm:$0xff]
    %v450 = vld [vmem:[#allocation2 + $0x98] sm:$0xff]
    %v451 = vld [vmem:[#allocation2 + $0xa0] sm:$0xff]
    %v452 = vld [vmem:[#allocation2 + $0xa8] sm:$0xff]
    %v453 = vld [vmem:[#allocation2 + $0xb0] sm:$0xff]
    %v454 = vld [vmem:[#allocation2 + $0xb8] sm:$0xff]
    %v455 = vld [vmem:[#allocation2 + $0xc0] sm:$0xff]
    %v456 = vld [vmem:[#allocation2 + $0xc8] sm:$0xff]
    %v457 = vld [vmem:[#allocation2 + $0xd0] sm:$0xff]
    %v458 = vld [vmem:[#allocation2 + $0xd8] sm:$0xff]
    %v459 = vld [vmem:[#allocation2 + $0xe0] sm:$0xff]
    %v460 = vld [vmem:[#allocation2 + $0xe8] sm:$0xff]
    %v461 = vld [vmem:[#allocation2 + $0xf0] sm:$0xff]
    %v462 = vld [vmem:[#allocation2 + $0xf8] sm:$0xff]
    %v463 = vld [vmem:[#allocation2 + $0x100] sm:$0xff]
    %v464 = vld [vmem:[#allocation2 + $0x108] sm:$0xff]
    %v465 = vld [vmem:[#allocation2 + $0x110] sm:$0xff]
    %v466 = vld [vmem:[#allocation2 + $0x118] sm:$0xff]
    %v467 = vpack.c.bf16 %v435, %v431
    %v468 = vpack.c.bf16 %v436, %v432
    %v469 = vpack.c.bf16 %v437, %v433
    %v470 = vpack.c.bf16 %v438, %v434
    %v471 = vpack.c.bf16 %v443, %v439
    %v472 = vpack.c.bf16 %v444, %v440
    %v473 = vpack.c.bf16 %v445, %v441
    %v474 = vpack.c.bf16 %v446, %v442
    %v475 = vpack.c.bf16 %v451, %v447
    %v476 = vpack.c.bf16 %v452, %v448
    %v477 = vpack.c.bf16 %v453, %v449
    %v478 = vpack.c.bf16 %v454, %v450
    %v479 = vpack.c.bf16 %v459, %v455
    %v480 = vpack.c.bf16 %v460, %v456
    %v481 = vpack.c.bf16 %v461, %v457
    %v482 = vpack.c.bf16 %v462, %v458
    %v483 = vpack.c.bf16 %v463, %v463
    %v484 = vpack.c.bf16 %v464, %v464
    %v485 = vpack.c.bf16 %v465, %v465
    %v486 = vpack.c.bf16 %v466, %v466
    %488 = vset.pattern.permute.xlu0 0
    %489 = vperm.xlu0 %488, %v258
    %v490 = vpop.permute.xlu0 %489
    %vm492 = vcmask 588800
    %v494 = vsel %vm492, %v257, 0
    %vm496 = vcmask 1043456
    %v498 = vsel %vm496, %v483, 0
    %v501 = vsel %vm496, %v484, 0
    %v504 = vsel %vm496, %v485, 0
    %v507 = vsel %vm496, %v486, 0
    %509 = vmatprep.subr.bf16.mxu0 %v468
    %510 = vmatpush1.bf16.msra.mxu0 %v467
    %511 = vmatprep.subr.bf16.mxu0 %v472
    %512 = vmatpush1.bf16.msra.mxu0 %v471
    %513 = vmatprep.subr.bf16.mxu0 %v476
    %514 = vmatpush1.bf16.msra.mxu0 %v475
    %515 = vmatprep.subr.bf16.mxu0 %v480
    %516 = vmatpush1.bf16.msra.mxu0 %v479
    %517 = vmatprep.subr.bf16.mxu0 %v501
    %518 = vmatpush1.bf16.msra.mxu0 %v498
    %519 = vmatprep.subr.bf16.mxu0 0
    %520 = vmatpush1.bf16.msra.mxu0 0
    %521 = vmatprep.subr.bf16.mxu0 0
    %522 = vmatpush1.bf16.msra.mxu0 0
    %523 = vmatprep.subr.bf16.mxu0 0
    %524 = vmatpush1.bf16.msra.mxu0 0
    %525 = vmatprep.subr.bf16.mxu0 0
    %526 = vmatpush1.bf16.msra.mxu0 0
    %527 = vmatprep.subr.bf16.mxu0 0
    %528 = vmatpush1.bf16.msra.mxu0 0
    %529 = vmatprep.subr.bf16.mxu0 0
    %530 = vmatpush1.bf16.msra.mxu0 0
    %531 = vmatprep.subr.bf16.mxu0 0
    %532 = vmatpush1.bf16.msra.mxu0 0
    %533 = vmatprep.subr.bf16.mxu0 0
    %534 = vmatpush1.bf16.msra.mxu0 0
    %535 = vmatprep.subr.bf16.mxu0 0
    %536 = vmatpush1.bf16.msra.mxu0 0
    %537 = vmatprep.subr.bf16.mxu0 0
    %538 = vmatpush1.bf16.msra.mxu0 0
    %539 = vmatprep.subr.bf16.mxu0 0
    %540 = vmatpush1.bf16.msra.mxu0 0
    %541 = vmatprep.mubr.bf16.mxu0 0
    %542 = vmatmul.mubr.bf16.gmra.mrb[0].mxu0 %v494
    %v543 = vpop.f32.mrb[0].mxu0
    %v544 = vadd.f32 %v490, %v543
    %v545 = vpop.f32.mrb[0].mxu0
    %v546 = vadd.f32 %v490, %v545
    %v547 = vpop.f32.mrb[0].mxu0
    %v548 = vpop.f32.mrb[0].mxu0
    %549 = vdwg.mxu0
    %550 = vmatprep.subr.bf16.mxu0 %v470
    %551 = vmatpush1.bf16.msra.mxu0 %v469
    %552 = vmatprep.subr.bf16.mxu0 %v474
    %553 = vmatpush1.bf16.msra.mxu0 %v473
    %554 = vmatprep.subr.bf16.mxu0 %v478
    %555 = vmatpush1.bf16.msra.mxu0 %v477
    %556 = vmatprep.subr.bf16.mxu0 %v482
    %557 = vmatpush1.bf16.msra.mxu0 %v481
    %558 = vmatprep.subr.bf16.mxu0 %v507
    %559 = vmatpush1.bf16.msra.mxu0 %v504
    %560 = vmatprep.subr.bf16.mxu0 0
    %561 = vmatpush1.bf16.msra.mxu0 0
    %562 = vmatprep.subr.bf16.mxu0 0
    %563 = vmatpush1.bf16.msra.mxu0 0
    %564 = vmatprep.subr.bf16.mxu0 0
    %565 = vmatpush1.bf16.msra.mxu0 0
    %566 = vmatprep.subr.bf16.mxu0 0
    %567 = vmatpush1.bf16.msra.mxu0 0
    %568 = vmatprep.subr.bf16.mxu0 0
    %569 = vmatpush1.bf16.msra.mxu0 0
    %570 = vmatprep.subr.bf16.mxu0 0
    %571 = vmatpush1.bf16.msra.mxu0 0
    %572 = vmatprep.subr.bf16.mxu0 0
    %573 = vmatpush1.bf16.msra.mxu0 0
    %574 = vmatprep.subr.bf16.mxu0 0
    %575 = vmatpush1.bf16.msra.mxu0 0
    %576 = vmatprep.subr.bf16.mxu0 0
    %577 = vmatpush1.bf16.msra.mxu0 0
    %578 = vmatprep.subr.bf16.mxu0 0
    %579 = vmatpush1.bf16.msra.mxu0 0
    %580 = vmatprep.subr.bf16.mxu0 0
    %581 = vmatpush1.bf16.msra.mxu0 0
    %582 = vmatprep.mubr.bf16.mxu0 0
    %583 = vmatmul.mubr.bf16.gmra.mrb[0].mxu0 %v494
    %v584 = vpop.f32.mrb[0].mxu0
    %v585 = vadd.f32 %v490, %v584
    %v586 = vpop.f32.mrb[0].mxu0
    %v587 = vadd.f32 %v490, %v586
    %v588 = vpop.f32.mrb[0].mxu0
    %v589 = vpop.f32.mrb[0].mxu0
    %590 = vdwg.mxu0
    %s591 = sld [smem:[#allocation3]]
    %s592 = sld [smem:[#allocation3 + $0x1]]
    %v593 = vld [vmem:[%s4] sm:$0xf]
    %v594 = vld [vmem:[%s5] sm:$0xff]
    %595 = vrot.lane.b32.xlu0 %v544, 17
    %v596 = vpop.permute.xlu0 %595
    %597 = vrot.lane.b32.xlu0 %v546, 17
    %v598 = vpop.permute.xlu0 %597
    %599 = vrot.lane.b32.xlu0 %v585, 17
    %v600 = vpop.permute.xlu0 %599
    %601 = vrot.lane.b32.xlu0 %v587, 17
    %v602 = vpop.permute.xlu0 %601
    %v603 = vsel %vm267, %v600, %v602
    %v604 = vsel %vm267, %v598, %v600
    %v605 = vsel %vm267, %v596, %v598
    %v606 = vsel %vm267, %v602, %v596
    %v607 = vmul.f32 %v606, %v173
    %v608 = vmul.f32 %v605, %v174
    %v609 = vmul.f32 %v604, %v175
    %v610 = vmul.f32 %v603, %v176
    %611 = vst [vmem:[#allocation2] sm:$0xff] %v607
    %612 = vst [vmem:[#allocation2 + $0x8] sm:$0xff] %v608
    %613 = vst [vmem:[#allocation2 + $0x10] sm:$0xff] %v609
    %614 = vst [vmem:[#allocation2 + $0x18] sm:$0xff] %v610
    %615 = vrot.lane.b32.xlu0 %v544, 16
    %v616 = vpop.permute.xlu0 %615
    %617 = vrot.lane.b32.xlu0 %v546, 16
    %v618 = vpop.permute.xlu0 %617
    %619 = vrot.lane.b32.xlu0 %v585, 16
    %v620 = vpop.permute.xlu0 %619
    %621 = vrot.lane.b32.xlu0 %v587, 16
    %v622 = vpop.permute.xlu0 %621
    %v623 = vsel %vm288, %v620, %v622
    %v624 = vsel %vm288, %v618, %v620
    %v625 = vsel %vm288, %v616, %v618
    %v626 = vsel %vm288, %v622, %v616
    %v627 = vmul.f32 %v626, %v181
    %v628 = vmul.f32 %v625, %v182
    %v629 = vmul.f32 %v624, %v183
    %v630 = vmul.f32 %v623, %v184
    %631 = vst [vmem:[#allocation2 + $0x20] sm:$0xff] %v627
    %632 = vst [vmem:[#allocation2 + $0x28] sm:$0xff] %v628
    %633 = vst [vmem:[#allocation2 + $0x30] sm:$0xff] %v629
    %634 = vst [vmem:[#allocation2 + $0x38] sm:$0xff] %v630
    %635 = vrot.lane.b32.xlu0 %v544, 15
    %v636 = vpop.permute.xlu0 %635
    %637 = vrot.lane.b32.xlu0 %v546, 15
    %v638 = vpop.permute.xlu0 %637
    %639 = vrot.lane.b32.xlu0 %v585, 15
    %v640 = vpop.permute.xlu0 %639
    %641 = vrot.lane.b32.xlu0 %v587, 15
    %v642 = vpop.permute.xlu0 %641
    %v643 = vsel %vm309, %v640, %v642
    %v644 = vsel %vm309, %v638, %v640
    %v645 = vsel %vm309, %v636, %v638
    %v646 = vsel %vm309, %v642, %v636
    %v647 = vmul.f32 %v646, %v197
    %v648 = vmul.f32 %v645, %v198
    %v649 = vmul.f32 %v644, %v199
    %v650 = vmul.f32 %v643, %v200
    %651 = vst [vmem:[#allocation2 + $0x40] sm:$0xff] %v647
    %652 = vst [vmem:[#allocation2 + $0x48] sm:$0xff] %v648
    %653 = vst [vmem:[#allocation2 + $0x50] sm:$0xff] %v649
    %654 = vst [vmem:[#allocation2 + $0x58] sm:$0xff] %v650
    %655 = vrot.lane.b32.xlu0 %v544, 1
    %v656 = vpop.permute.xlu0 %655
    %657 = vrot.lane.b32.xlu0 %v546, 1
    %v658 = vpop.permute.xlu0 %657
    %659 = vrot.lane.b32.xlu0 %v585, 1
    %v660 = vpop.permute.xlu0 %659
    %661 = vrot.lane.b32.xlu0 %v587, 1
    %v662 = vpop.permute.xlu0 %661
    %v663 = vsel %vm330, %v660, %v662
    %v664 = vsel %vm330, %v658, %v660
    %v665 = vsel %vm330, %v656, %v658
    %v666 = vsel %vm330, %v662, %v656
    %v667 = vmul.f32 %v666, %v205
    %v668 = vmul.f32 %v665, %v206
    %v669 = vmul.f32 %v664, %v207
    %v670 = vmul.f32 %v663, %v208
    %671 = vst [vmem:[#allocation2 + $0x60] sm:$0xff] %v667
    %672 = vst [vmem:[#allocation2 + $0x68] sm:$0xff] %v668
    %673 = vst [vmem:[#allocation2 + $0x70] sm:$0xff] %v669
    %674 = vst [vmem:[#allocation2 + $0x78] sm:$0xff] %v670
    %675 = vst [vmem:[#allocation2 + $0x80] sm:$0xff] %v544
    %676 = vst [vmem:[#allocation2 + $0x88] sm:$0xff] %v546
    %677 = vst [vmem:[#allocation2 + $0x90] sm:$0xff] %v585
    %678 = vst [vmem:[#allocation2 + $0x98] sm:$0xff] %v587
    %679 = vrot.lane.b32.xlu0 %v544, 127
    %v680 = vpop.permute.xlu0 %679
    %681 = vrot.lane.b32.xlu0 %v546, 127
    %v682 = vpop.permute.xlu0 %681
    %683 = vrot.lane.b32.xlu0 %v585, 127
    %v684 = vpop.permute.xlu0 %683
    %685 = vrot.lane.b32.xlu0 %v587, 127
    %v686 = vpop.permute.xlu0 %685
    %v687 = vsel %vm355, %v684, %v686
    %v688 = vsel %vm355, %v682, %v684
    %v689 = vsel %vm355, %v680, %v682
    %v690 = vsel %vm355, %v686, %v680
    %v691 = vmul.f32 %v689, %v213
    %v692 = vmul.f32 %v688, %v214
    %v693 = vmul.f32 %v687, %v215
    %v694 = vmul.f32 %v690, %v216
    %695 = vst [vmem:[#allocation2 + $0xa0] sm:$0xff] %v691
    %696 = vst [vmem:[#allocation2 + $0xa8] sm:$0xff] %v692
    %697 = vst [vmem:[#allocation2 + $0xb0] sm:$0xff] %v693
    %698 = vst [vmem:[#allocation2 + $0xb8] sm:$0xff] %v694
    %699 = vrot.lane.b32.xlu0 %v544, 113
    %v700 = vpop.permute.xlu0 %699
    %701 = vrot.lane.b32.xlu0 %v546, 113
    %v702 = vpop.permute.xlu0 %701
    %703 = vrot.lane.b32.xlu0 %v585, 113
    %v704 = vpop.permute.xlu0 %703
    %705 = vrot.lane.b32.xlu0 %v587, 113
    %v706 = vpop.permute.xlu0 %705
    %v707 = vsel %vm376, %v704, %v706
    %v708 = vsel %vm376, %v702, %v704
    %v709 = vsel %vm376, %v700, %v702
    %v710 = vsel %vm376, %v706, %v700
    %v711 = vmul.f32 %v709, %v229
    %v712 = vmul.f32 %v708, %v230
    %v713 = vmul.f32 %v707, %v231
    %v714 = vmul.f32 %v710, %v232
    %715 = vst [vmem:[#allocation2 + $0xc0] sm:$0xff] %v711
    %716 = vst [vmem:[#allocation2 + $0xc8] sm:$0xff] %v712
    %717 = vst [vmem:[#allocation2 + $0xd0] sm:$0xff] %v713
    %718 = vst [vmem:[#allocation2 + $0xd8] sm:$0xff] %v714
    %719 = vrot.lane.b32.xlu0 %v544, 112
    %v720 = vpop.permute.xlu0 %719
    %721 = vrot.lane.b32.xlu0 %v546, 112
    %v722 = vpop.permute.xlu0 %721
    %723 = vrot.lane.b32.xlu0 %v585, 112
    %v724 = vpop.permute.xlu0 %723
    %725 = vrot.lane.b32.xlu0 %v587, 112
    %v726 = vpop.permute.xlu0 %725
    %v727 = vsel %vm397, %v724, %v726
    %v728 = vsel %vm397, %v722, %v724
    %v729 = vsel %vm397, %v720, %v722
    %v730 = vsel %vm397, %v726, %v720
    %v731 = vmul.f32 %v729, %v237
    %v732 = vmul.f32 %v728, %v238
    %v733 = vmul.f32 %v727, %v239
    %v734 = vmul.f32 %v730, %v240
    %735 = vst [vmem:[#allocation2 + $0xe0] sm:$0xff] %v731
    %736 = vst [vmem:[#allocation2 + $0xe8] sm:$0xff] %v732
    %737 = vst [vmem:[#allocation2 + $0xf0] sm:$0xff] %v733
    %738 = vst [vmem:[#allocation2 + $0xf8] sm:$0xff] %v734
    %739 = vrot.lane.b32.xlu0 %v544, 111
    %v740 = vpop.permute.xlu0 %739
    %741 = vrot.lane.b32.xlu0 %v546, 111
    %v742 = vpop.permute.xlu0 %741
    %743 = vrot.lane.b32.xlu0 %v585, 111
    %v744 = vpop.permute.xlu0 %743
    %745 = vrot.lane.b32.xlu0 %v587, 111
    %v746 = vpop.permute.xlu0 %745
    %v747 = vsel %vm418, %v744, %v746
    %v748 = vsel %vm418, %v742, %v744
    %v749 = vsel %vm418, %v740, %v742
    %v750 = vsel %vm418, %v746, %v740
    %v751 = vmul.f32 %v749, %v249
    %v752 = vmul.f32 %v748, %v250
    %v753 = vmul.f32 %v747, %v251
    %v754 = vmul.f32 %v750, %v252
    %755 = vst [vmem:[#allocation2 + $0x100] sm:$0xff] %v751
    %756 = vst [vmem:[#allocation2 + $0x108] sm:$0xff] %v752
    %757 = vst [vmem:[#allocation2 + $0x110] sm:$0xff] %v753
    %758 = vst [vmem:[#allocation2 + $0x118] sm:$0xff] %v754
    %v759 = vld [vmem:[#allocation2] sm:$0xff]
    %v760 = vld [vmem:[#allocation2 + $0x8] sm:$0xff]
    %v761 = vld [vmem:[#allocation2 + $0x10] sm:$0xff]
    %v762 = vld [vmem:[#allocation2 + $0x18] sm:$0xff]
    %v763 = vld [vmem:[#allocation2 + $0x20] sm:$0xff]
    %v764 = vld [vmem:[#allocation2 + $0x28] sm:$0xff]
    %v765 = vld [vmem:[#allocation2 + $0x30] sm:$0xff]
    %v766 = vld [vmem:[#allocation2 + $0x38] sm:$0xff]
    %v767 = vld [vmem:[#allocation2 + $0x40] sm:$0xff]
    %v768 = vld [vmem:[#allocation2 + $0x48] sm:$0xff]
    %v769 = vld [vmem:[#allocation2 + $0x50] sm:$0xff]
    %v770 = vld [vmem:[#allocation2 + $0x58] sm:$0xff]
    %v771 = vld [vmem:[#allocation2 + $0x60] sm:$0xff]
    %v772 = vld [vmem:[#allocation2 + $0x68] sm:$0xff]
    %v773 = vld [vmem:[#allocation2 + $0x70] sm:$0xff]
    %v774 = vld [vmem:[#allocation2 + $0x78] sm:$0xff]
    %v775 = vld [vmem:[#allocation2 + $0x80] sm:$0xff]
    %v776 = vld [vmem:[#allocation2 + $0x88] sm:$0xff]
    %v777 = vld [vmem:[#allocation2 + $0x90] sm:$0xff]
    %v778 = vld [vmem:[#allocation2 + $0x98] sm:$0xff]
    %v779 = vld [vmem:[#allocation2 + $0xa0] sm:$0xff]
    %v780 = vld [vmem:[#allocation2 + $0xa8] sm:$0xff]
    %v781 = vld [vmem:[#allocation2 + $0xb0] sm:$0xff]
    %v782 = vld [vmem:[#allocation2 + $0xb8] sm:$0xff]
    %v783 = vld [vmem:[#allocation2 + $0xc0] sm:$0xff]
    %v784 = vld [vmem:[#allocation2 + $0xc8] sm:$0xff]
    %v785 = vld [vmem:[#allocation2 + $0xd0] sm:$0xff]
    %v786 = vld [vmem:[#allocation2 + $0xd8] sm:$0xff]
    %v787 = vld [vmem:[#allocation2 + $0xe0] sm:$0xff]
    %v788 = vld [vmem:[#allocation2 + $0xe8] sm:$0xff]
    %v789 = vld [vmem:[#allocation2 + $0xf0] sm:$0xff]
    %v790 = vld [vmem:[#allocation2 + $0xf8] sm:$0xff]
    %v791 = vld [vmem:[#allocation2 + $0x100] sm:$0xff]
    %v792 = vld [vmem:[#allocation2 + $0x108] sm:$0xff]
    %v793 = vld [vmem:[#allocation2 + $0x110] sm:$0xff]
    %v794 = vld [vmem:[#allocation2 + $0x118] sm:$0xff]
    %v795 = vpack.c.bf16 %v763, %v759
    %v796 = vpack.c.bf16 %v764, %v760
    %v797 = vpack.c.bf16 %v765, %v761
    %v798 = vpack.c.bf16 %v766, %v762
    %v799 = vpack.c.bf16 %v771, %v767
    %v800 = vpack.c.bf16 %v772, %v768
    %v801 = vpack.c.bf16 %v773, %v769
    %v802 = vpack.c.bf16 %v774, %v770
    %v803 = vpack.c.bf16 %v779, %v775
    %v804 = vpack.c.bf16 %v780, %v776
    %v805 = vpack.c.bf16 %v781, %v777
    %v806 = vpack.c.bf16 %v782, %v778
    %v807 = vpack.c.bf16 %v787, %v783
    %v808 = vpack.c.bf16 %v788, %v784
    %v809 = vpack.c.bf16 %v789, %v785
    %v810 = vpack.c.bf16 %v790, %v786
    %v811 = vpack.c.bf16 %v791, %v791
    %v812 = vpack.c.bf16 %v792, %v792
    %v813 = vpack.c.bf16 %v793, %v793
    %v814 = vpack.c.bf16 %v794, %v794
    %816 = vset.pattern.permute.xlu0 0
    %817 = vperm.xlu0 %816, %v594
    %v818 = vpop.permute.xlu0 %817
    %v821 = vsel %vm492, %v593, 0
    %v824 = vsel %vm496, %v811, 0
    %v827 = vsel %vm496, %v812, 0
    %v830 = vsel %vm496, %v813, 0
    %v833 = vsel %vm496, %v814, 0
    %835 = vmatprep.subr.bf16.mxu0 %v796
    %836 = vmatpush1.bf16.msra.mxu0 %v795
    %837 = vmatprep.subr.bf16.mxu0 %v800
    %838 = vmatpush1.bf16.msra.mxu0 %v799
    %839 = vmatprep.subr.bf16.mxu0 %v804
    %840 = vmatpush1.bf16.msra.mxu0 %v803
    %841 = vmatprep.subr.bf16.mxu0 %v808
    %842 = vmatpush1.bf16.msra.mxu0 %v807
    %843 = vmatprep.subr.bf16.mxu0 %v827
    %844 = vmatpush1.bf16.msra.mxu0 %v824
    %845 = vmatprep.subr.bf16.mxu0 0
    %846 = vmatpush1.bf16.msra.mxu0 0
    %847 = vmatprep.subr.bf16.mxu0 0
    %848 = vmatpush1.bf16.msra.mxu0 0
    %849 = vmatprep.subr.bf16.mxu0 0
    %850 = vmatpush1.bf16.msra.mxu0 0
    %851 = vmatprep.subr.bf16.mxu0 0
    %852 = vmatpush1.bf16.msra.mxu0 0
    %853 = vmatprep.subr.bf16.mxu0 0
    %854 = vmatpush1.bf16.msra.mxu0 0
    %855 = vmatprep.subr.bf16.mxu0 0
    %856 = vmatpush1.bf16.msra.mxu0 0
    %857 = vmatprep.subr.bf16.mxu0 0
    %858 = vmatpush1.bf16.msra.mxu0 0
    %859 = vmatprep.subr.bf16.mxu0 0
    %860 = vmatpush1.bf16.msra.mxu0 0
    %861 = vmatprep.subr.bf16.mxu0 0
    %862 = vmatpush1.bf16.msra.mxu0 0
    %863 = vmatprep.subr.bf16.mxu0 0
    %864 = vmatpush1.bf16.msra.mxu0 0
    %865 = vmatprep.subr.bf16.mxu0 0
    %866 = vmatpush1.bf16.msra.mxu0 0
    %867 = vmatprep.mubr.bf16.mxu0 0
    %868 = vmatmul.mubr.bf16.gmra.mrb[0].mxu0 %v821
    %v869 = vpop.f32.mrb[0].mxu0
    %v870 = vadd.f32 %v818, %v869
    %v871 = vpop.f32.mrb[0].mxu0
    %v872 = vadd.f32 %v818, %v871
    %v873 = vpop.f32.mrb[0].mxu0
    %v874 = vpop.f32.mrb[0].mxu0
    %875 = vdwg.mxu0
    %876 = vmatprep.subr.bf16.mxu0 %v798
    %877 = vmatpush1.bf16.msra.mxu0 %v797
    %878 = vmatprep.subr.bf16.mxu0 %v802
    %879 = vmatpush1.bf16.msra.mxu0 %v801
    %880 = vmatprep.subr.bf16.mxu0 %v806
    %881 = vmatpush1.bf16.msra.mxu0 %v805
    %882 = vmatprep.subr.bf16.mxu0 %v810
    %883 = vmatpush1.bf16.msra.mxu0 %v809
    %884 = vmatprep.subr.bf16.mxu0 %v833
    %885 = vmatpush1.bf16.msra.mxu0 %v830
    %886 = vmatprep.subr.bf16.mxu0 0
    %887 = vmatpush1.bf16.msra.mxu0 0
    %888 = vmatprep.subr.bf16.mxu0 0
    %889 = vmatpush1.bf16.msra.mxu0 0
    %890 = vmatprep.subr.bf16.mxu0 0
    %891 = vmatpush1.bf16.msra.mxu0 0
    %892 = vmatprep.subr.bf16.mxu0 0
    %893 = vmatpush1.bf16.msra.mxu0 0
    %894 = vmatprep.subr.bf16.mxu0 0
    %895 = vmatpush1.bf16.msra.mxu0 0
    %896 = vmatprep.subr.bf16.mxu0 0
    %897 = vmatpush1.bf16.msra.mxu0 0
    %898 = vmatprep.subr.bf16.mxu0 0
    %899 = vmatpush1.bf16.msra.mxu0 0
    %900 = vmatprep.subr.bf16.mxu0 0
    %901 = vmatpush1.bf16.msra.mxu0 0
    %902 = vmatprep.subr.bf16.mxu0 0
    %903 = vmatpush1.bf16.msra.mxu0 0
    %904 = vmatprep.subr.bf16.mxu0 0
    %905 = vmatpush1.bf16.msra.mxu0 0
    %906 = vmatprep.subr.bf16.mxu0 0
    %907 = vmatpush1.bf16.msra.mxu0 0
    %908 = vmatprep.mubr.bf16.mxu0 0
    %909 = vmatmul.mubr.bf16.gmra.mrb[0].mxu0 %v821
    %v910 = vpop.f32.mrb[0].mxu0
    %v911 = vadd.f32 %v818, %v910
    %v912 = vpop.f32.mrb[0].mxu0
    %v913 = vadd.f32 %v818, %v912
    %v914 = vpop.f32.mrb[0].mxu0
    %v915 = vpop.f32.mrb[0].mxu0
    %916 = vdwg.mxu0
    %v917 = vmax.f32 %v870, 0.0
    %v918 = vmax.f32 %v872, 0.0
    %v919 = vmax.f32 %v911, 0.0
    %v920 = vmax.f32 %v913, 0.0
    %v921 = vld [vmem:[%s6] sm:$0xf]
    %v922 = vld [vmem:[%s7] sm:$0xff]
    %923 = vrot.lane.b32.xlu0 %v917, 17
    %v924 = vpop.permute.xlu0 %923
    %925 = vrot.lane.b32.xlu0 %v918, 17
    %v926 = vpop.permute.xlu0 %925
    %927 = vrot.lane.b32.xlu0 %v919, 17
    %v928 = vpop.permute.xlu0 %927
    %929 = vrot.lane.b32.xlu0 %v920, 17
    %v930 = vpop.permute.xlu0 %929
    %v931 = vsel %vm267, %v928, %v930
    %v932 = vsel %vm267, %v926, %v928
    %v933 = vsel %vm267, %v924, %v926
    %v934 = vsel %vm267, %v930, %v924
    %v935 = vmul.f32 %v934, %v173
    %v936 = vmul.f32 %v933, %v174
    %v937 = vmul.f32 %v932, %v175
    %v938 = vmul.f32 %v931, %v176
    %939 = vst [vmem:[#allocation2] sm:$0xff] %v935
    %940 = vst [vmem:[#allocation2 + $0x8] sm:$0xff] %v936
    %941 = vst [vmem:[#allocation2 + $0x10] sm:$0xff] %v937
    %942 = vst [vmem:[#allocation2 + $0x18] sm:$0xff] %v938
    %943 = vrot.lane.b32.xlu0 %v917, 16
    %v944 = vpop.permute.xlu0 %943
    %945 = vrot.lane.b32.xlu0 %v918, 16
    %v946 = vpop.permute.xlu0 %945
    %947 = vrot.lane.b32.xlu0 %v919, 16
    %v948 = vpop.permute.xlu0 %947
    %949 = vrot.lane.b32.xlu0 %v920, 16
    %v950 = vpop.permute.xlu0 %949
    %v951 = vsel %vm288, %v948, %v950
    %v952 = vsel %vm288, %v946, %v948
    %v953 = vsel %vm288, %v944, %v946
    %v954 = vsel %vm288, %v950, %v944
    %v955 = vmul.f32 %v954, %v181
    %v956 = vmul.f32 %v953, %v182
    %v957 = vmul.f32 %v952, %v183
    %v958 = vmul.f32 %v951, %v184
    %959 = vst [vmem:[#allocation2 + $0x20] sm:$0xff] %v955
    %960 = vst [vmem:[#allocation2 + $0x28] sm:$0xff] %v956
    %961 = vst [vmem:[#allocation2 + $0x30] sm:$0xff] %v957
    %962 = vst [vmem:[#allocation2 + $0x38] sm:$0xff] %v958
    %963 = vrot.lane.b32.xlu0 %v917, 15
    %v964 = vpop.permute.xlu0 %963
    %965 = vrot.lane.b32.xlu0 %v918, 15
    %v966 = vpop.permute.xlu0 %965
    %967 = vrot.lane.b32.xlu0 %v919, 15
    %v968 = vpop.permute.xlu0 %967
    %969 = vrot.lane.b32.xlu0 %v920, 15
    %v970 = vpop.permute.xlu0 %969
    %v971 = vsel %vm309, %v968, %v970
    %v972 = vsel %vm309, %v966, %v968
    %v973 = vsel %vm309, %v964, %v966
    %v974 = vsel %vm309, %v970, %v964
    %v975 = vmul.f32 %v974, %v197
    %v976 = vmul.f32 %v973, %v198
    %v977 = vmul.f32 %v972, %v199
    %v978 = vmul.f32 %v971, %v200
    %979 = vst [vmem:[#allocation2 + $0x40] sm:$0xff] %v975
    %980 = vst [vmem:[#allocation2 + $0x48] sm:$0xff] %v976
    %981 = vst [vmem:[#allocation2 + $0x50] sm:$0xff] %v977
    %982 = vst [vmem:[#allocation2 + $0x58] sm:$0xff] %v978
    %983 = vrot.lane.b32.xlu0 %v917, 1
    %v984 = vpop.permute.xlu0 %983
    %985 = vrot.lane.b32.xlu0 %v918, 1
    %v986 = vpop.permute.xlu0 %985
    %987 = vrot.lane.b32.xlu0 %v919, 1
    %v988 = vpop.permute.xlu0 %987
    %989 = vrot.lane.b32.xlu0 %v920, 1
    %v990 = vpop.permute.xlu0 %989
    %v991 = vsel %vm330, %v988, %v990
    %v992 = vsel %vm330, %v986, %v988
    %v993 = vsel %vm330, %v984, %v986
    %v994 = vsel %vm330, %v990, %v984
    %v995 = vmul.f32 %v994, %v205
    %v996 = vmul.f32 %v993, %v206
    %v997 = vmul.f32 %v992, %v207
    %v998 = vmul.f32 %v991, %v208
    %999 = vst [vmem:[#allocation2 + $0x60] sm:$0xff] %v995
    %1000 = vst [vmem:[#allocation2 + $0x68] sm:$0xff] %v996
    %1001 = vst [vmem:[#allocation2 + $0x70] sm:$0xff] %v997
    %1002 = vst [vmem:[#allocation2 + $0x78] sm:$0xff] %v998
    %1003 = vst [vmem:[#allocation2 + $0x80] sm:$0xff] %v917
    %1004 = vst [vmem:[#allocation2 + $0x88] sm:$0xff] %v918
    %1005 = vst [vmem:[#allocation2 + $0x90] sm:$0xff] %v919
    %1006 = vst [vmem:[#allocation2 + $0x98] sm:$0xff] %v920
    %1007 = vrot.lane.b32.xlu0 %v917, 127
    %v1008 = vpop.permute.xlu0 %1007
    %1009 = vrot.lane.b32.xlu0 %v918, 127
    %v1010 = vpop.permute.xlu0 %1009
    %1011 = vrot.lane.b32.xlu0 %v919, 127
    %v1012 = vpop.permute.xlu0 %1011
    %1013 = vrot.lane.b32.xlu0 %v920, 127
    %v1014 = vpop.permute.xlu0 %1013
    %v1015 = vsel %vm355, %v1012, %v1014
    %v1016 = vsel %vm355, %v1010, %v1012
    %v1017 = vsel %vm355, %v1008, %v1010
    %v1018 = vsel %vm355, %v1014, %v1008
    %v1019 = vmul.f32 %v1017, %v213
    %v1020 = vmul.f32 %v1016, %v214
    %v1021 = vmul.f32 %v1015, %v215
    %v1022 = vmul.f32 %v1018, %v216
    %1023 = vst [vmem:[#allocation2 + $0xa0] sm:$0xff] %v1019
    %1024 = vst [vmem:[#allocation2 + $0xa8] sm:$0xff] %v1020
    %1025 = vst [vmem:[#allocation2 + $0xb0] sm:$0xff] %v1021
    %1026 = vst [vmem:[#allocation2 + $0xb8] sm:$0xff] %v1022
    %1027 = vrot.lane.b32.xlu0 %v917, 113
    %v1028 = vpop.permute.xlu0 %1027
    %1029 = vrot.lane.b32.xlu0 %v918, 113
    %v1030 = vpop.permute.xlu0 %1029
    %1031 = vrot.lane.b32.xlu0 %v919, 113
    %v1032 = vpop.permute.xlu0 %1031
    %1033 = vrot.lane.b32.xlu0 %v920, 113
    %v1034 = vpop.permute.xlu0 %1033
    %v1035 = vsel %vm376, %v1032, %v1034
    %v1036 = vsel %vm376, %v1030, %v1032
    %v1037 = vsel %vm376, %v1028, %v1030
    %v1038 = vsel %vm376, %v1034, %v1028
    %v1039 = vmul.f32 %v1037, %v229
    %v1040 = vmul.f32 %v1036, %v230
    %v1041 = vmul.f32 %v1035, %v231
    %v1042 = vmul.f32 %v1038, %v232
    %1043 = vst [vmem:[#allocation2 + $0xc0] sm:$0xff] %v1039
    %1044 = vst [vmem:[#allocation2 + $0xc8] sm:$0xff] %v1040
    %1045 = vst [vmem:[#allocation2 + $0xd0] sm:$0xff] %v1041
    %1046 = vst [vmem:[#allocation2 + $0xd8] sm:$0xff] %v1042
    %1047 = vrot.lane.b32.xlu0 %v917, 112
    %v1048 = vpop.permute.xlu0 %1047
    %1049 = vrot.lane.b32.xlu0 %v918, 112
    %v1050 = vpop.permute.xlu0 %1049
    %1051 = vrot.lane.b32.xlu0 %v919, 112
    %v1052 = vpop.permute.xlu0 %1051
    %1053 = vrot.lane.b32.xlu0 %v920, 112
    %v1054 = vpop.permute.xlu0 %1053
    %v1055 = vsel %vm397, %v1052, %v1054
    %v1056 = vsel %vm397, %v1050, %v1052
    %v1057 = vsel %vm397, %v1048, %v1050
    %v1058 = vsel %vm397, %v1054, %v1048
    %v1059 = vmul.f32 %v1057, %v237
    %v1060 = vmul.f32 %v1056, %v238
    %v1061 = vmul.f32 %v1055, %v239
    %v1062 = vmul.f32 %v1058, %v240
    %1063 = vst [vmem:[#allocation2 + $0xe0] sm:$0xff] %v1059
    %1064 = vst [vmem:[#allocation2 + $0xe8] sm:$0xff] %v1060
    %1065 = vst [vmem:[#allocation2 + $0xf0] sm:$0xff] %v1061
    %1066 = vst [vmem:[#allocation2 + $0xf8] sm:$0xff] %v1062
    %1067 = vrot.lane.b32.xlu0 %v917, 111
    %v1068 = vpop.permute.xlu0 %1067
    %1069 = vrot.lane.b32.xlu0 %v918, 111
    %v1070 = vpop.permute.xlu0 %1069
    %1071 = vrot.lane.b32.xlu0 %v919, 111
    %v1072 = vpop.permute.xlu0 %1071
    %1073 = vrot.lane.b32.xlu0 %v920, 111
    %v1074 = vpop.permute.xlu0 %1073
    %v1075 = vsel %vm418, %v1072, %v1074
    %v1076 = vsel %vm418, %v1070, %v1072
    %v1077 = vsel %vm418, %v1068, %v1070
    %v1078 = vsel %vm418, %v1074, %v1068
    %v1079 = vmul.f32 %v1077, %v249
    %v1080 = vmul.f32 %v1076, %v250
    %v1081 = vmul.f32 %v1075, %v251
    %v1082 = vmul.f32 %v1078, %v252
    %1083 = vst [vmem:[#allocation2 + $0x100] sm:$0xff] %v1079
    %1084 = vst [vmem:[#allocation2 + $0x108] sm:$0xff] %v1080
    %1085 = vst [vmem:[#allocation2 + $0x110] sm:$0xff] %v1081
    %1086 = vst [vmem:[#allocation2 + $0x118] sm:$0xff] %v1082
    %v1087 = vld [vmem:[#allocation2] sm:$0xff]
    %v1088 = vld [vmem:[#allocation2 + $0x8] sm:$0xff]
    %v1089 = vld [vmem:[#allocation2 + $0x10] sm:$0xff]
    %v1090 = vld [vmem:[#allocation2 + $0x18] sm:$0xff]
    %v1091 = vld [vmem:[#allocation2 + $0x20] sm:$0xff]
    %v1092 = vld [vmem:[#allocation2 + $0x28] sm:$0xff]
    %v1093 = vld [vmem:[#allocation2 + $0x30] sm:$0xff]
    %v1094 = vld [vmem:[#allocation2 + $0x38] sm:$0xff]
    %v1095 = vld [vmem:[#allocation2 + $0x40] sm:$0xff]
    %v1096 = vld [vmem:[#allocation2 + $0x48] sm:$0xff]
    %v1097 = vld [vmem:[#allocation2 + $0x50] sm:$0xff]
    %v1098 = vld [vmem:[#allocation2 + $0x58] sm:$0xff]
    %v1099 = vld [vmem:[#allocation2 + $0x60] sm:$0xff]
    %v1100 = vld [vmem:[#allocation2 + $0x68] sm:$0xff]
    %v1101 = vld [vmem:[#allocation2 + $0x70] sm:$0xff]
    %v1102 = vld [vmem:[#allocation2 + $0x78] sm:$0xff]
    %v1103 = vld [vmem:[#allocation2 + $0x80] sm:$0xff]
    %v1104 = vld [vmem:[#allocation2 + $0x88] sm:$0xff]
    %v1105 = vld [vmem:[#allocation2 + $0x90] sm:$0xff]
    %v1106 = vld [vmem:[#allocation2 + $0x98] sm:$0xff]
    %v1107 = vld [vmem:[#allocation2 + $0xa0] sm:$0xff]
    %v1108 = vld [vmem:[#allocation2 + $0xa8] sm:$0xff]
    %v1109 = vld [vmem:[#allocation2 + $0xb0] sm:$0xff]
    %v1110 = vld [vmem:[#allocation2 + $0xb8] sm:$0xff]
    %v1111 = vld [vmem:[#allocation2 + $0xc0] sm:$0xff]
    %v1112 = vld [vmem:[#allocation2 + $0xc8] sm:$0xff]
    %v1113 = vld [vmem:[#allocation2 + $0xd0] sm:$0xff]
    %v1114 = vld [vmem:[#allocation2 + $0xd8] sm:$0xff]
    %v1115 = vld [vmem:[#allocation2 + $0xe0] sm:$0xff]
    %v1116 = vld [vmem:[#allocation2 + $0xe8] sm:$0xff]
    %v1117 = vld [vmem:[#allocation2 + $0xf0] sm:$0xff]
    %v1118 = vld [vmem:[#allocation2 + $0xf8] sm:$0xff]
    %v1119 = vld [vmem:[#allocation2 + $0x100] sm:$0xff]
    %v1120 = vld [vmem:[#allocation2 + $0x108] sm:$0xff]
    %v1121 = vld [vmem:[#allocation2 + $0x110] sm:$0xff]
    %v1122 = vld [vmem:[#allocation2 + $0x118] sm:$0xff]
    %v1123 = vpack.c.bf16 %v1091, %v1087
    %v1124 = vpack.c.bf16 %v1092, %v1088
    %v1125 = vpack.c.bf16 %v1093, %v1089
    %v1126 = vpack.c.bf16 %v1094, %v1090
    %v1127 = vpack.c.bf16 %v1099, %v1095
    %v1128 = vpack.c.bf16 %v1100, %v1096
    %v1129 = vpack.c.bf16 %v1101, %v1097
    %v1130 = vpack.c.bf16 %v1102, %v1098
    %v1131 = vpack.c.bf16 %v1107, %v1103
    %v1132 = vpack.c.bf16 %v1108, %v1104
    %v1133 = vpack.c.bf16 %v1109, %v1105
    %v1134 = vpack.c.bf16 %v1110, %v1106
    %v1135 = vpack.c.bf16 %v1115, %v1111
    %v1136 = vpack.c.bf16 %v1116, %v1112
    %v1137 = vpack.c.bf16 %v1117, %v1113
    %v1138 = vpack.c.bf16 %v1118, %v1114
    %v1139 = vpack.c.bf16 %v1119, %v1119
    %v1140 = vpack.c.bf16 %v1120, %v1120
    %v1141 = vpack.c.bf16 %v1121, %v1121
    %v1142 = vpack.c.bf16 %v1122, %v1122
    %1144 = vset.pattern.permute.xlu0 0
    %1145 = vperm.xlu0 %1144, %v922
    %v1146 = vpop.permute.xlu0 %1145
    %v1149 = vsel %vm492, %v921, 0
    %v1152 = vsel %vm496, %v1139, 0
    %v1155 = vsel %vm496, %v1140, 0
    %v1158 = vsel %vm496, %v1141, 0
    %v1161 = vsel %vm496, %v1142, 0
    %1163 = vmatprep.subr.bf16.mxu0 %v1124
    %1164 = vmatpush1.bf16.msra.mxu0 %v1123
    %1165 = vmatprep.subr.bf16.mxu0 %v1128
    %1166 = vmatpush1.bf16.msra.mxu0 %v1127
    %1167 = vmatprep.subr.bf16.mxu0 %v1132
    %1168 = vmatpush1.bf16.msra.mxu0 %v1131
    %1169 = vmatprep.subr.bf16.mxu0 %v1136
    %1170 = vmatpush1.bf16.msra.mxu0 %v1135
    %1171 = vmatprep.subr.bf16.mxu0 %v1155
    %1172 = vmatpush1.bf16.msra.mxu0 %v1152
    %1173 = vmatprep.subr.bf16.mxu0 0
    %1174 = vmatpush1.bf16.msra.mxu0 0
    %1175 = vmatprep.subr.bf16.mxu0 0
    %1176 = vmatpush1.bf16.msra.mxu0 0
    %1177 = vmatprep.subr.bf16.mxu0 0
    %1178 = vmatpush1.bf16.msra.mxu0 0
    %1179 = vmatprep.subr.bf16.mxu0 0
    %1180 = vmatpush1.bf16.msra.mxu0 0
    %1181 = vmatprep.subr.bf16.mxu0 0
    %1182 = vmatpush1.bf16.msra.mxu0 0
    %1183 = vmatprep.subr.bf16.mxu0 0
    %1184 = vmatpush1.bf16.msra.mxu0 0
    %1185 = vmatprep.subr.bf16.mxu0 0
    %1186 = vmatpush1.bf16.msra.mxu0 0
    %1187 = vmatprep.subr.bf16.mxu0 0
    %1188 = vmatpush1.bf16.msra.mxu0 0
    %1189 = vmatprep.subr.bf16.mxu0 0
    %1190 = vmatpush1.bf16.msra.mxu0 0
    %1191 = vmatprep.subr.bf16.mxu0 0
    %1192 = vmatpush1.bf16.msra.mxu0 0
    %1193 = vmatprep.subr.bf16.mxu0 0
    %1194 = vmatpush1.bf16.msra.mxu0 0
    %1195 = vmatprep.mubr.bf16.mxu0 0
    %1196 = vmatmul.mubr.bf16.gmra.mrb[0].mxu0 %v1149
    %v1197 = vpop.f32.mrb[0].mxu0
    %v1198 = vadd.f32 %v1146, %v1197
    %v1199 = vpop.f32.mrb[0].mxu0
    %v1200 = vadd.f32 %v1146, %v1199
    %v1201 = vpop.f32.mrb[0].mxu0
    %v1202 = vpop.f32.mrb[0].mxu0
    %1203 = vdwg.mxu0
    %1204 = vmatprep.subr.bf16.mxu0 %v1126
    %1205 = vmatpush1.bf16.msra.mxu0 %v1125
    %1206 = vmatprep.subr.bf16.mxu0 %v1130
    %1207 = vmatpush1.bf16.msra.mxu0 %v1129
    %1208 = vmatprep.subr.bf16.mxu0 %v1134
    %1209 = vmatpush1.bf16.msra.mxu0 %v1133
    %1210 = vmatprep.subr.bf16.mxu0 %v1138
    %1211 = vmatpush1.bf16.msra.mxu0 %v1137
    %1212 = vmatprep.subr.bf16.mxu0 %v1161
    %1213 = vmatpush1.bf16.msra.mxu0 %v1158
    %1214 = vmatprep.subr.bf16.mxu0 0
    %1215 = vmatpush1.bf16.msra.mxu0 0
    %1216 = vmatprep.subr.bf16.mxu0 0
    %1217 = vmatpush1.bf16.msra.mxu0 0
    %1218 = vmatprep.subr.bf16.mxu0 0
    %1219 = vmatpush1.bf16.msra.mxu0 0
    %1220 = vmatprep.subr.bf16.mxu0 0
    %1221 = vmatpush1.bf16.msra.mxu0 0
    %1222 = vmatprep.subr.bf16.mxu0 0
    %1223 = vmatpush1.bf16.msra.mxu0 0
    %1224 = vmatprep.subr.bf16.mxu0 0
    %1225 = vmatpush1.bf16.msra.mxu0 0
    %1226 = vmatprep.subr.bf16.mxu0 0
    %1227 = vmatpush1.bf16.msra.mxu0 0
    %1228 = vmatprep.subr.bf16.mxu0 0
    %1229 = vmatpush1.bf16.msra.mxu0 0
    %1230 = vmatprep.subr.bf16.mxu0 0
    %1231 = vmatpush1.bf16.msra.mxu0 0
    %1232 = vmatprep.subr.bf16.mxu0 0
    %1233 = vmatpush1.bf16.msra.mxu0 0
    %1234 = vmatprep.subr.bf16.mxu0 0
    %1235 = vmatpush1.bf16.msra.mxu0 0
    %1236 = vmatprep.mubr.bf16.mxu0 0
    %1237 = vmatmul.mubr.bf16.gmra.mrb[0].mxu0 %v1149
    %v1238 = vpop.f32.mrb[0].mxu0
    %v1239 = vadd.f32 %v1146, %v1238
    %v1240 = vpop.f32.mrb[0].mxu0
    %v1241 = vadd.f32 %v1146, %v1240
    %v1242 = vpop.f32.mrb[0].mxu0
    %v1243 = vpop.f32.mrb[0].mxu0
    %1244 = vdwg.mxu0
    %v1245 = vstv %s591
    %v1246 = vmul.f32 %v1245, %v1198
    %v1247 = vmul.f32 %v1245, %v1200
    %v1248 = vmul.f32 %v1245, %v1239
    %v1249 = vmul.f32 %v1245, %v1241
    %v1250 = vsub.f32 %v544, %v544
    %v1251 = vsub.f32 %v546, %v546
    %v1252 = vsub.f32 %v585, %v585
    %v1253 = vsub.f32 %v587, %v587
    %v1254 = vstv %s592
    %v1255 = vmul.f32 %v1254, %v1250
    %v1256 = vmul.f32 %v1254, %v1251
    %v1257 = vmul.f32 %v1254, %v1252
    %v1258 = vmul.f32 %v1254, %v1253
    %v1259 = vadd.f32 %v1246, %v1255
    %v1260 = vadd.f32 %v1247, %v1256
    %v1261 = vadd.f32 %v1248, %v1257
    %v1262 = vadd.f32 %v1249, %v1258
    %v1263 = vadd.f32 %v1259, %v544
    %v1264 = vadd.f32 %v1260, %v546
    %v1265 = vadd.f32 %v1261, %v585
    %v1266 = vadd.f32 %v1262, %v587
    %s1267 = sld [smem:[#allocation3 + $0x2]]
    %s1268 = sld [smem:[#allocation3 + $0x3]]
    %s1269 = scalar_lea.vmem %s4, 4
    %v1270 = vld [vmem:[%s1269] sm:$0xf]
    %s1271 = scalar_lea.vmem %s5, 8
    %v1272 = vld [vmem:[%s1271] sm:$0xff]
    %1273 = vrot.lane.b32.xlu0 %v1263, 17
    %v1274 = vpop.permute.xlu0 %1273
    %1275 = vrot.lane.b32.xlu0 %v1264, 17
    %v1276 = vpop.permute.xlu0 %1275
    %1277 = vrot.lane.b32.xlu0 %v1265, 17
    %v1278 = vpop.permute.xlu0 %1277
    %1279 = vrot.lane.b32.xlu0 %v1266, 17
    %v1280 = vpop.permute.xlu0 %1279
    %v1281 = vsel %vm267, %v1278, %v1280
    %v1282 = vsel %vm267, %v1276, %v1278
    %v1283 = vsel %vm267, %v1274, %v1276
    %v1284 = vsel %vm267, %v1280, %v1274
    %v1285 = vmul.f32 %v1284, %v173
    %v1286 = vmul.f32 %v1283, %v174
    %v1287 = vmul.f32 %v1282, %v175
    %v1288 = vmul.f32 %v1281, %v176
    %1289 = vst [vmem:[#allocation2] sm:$0xff] %v1285
    %1290 = vst [vmem:[#allocation2 + $0x8] sm:$0xff] %v1286
    %1291 = vst [vmem:[#allocation2 + $0x10] sm:$0xff] %v1287
    %1292 = vst [vmem:[#allocation2 + $0x18] sm:$0xff] %v1288
    %1293 = vrot.lane.b32.xlu0 %v1263, 16
    %v1294 = vpop.permute.xlu0 %1293
    %1295 = vrot.lane.b32.xlu0 %v1264, 16
    %v1296 = vpop.permute.xlu0 %1295
    %1297 = vrot.lane.b32.xlu0 %v1265, 16
    %v1298 = vpop.permute.xlu0 %1297
    %1299 = vrot.lane.b32.xlu0 %v1266, 16
    %v1300 = vpop.permute.xlu0 %1299
    %v1301 = vsel %vm288, %v1298, %v1300
    %v1302 = vsel %vm288, %v1296, %v1298
    %v1303 = vsel %vm288, %v1294, %v1296
    %v1304 = vsel %vm288, %v1300, %v1294
    %v1305 = vmul.f32 %v1304, %v181
    %v1306 = vmul.f32 %v1303, %v182
    %v1307 = vmul.f32 %v1302, %v183
    %v1308 = vmul.f32 %v1301, %v184
    %1309 = vst [vmem:[#allocation2 + $0x20] sm:$0xff] %v1305
    %1310 = vst [vmem:[#allocation2 + $0x28] sm:$0xff] %v1306
    %1311 = vst [vmem:[#allocation2 + $0x30] sm:$0xff] %v1307
    %1312 = vst [vmem:[#allocation2 + $0x38] sm:$0xff] %v1308
    %1313 = vrot.lane.b32.xlu0 %v1263, 15
    %v1314 = vpop.permute.xlu0 %1313
    %1315 = vrot.lane.b32.xlu0 %v1264, 15
    %v1316 = vpop.permute.xlu0 %1315
    %1317 = vrot.lane.b32.xlu0 %v1265, 15
    %v1318 = vpop.permute.xlu0 %1317
    %1319 = vrot.lane.b32.xlu0 %v1266, 15
    %v1320 = vpop.permute.xlu0 %1319
    %v1321 = vsel %vm309, %v1318, %v1320
    %v1322 = vsel %vm309, %v1316, %v1318
    %v1323 = vsel %vm309, %v1314, %v1316
    %v1324 = vsel %vm309, %v1320, %v1314
    %v1325 = vmul.f32 %v1324, %v197
    %v1326 = vmul.f32 %v1323, %v198
    %v1327 = vmul.f32 %v1322, %v199
    %v1328 = vmul.f32 %v1321, %v200
    %1329 = vst [vmem:[#allocation2 + $0x40] sm:$0xff] %v1325
    %1330 = vst [vmem:[#allocation2 + $0x48] sm:$0xff] %v1326
    %1331 = vst [vmem:[#allocation2 + $0x50] sm:$0xff] %v1327
    %1332 = vst [vmem:[#allocation2 + $0x58] sm:$0xff] %v1328
    %1333 = vrot.lane.b32.xlu0 %v1263, 1
    %v1334 = vpop.permute.xlu0 %1333
    %1335 = vrot.lane.b32.xlu0 %v1264, 1
    %v1336 = vpop.permute.xlu0 %1335
    %1337 = vrot.lane.b32.xlu0 %v1265, 1
    %v1338 = vpop.permute.xlu0 %1337
    %1339 = vrot.lane.b32.xlu0 %v1266, 1
    %v1340 = vpop.permute.xlu0 %1339
    %v1341 = vsel %vm330, %v1338, %v1340
    %v1342 = vsel %vm330, %v1336, %v1338
    %v1343 = vsel %vm330, %v1334, %v1336
    %v1344 = vsel %vm330, %v1340, %v1334
    %v1345 = vmul.f32 %v1344, %v205
    %v1346 = vmul.f32 %v1343, %v206
    %v1347 = vmul.f32 %v1342, %v207
    %v1348 = vmul.f32 %v1341, %v208
    %1349 = vst [vmem:[#allocation2 + $0x60] sm:$0xff] %v1345
    %1350 = vst [vmem:[#allocation2 + $0x68] sm:$0xff] %v1346
    %1351 = vst [vmem:[#allocation2 + $0x70] sm:$0xff] %v1347
    %1352 = vst [vmem:[#allocation2 + $0x78] sm:$0xff] %v1348
    %1353 = vst [vmem:[#allocation2 + $0x80] sm:$0xff] %v1263
    %1354 = vst [vmem:[#allocation2 + $0x88] sm:$0xff] %v1264
    %1355 = vst [vmem:[#allocation2 + $0x90] sm:$0xff] %v1265
    %1356 = vst [vmem:[#allocation2 + $0x98] sm:$0xff] %v1266
    %1357 = vrot.lane.b32.xlu0 %v1263, 127
    %v1358 = vpop.permute.xlu0 %1357
    %1359 = vrot.lane.b32.xlu0 %v1264, 127
    %v1360 = vpop.permute.xlu0 %1359
    %1361 = vrot.lane.b32.xlu0 %v1265, 127
    %v1362 = vpop.permute.xlu0 %1361
    %1363 = vrot.lane.b32.xlu0 %v1266, 127
    %v1364 = vpop.permute.xlu0 %1363
    %v1365 = vsel %vm355, %v1362, %v1364
    %v1366 = vsel %vm355, %v1360, %v1362
    %v1367 = vsel %vm355, %v1358, %v1360
    %v1368 = vsel %vm355, %v1364, %v1358
    %v1369 = vmul.f32 %v1367, %v213
    %v1370 = vmul.f32 %v1366, %v214
    %v1371 = vmul.f32 %v1365, %v215
    %v1372 = vmul.f32 %v1368, %v216
    %1373 = vst [vmem:[#allocation2 + $0xa0] sm:$0xff] %v1369
    %1374 = vst [vmem:[#allocation2 + $0xa8] sm:$0xff] %v1370
    %1375 = vst [vmem:[#allocation2 + $0xb0] sm:$0xff] %v1371
    %1376 = vst [vmem:[#allocation2 + $0xb8] sm:$0xff] %v1372
    %1377 = vrot.lane.b32.xlu0 %v1263, 113
    %v1378 = vpop.permute.xlu0 %1377
    %1379 = vrot.lane.b32.xlu0 %v1264, 113
    %v1380 = vpop.permute.xlu0 %1379
    %1381 = vrot.lane.b32.xlu0 %v1265, 113
    %v1382 = vpop.permute.xlu0 %1381
    %1383 = vrot.lane.b32.xlu0 %v1266, 113
    %v1384 = vpop.permute.xlu0 %1383
    %v1385 = vsel %vm376, %v1382, %v1384
    %v1386 = vsel %vm376, %v1380, %v1382
    %v1387 = vsel %vm376, %v1378, %v1380
    %v1388 = vsel %vm376, %v1384, %v1378
    %v1389 = vmul.f32 %v1387, %v229
    %v1390 = vmul.f32 %v1386, %v230
    %v1391 = vmul.f32 %v1385, %v231
    %v1392 = vmul.f32 %v1388, %v232
    %1393 = vst [vmem:[#allocation2 + $0xc0] sm:$0xff] %v1389
    %1394 = vst [vmem:[#allocation2 + $0xc8] sm:$0xff] %v1390
    %1395 = vst [vmem:[#allocation2 + $0xd0] sm:$0xff] %v1391
    %1396 = vst [vmem:[#allocation2 + $0xd8] sm:$0xff] %v1392
    %1397 = vrot.lane.b32.xlu0 %v1263, 112
    %v1398 = vpop.permute.xlu0 %1397
    %1399 = vrot.lane.b32.xlu0 %v1264, 112
    %v1400 = vpop.permute.xlu0 %1399
    %1401 = vrot.lane.b32.xlu0 %v1265, 112
    %v1402 = vpop.permute.xlu0 %1401
    %1403 = vrot.lane.b32.xlu0 %v1266, 112
    %v1404 = vpop.permute.xlu0 %1403
    %v1405 = vsel %vm397, %v1402, %v1404
    %v1406 = vsel %vm397, %v1400, %v1402
    %v1407 = vsel %vm397, %v1398, %v1400
    %v1408 = vsel %vm397, %v1404, %v1398
    %v1409 = vmul.f32 %v1407, %v237
    %v1410 = vmul.f32 %v1406, %v238
    %v1411 = vmul.f32 %v1405, %v239
    %v1412 = vmul.f32 %v1408, %v240
    %1413 = vst [vmem:[#allocation2 + $0xe0] sm:$0xff] %v1409
    %1414 = vst [vmem:[#allocation2 + $0xe8] sm:$0xff] %v1410
    %1415 = vst [vmem:[#allocation2 + $0xf0] sm:$0xff] %v1411
    %1416 = vst [vmem:[#allocation2 + $0xf8] sm:$0xff] %v1412
    %1417 = vrot.lane.b32.xlu0 %v1263, 111
    %v1418 = vpop.permute.xlu0 %1417
    %1419 = vrot.lane.b32.xlu0 %v1264, 111
    %v1420 = vpop.permute.xlu0 %1419
    %1421 = vrot.lane.b32.xlu0 %v1265, 111
    %v1422 = vpop.permute.xlu0 %1421
    %1423 = vrot.lane.b32.xlu0 %v1266, 111
    %v1424 = vpop.permute.xlu0 %1423
    %v1425 = vsel %vm418, %v1422, %v1424
    %v1426 = vsel %vm418, %v1420, %v1422
    %v1427 = vsel %vm418, %v1418, %v1420
    %v1428 = vsel %vm418, %v1424, %v1418
    %v1429 = vmul.f32 %v1427, %v249
    %v1430 = vmul.f32 %v1426, %v250
    %v1431 = vmul.f32 %v1425, %v251
    %v1432 = vmul.f32 %v1428, %v252
    %1433 = vst [vmem:[#allocation2 + $0x100] sm:$0xff] %v1429
    %1434 = vst [vmem:[#allocation2 + $0x108] sm:$0xff] %v1430
    %1435 = vst [vmem:[#allocation2 + $0x110] sm:$0xff] %v1431
    %1436 = vst [vmem:[#allocation2 + $0x118] sm:$0xff] %v1432
    %v1437 = vld [vmem:[#allocation2] sm:$0xff]
    %v1438 = vld [vmem:[#allocation2 + $0x8] sm:$0xff]
    %v1439 = vld [vmem:[#allocation2 + $0x10] sm:$0xff]
    %v1440 = vld [vmem:[#allocation2 + $0x18] sm:$0xff]
    %v1441 = vld [vmem:[#allocation2 + $0x20] sm:$0xff]
    %v1442 = vld [vmem:[#allocation2 + $0x28] sm:$0xff]
    %v1443 = vld [vmem:[#allocation2 + $0x30] sm:$0xff]
    %v1444 = vld [vmem:[#allocation2 + $0x38] sm:$0xff]
    %v1445 = vld [vmem:[#allocation2 + $0x40] sm:$0xff]
    %v1446 = vld [vmem:[#allocation2 + $0x48] sm:$0xff]
    %v1447 = vld [vmem:[#allocation2 + $0x50] sm:$0xff]
    %v1448 = vld [vmem:[#allocation2 + $0x58] sm:$0xff]
    %v1449 = vld [vmem:[#allocation2 + $0x60] sm:$0xff]
    %v1450 = vld [vmem:[#allocation2 + $0x68] sm:$0xff]
    %v1451 = vld [vmem:[#allocation2 + $0x70] sm:$0xff]
    %v1452 = vld [vmem:[#allocation2 + $0x78] sm:$0xff]
    %v1453 = vld [vmem:[#allocation2 + $0x80] sm:$0xff]
    %v1454 = vld [vmem:[#allocation2 + $0x88] sm:$0xff]
    %v1455 = vld [vmem:[#allocation2 + $0x90] sm:$0xff]
    %v1456 = vld [vmem:[#allocation2 + $0x98] sm:$0xff]
    %v1457 = vld [vmem:[#allocation2 + $0xa0] sm:$0xff]
    %v1458 = vld [vmem:[#allocation2 + $0xa8] sm:$0xff]
    %v1459 = vld [vmem:[#allocation2 + $0xb0] sm:$0xff]
    %v1460 = vld [vmem:[#allocation2 + $0xb8] sm:$0xff]
    %v1461 = vld [vmem:[#allocation2 + $0xc0] sm:$0xff]
    %v1462 = vld [vmem:[#allocation2 + $0xc8] sm:$0xff]
    %v1463 = vld [vmem:[#allocation2 + $0xd0] sm:$0xff]
    %v1464 = vld [vmem:[#allocation2 + $0xd8] sm:$0xff]
    %v1465 = vld [vmem:[#allocation2 + $0xe0] sm:$0xff]
    %v1466 = vld [vmem:[#allocation2 + $0xe8] sm:$0xff]
    %v1467 = vld [vmem:[#allocation2 + $0xf0] sm:$0xff]
    %v1468 = vld [vmem:[#allocation2 + $0xf8] sm:$0xff]
    %v1469 = vld [vmem:[#allocation2 + $0x100] sm:$0xff]
    %v1470 = vld [vmem:[#allocation2 + $0x108] sm:$0xff]
    %v1471 = vld [vmem:[#allocation2 + $0x110] sm:$0xff]
    %v1472 = vld [vmem:[#allocation2 + $0x118] sm:$0xff]
    %v1473 = vpack.c.bf16 %v1441, %v1437
    %v1474 = vpack.c.bf16 %v1442, %v1438
    %v1475 = vpack.c.bf16 %v1443, %v1439
    %v1476 = vpack.c.bf16 %v1444, %v1440
    %v1477 = vpack.c.bf16 %v1449, %v1445
    %v1478 = vpack.c.bf16 %v1450, %v1446
    %v1479 = vpack.c.bf16 %v1451, %v1447
    %v1480 = vpack.c.bf16 %v1452, %v1448
    %v1481 = vpack.c.bf16 %v1457, %v1453
    %v1482 = vpack.c.bf16 %v1458, %v1454
    %v1483 = vpack.c.bf16 %v1459, %v1455
    %v1484 = vpack.c.bf16 %v1460, %v1456
    %v1485 = vpack.c.bf16 %v1465, %v1461
    %v1486 = vpack.c.bf16 %v1466, %v1462
    %v1487 = vpack.c.bf16 %v1467, %v1463
    %v1488 = vpack.c.bf16 %v1468, %v1464
    %v1489 = vpack.c.bf16 %v1469, %v1469
    %v1490 = vpack.c.bf16 %v1470, %v1470
    %v1491 = vpack.c.bf16 %v1471, %v1471
    %v1492 = vpack.c.bf16 %v1472, %v1472
    %1494 = vset.pattern.permute.xlu0 0
    %1495 = vperm.xlu0 %1494, %v1272
    %v1496 = vpop.permute.xlu0 %1495
    %v1499 = vsel %vm492, %v1270, 0
    %v1502 = vsel %vm496, %v1489, 0
    %v1505 = vsel %vm496, %v1490, 0
    %v1508 = vsel %vm496, %v1491, 0
    %v1511 = vsel %vm496, %v1492, 0
    %1513 = vmatprep.subr.bf16.mxu0 %v1474
    %1514 = vmatpush1.bf16.msra.mxu0 %v1473
    %1515 = vmatprep.subr.bf16.mxu0 %v1478
    %1516 = vmatpush1.bf16.msra.mxu0 %v1477
    %1517 = vmatprep.subr.bf16.mxu0 %v1482
    %1518 = vmatpush1.bf16.msra.mxu0 %v1481
    %1519 = vmatprep.subr.bf16.mxu0 %v1486
    %1520 = vmatpush1.bf16.msra.mxu0 %v1485
    %1521 = vmatprep.subr.bf16.mxu0 %v1505
    %1522 = vmatpush1.bf16.msra.mxu0 %v1502
    %1523 = vmatprep.subr.bf16.mxu0 0
    %1524 = vmatpush1.bf16.msra.mxu0 0
    %1525 = vmatprep.subr.bf16.mxu0 0
    %1526 = vmatpush1.bf16.msra.mxu0 0
    %1527 = vmatprep.subr.bf16.mxu0 0
    %1528 = vmatpush1.bf16.msra.mxu0 0
    %1529 = vmatprep.subr.bf16.mxu0 0
    %1530 = vmatpush1.bf16.msra.mxu0 0
    %1531 = vmatprep.subr.bf16.mxu0 0
    %1532 = vmatpush1.bf16.msra.mxu0 0
    %1533 = vmatprep.subr.bf16.mxu0 0
    %1534 = vmatpush1.bf16.msra.mxu0 0
    %1535 = vmatprep.subr.bf16.mxu0 0
    %1536 = vmatpush1.bf16.msra.mxu0 0
    %1537 = vmatprep.subr.bf16.mxu0 0
    %1538 = vmatpush1.bf16.msra.mxu0 0
    %1539 = vmatprep.subr.bf16.mxu0 0
    %1540 = vmatpush1.bf16.msra.mxu0 0
    %1541 = vmatprep.subr.bf16.mxu0 0
    %1542 = vmatpush1.bf16.msra.mxu0 0
    %1543 = vmatprep.subr.bf16.mxu0 0
    %1544 = vmatpush1.bf16.msra.mxu0 0
    %1545 = vmatprep.mubr.bf16.mxu0 0
    %1546 = vmatmul.mubr.bf16.gmra.mrb[0].mxu0 %v1499
    %v1547 = vpop.f32.mrb[0].mxu0
    %v1548 = vadd.f32 %v1496, %v1547
    %v1549 = vpop.f32.mrb[0].mxu0
    %v1550 = vadd.f32 %v1496, %v1549
    %v1551 = vpop.f32.mrb[0].mxu0
    %v1552 = vpop.f32.mrb[0].mxu0
    %1553 = vdwg.mxu0
    %1554 = vmatprep.subr.bf16.mxu0 %v1476
    %1555 = vmatpush1.bf16.msra.mxu0 %v1475
    %1556 = vmatprep.subr.bf16.mxu0 %v1480
    %1557 = vmatpush1.bf16.msra.mxu0 %v1479
    %1558 = vmatprep.subr.bf16.mxu0 %v1484
    %1559 = vmatpush1.bf16.msra.mxu0 %v1483
    %1560 = vmatprep.subr.bf16.mxu0 %v1488
    %1561 = vmatpush1.bf16.msra.mxu0 %v1487
    %1562 = vmatprep.subr.bf16.mxu0 %v1511
    %1563 = vmatpush1.bf16.msra.mxu0 %v1508
    %1564 = vmatprep.subr.bf16.mxu0 0
    %1565 = vmatpush1.bf16.msra.mxu0 0
    %1566 = vmatprep.subr.bf16.mxu0 0
    %1567 = vmatpush1.bf16.msra.mxu0 0
    %1568 = vmatprep.subr.bf16.mxu0 0
    %1569 = vmatpush1.bf16.msra.mxu0 0
    %1570 = vmatprep.subr.bf16.mxu0 0
    %1571 = vmatpush1.bf16.msra.mxu0 0
    %1572 = vmatprep.subr.bf16.mxu0 0
    %1573 = vmatpush1.bf16.msra.mxu0 0
    %1574 = vmatprep.subr.bf16.mxu0 0
    %1575 = vmatpush1.bf16.msra.mxu0 0
    %1576 = vmatprep.subr.bf16.mxu0 0
    %1577 = vmatpush1.bf16.msra.mxu0 0
    %1578 = vmatprep.subr.bf16.mxu0 0
    %1579 = vmatpush1.bf16.msra.mxu0 0
    %1580 = vmatprep.subr.bf16.mxu0 0
    %1581 = vmatpush1.bf16.msra.mxu0 0
    %1582 = vmatprep.subr.bf16.mxu0 0
    %1583 = vmatpush1.bf16.msra.mxu0 0
    %1584 = vmatprep.subr.bf16.mxu0 0
    %1585 = vmatpush1.bf16.msra.mxu0 0
    %1586 = vmatprep.mubr.bf16.mxu0 0
    %1587 = vmatmul.mubr.bf16.gmra.mrb[0].mxu0 %v1499
    %v1588 = vpop.f32.mrb[0].mxu0
    %v1589 = vadd.f32 %v1496, %v1588
    %v1590 = vpop.f32.mrb[0].mxu0
    %v1591 = vadd.f32 %v1496, %v1590
    %v1592 = vpop.f32.mrb[0].mxu0
    %v1593 = vpop.f32.mrb[0].mxu0
    %1594 = vdwg.mxu0
    %v1595 = vmax.f32 %v1548, 0.0
    %v1596 = vmax.f32 %v1550, 0.0
    %v1597 = vmax.f32 %v1589, 0.0
    %v1598 = vmax.f32 %v1591, 0.0
    %s1599 = scalar_lea.vmem %s6, 4
    %v1600 = vld [vmem:[%s1599] sm:$0xf]
    %s1601 = scalar_lea.vmem %s7, 8
    %v1602 = vld [vmem:[%s1601] sm:$0xff]
    %1603 = vrot.lane.b32.xlu0 %v1595, 17
    %v1604 = vpop.permute.xlu0 %1603
    %1605 = vrot.lane.b32.xlu0 %v1596, 17
    %v1606 = vpop.permute.xlu0 %1605
    %1607 = vrot.lane.b32.xlu0 %v1597, 17
    %v1608 = vpop.permute.xlu0 %1607
    %1609 = vrot.lane.b32.xlu0 %v1598, 17
    %v1610 = vpop.permute.xlu0 %1609
    %v1611 = vsel %vm267, %v1608, %v1610
    %v1612 = vsel %vm267, %v1606, %v1608
    %v1613 = vsel %vm267, %v1604, %v1606
    %v1614 = vsel %vm267, %v1610, %v1604
    %v1615 = vmul.f32 %v1614, %v173
    %v1616 = vmul.f32 %v1613, %v174
    %v1617 = vmul.f32 %v1612, %v175
    %v1618 = vmul.f32 %v1611, %v176
    %1619 = vst [vmem:[#allocation2] sm:$0xff] %v1615
    %1620 = vst [vmem:[#allocation2 + $0x8] sm:$0xff] %v1616
    %1621 = vst [vmem:[#allocation2 + $0x10] sm:$0xff] %v1617
    %1622 = vst [vmem:[#allocation2 + $0x18] sm:$0xff] %v1618
    %1623 = vrot.lane.b32.xlu0 %v1595, 16
    %v1624 = vpop.permute.xlu0 %1623
    %1625 = vrot.lane.b32.xlu0 %v1596, 16
    %v1626 = vpop.permute.xlu0 %1625
    %1627 = vrot.lane.b32.xlu0 %v1597, 16
    %v1628 = vpop.permute.xlu0 %1627
    %1629 = vrot.lane.b32.xlu0 %v1598, 16
    %v1630 = vpop.permute.xlu0 %1629
    %v1631 = vsel %vm288, %v1628, %v1630
    %v1632 = vsel %vm288, %v1626, %v1628
    %v1633 = vsel %vm288, %v1624, %v1626
    %v1634 = vsel %vm288, %v1630, %v1624
    %v1635 = vmul.f32 %v1634, %v181
    %v1636 = vmul.f32 %v1633, %v182
    %v1637 = vmul.f32 %v1632, %v183
    %v1638 = vmul.f32 %v1631, %v184
    %1639 = vst [vmem:[#allocation2 + $0x20] sm:$0xff] %v1635
    %1640 = vst [vmem:[#allocation2 + $0x28] sm:$0xff] %v1636
    %1641 = vst [vmem:[#allocation2 + $0x30] sm:$0xff] %v1637
    %1642 = vst [vmem:[#allocation2 + $0x38] sm:$0xff] %v1638
    %1643 = vrot.lane.b32.xlu0 %v1595, 15
    %v1644 = vpop.permute.xlu0 %1643
    %1645 = vrot.lane.b32.xlu0 %v1596, 15
    %v1646 = vpop.permute.xlu0 %1645
    %1647 = vrot.lane.b32.xlu0 %v1597, 15
    %v1648 = vpop.permute.xlu0 %1647
    %1649 = vrot.lane.b32.xlu0 %v1598, 15
    %v1650 = vpop.permute.xlu0 %1649
    %v1651 = vsel %vm309, %v1648, %v1650
    %v1652 = vsel %vm309, %v1646, %v1648
    %v1653 = vsel %vm309, %v1644, %v1646
    %v1654 = vsel %vm309, %v1650, %v1644
    %v1655 = vmul.f32 %v1654, %v197
    %v1656 = vmul.f32 %v1653, %v198
    %v1657 = vmul.f32 %v1652, %v199
    %v1658 = vmul.f32 %v1651, %v200
    %1659 = vst [vmem:[#allocation2 + $0x40] sm:$0xff] %v1655
    %1660 = vst [vmem:[#allocation2 + $0x48] sm:$0xff] %v1656
    %1661 = vst [vmem:[#allocation2 + $0x50] sm:$0xff] %v1657
    %1662 = vst [vmem:[#allocation2 + $0x58] sm:$0xff] %v1658
    %1663 = vrot.lane.b32.xlu0 %v1595, 1
    %v1664 = vpop.permute.xlu0 %1663
    %1665 = vrot.lane.b32.xlu0 %v1596, 1
    %v1666 = vpop.permute.xlu0 %1665
    %1667 = vrot.lane.b32.xlu0 %v1597, 1
    %v1668 = vpop.permute.xlu0 %1667
    %1669 = vrot.lane.b32.xlu0 %v1598, 1
    %v1670 = vpop.permute.xlu0 %1669
    %v1671 = vsel %vm330, %v1668, %v1670
    %v1672 = vsel %vm330, %v1666, %v1668
    %v1673 = vsel %vm330, %v1664, %v1666
    %v1674 = vsel %vm330, %v1670, %v1664
    %v1675 = vmul.f32 %v1674, %v205
    %v1676 = vmul.f32 %v1673, %v206
    %v1677 = vmul.f32 %v1672, %v207
    %v1678 = vmul.f32 %v1671, %v208
    %1679 = vst [vmem:[#allocation2 + $0x60] sm:$0xff] %v1675
    %1680 = vst [vmem:[#allocation2 + $0x68] sm:$0xff] %v1676
    %1681 = vst [vmem:[#allocation2 + $0x70] sm:$0xff] %v1677
    %1682 = vst [vmem:[#allocation2 + $0x78] sm:$0xff] %v1678
    %1683 = vst [vmem:[#allocation2 + $0x80] sm:$0xff] %v1595
    %1684 = vst [vmem:[#allocation2 + $0x88] sm:$0xff] %v1596
    %1685 = vst [vmem:[#allocation2 + $0x90] sm:$0xff] %v1597
    %1686 = vst [vmem:[#allocation2 + $0x98] sm:$0xff] %v1598
    %1687 = vrot.lane.b32.xlu0 %v1595, 127
    %v1688 = vpop.permute.xlu0 %1687
    %1689 = vrot.lane.b32.xlu0 %v1596, 127
    %v1690 = vpop.permute.xlu0 %1689
    %1691 = vrot.lane.b32.xlu0 %v1597, 127
    %v1692 = vpop.permute.xlu0 %1691
    %1693 = vrot.lane.b32.xlu0 %v1598, 127
    %v1694 = vpop.permute.xlu0 %1693
    %v1695 = vsel %vm355, %v1692, %v1694
    %v1696 = vsel %vm355, %v1690, %v1692
    %v1697 = vsel %vm355, %v1688, %v1690
    %v1698 = vsel %vm355, %v1694, %v1688
    %v1699 = vmul.f32 %v1697, %v213
    %v1700 = vmul.f32 %v1696, %v214
    %v1701 = vmul.f32 %v1695, %v215
    %v1702 = vmul.f32 %v1698, %v216
    %1703 = vst [vmem:[#allocation2 + $0xa0] sm:$0xff] %v1699
    %1704 = vst [vmem:[#allocation2 + $0xa8] sm:$0xff] %v1700
    %1705 = vst [vmem:[#allocation2 + $0xb0] sm:$0xff] %v1701
    %1706 = vst [vmem:[#allocation2 + $0xb8] sm:$0xff] %v1702
    %1707 = vrot.lane.b32.xlu0 %v1595, 113
    %v1708 = vpop.permute.xlu0 %1707
    %1709 = vrot.lane.b32.xlu0 %v1596, 113
    %v1710 = vpop.permute.xlu0 %1709
    %1711 = vrot.lane.b32.xlu0 %v1597, 113
    %v1712 = vpop.permute.xlu0 %1711
    %1713 = vrot.lane.b32.xlu0 %v1598, 113
    %v1714 = vpop.permute.xlu0 %1713
    %v1715 = vsel %vm376, %v1712, %v1714
    %v1716 = vsel %vm376, %v1710, %v1712
    %v1717 = vsel %vm376, %v1708, %v1710
    %v1718 = vsel %vm376, %v1714, %v1708
    %v1719 = vmul.f32 %v1717, %v229
    %v1720 = vmul.f32 %v1716, %v230
    %v1721 = vmul.f32 %v1715, %v231
    %v1722 = vmul.f32 %v1718, %v232
    %1723 = vst [vmem:[#allocation2 + $0xc0] sm:$0xff] %v1719
    %1724 = vst [vmem:[#allocation2 + $0xc8] sm:$0xff] %v1720
    %1725 = vst [vmem:[#allocation2 + $0xd0] sm:$0xff] %v1721
    %1726 = vst [vmem:[#allocation2 + $0xd8] sm:$0xff] %v1722
    %1727 = vrot.lane.b32.xlu0 %v1595, 112
    %v1728 = vpop.permute.xlu0 %1727
    %1729 = vrot.lane.b32.xlu0 %v1596, 112
    %v1730 = vpop.permute.xlu0 %1729
    %1731 = vrot.lane.b32.xlu0 %v1597, 112
    %v1732 = vpop.permute.xlu0 %1731
    %1733 = vrot.lane.b32.xlu0 %v1598, 112
    %v1734 = vpop.permute.xlu0 %1733
    %v1735 = vsel %vm397, %v1732, %v1734
    %v1736 = vsel %vm397, %v1730, %v1732
    %v1737 = vsel %vm397, %v1728, %v1730
    %v1738 = vsel %vm397, %v1734, %v1728
    %v1739 = vmul.f32 %v1737, %v237
    %v1740 = vmul.f32 %v1736, %v238
    %v1741 = vmul.f32 %v1735, %v239
    %v1742 = vmul.f32 %v1738, %v240
    %1743 = vst [vmem:[#allocation2 + $0xe0] sm:$0xff] %v1739
    %1744 = vst [vmem:[#allocation2 + $0xe8] sm:$0xff] %v1740
    %1745 = vst [vmem:[#allocation2 + $0xf0] sm:$0xff] %v1741
    %1746 = vst [vmem:[#allocation2 + $0xf8] sm:$0xff] %v1742
    %1747 = vrot.lane.b32.xlu0 %v1595, 111
    %v1748 = vpop.permute.xlu0 %1747
    %1749 = vrot.lane.b32.xlu0 %v1596, 111
    %v1750 = vpop.permute.xlu0 %1749
    %1751 = vrot.lane.b32.xlu0 %v1597, 111
    %v1752 = vpop.permute.xlu0 %1751
    %1753 = vrot.lane.b32.xlu0 %v1598, 111
    %v1754 = vpop.permute.xlu0 %1753
    %v1755 = vsel %vm418, %v1752, %v1754
    %v1756 = vsel %vm418, %v1750, %v1752
    %v1757 = vsel %vm418, %v1748, %v1750
    %v1758 = vsel %vm418, %v1754, %v1748
    %v1759 = vmul.f32 %v1757, %v249
    %v1760 = vmul.f32 %v1756, %v250
    %v1761 = vmul.f32 %v1755, %v251
    %v1762 = vmul.f32 %v1758, %v252
    %1763 = vst [vmem:[#allocation2 + $0x100] sm:$0xff] %v1759
    %1764 = vst [vmem:[#allocation2 + $0x108] sm:$0xff] %v1760
    %1765 = vst [vmem:[#allocation2 + $0x110] sm:$0xff] %v1761
    %1766 = vst [vmem:[#allocation2 + $0x118] sm:$0xff] %v1762
    %v1767 = vld [vmem:[#allocation2] sm:$0xff]
    %v1768 = vld [vmem:[#allocation2 + $0x8] sm:$0xff]
    %v1769 = vld [vmem:[#allocation2 + $0x10] sm:$0xff]
    %v1770 = vld [vmem:[#allocation2 + $0x18] sm:$0xff]
    %v1771 = vld [vmem:[#allocation2 + $0x20] sm:$0xff]
    %v1772 = vld [vmem:[#allocation2 + $0x28] sm:$0xff]
    %v1773 = vld [vmem:[#allocation2 + $0x30] sm:$0xff]
    %v1774 = vld [vmem:[#allocation2 + $0x38] sm:$0xff]
    %v1775 = vld [vmem:[#allocation2 + $0x40] sm:$0xff]
    %v1776 = vld [vmem:[#allocation2 + $0x48] sm:$0xff]
    %v1777 = vld [vmem:[#allocation2 + $0x50] sm:$0xff]
    %v1778 = vld [vmem:[#allocation2 + $0x58] sm:$0xff]
    %v1779 = vld [vmem:[#allocation2 + $0x60] sm:$0xff]
    %v1780 = vld [vmem:[#allocation2 + $0x68] sm:$0xff]
    %v1781 = vld [vmem:[#allocation2 + $0x70] sm:$0xff]
    %v1782 = vld [vmem:[#allocation2 + $0x78] sm:$0xff]
    %v1783 = vld [vmem:[#allocation2 + $0x80] sm:$0xff]
    %v1784 = vld [vmem:[#allocation2 + $0x88] sm:$0xff]
    %v1785 = vld [vmem:[#allocation2 + $0x90] sm:$0xff]
    %v1786 = vld [vmem:[#allocation2 + $0x98] sm:$0xff]
    %v1787 = vld [vmem:[#allocation2 + $0xa0] sm:$0xff]
    %v1788 = vld [vmem:[#allocation2 + $0xa8] sm:$0xff]
    %v1789 = vld [vmem:[#allocation2 + $0xb0] sm:$0xff]
    %v1790 = vld [vmem:[#allocation2 + $0xb8] sm:$0xff]
    %v1791 = vld [vmem:[#allocation2 + $0xc0] sm:$0xff]
    %v1792 = vld [vmem:[#allocation2 + $0xc8] sm:$0xff]
    %v1793 = vld [vmem:[#allocation2 + $0xd0] sm:$0xff]
    %v1794 = vld [vmem:[#allocation2 + $0xd8] sm:$0xff]
    %v1795 = vld [vmem:[#allocation2 + $0xe0] sm:$0xff]
    %v1796 = vld [vmem:[#allocation2 + $0xe8] sm:$0xff]
    %v1797 = vld [vmem:[#allocation2 + $0xf0] sm:$0xff]
    %v1798 = vld [vmem:[#allocation2 + $0xf8] sm:$0xff]
    %v1799 = vld [vmem:[#allocation2 + $0x100] sm:$0xff]
    %v1800 = vld [vmem:[#allocation2 + $0x108] sm:$0xff]
    %v1801 = vld [vmem:[#allocation2 + $0x110] sm:$0xff]
    %v1802 = vld [vmem:[#allocation2 + $0x118] sm:$0xff]
    %v1803 = vpack.c.bf16 %v1771, %v1767
    %v1804 = vpack.c.bf16 %v1772, %v1768
    %v1805 = vpack.c.bf16 %v1773, %v1769
    %v1806 = vpack.c.bf16 %v1774, %v1770
    %v1807 = vpack.c.bf16 %v1779, %v1775
    %v1808 = vpack.c.bf16 %v1780, %v1776
    %v1809 = vpack.c.bf16 %v1781, %v1777
    %v1810 = vpack.c.bf16 %v1782, %v1778
    %v1811 = vpack.c.bf16 %v1787, %v1783
    %v1812 = vpack.c.bf16 %v1788, %v1784
    %v1813 = vpack.c.bf16 %v1789, %v1785
    %v1814 = vpack.c.bf16 %v1790, %v1786
    %v1815 = vpack.c.bf16 %v1795, %v1791
    %v1816 = vpack.c.bf16 %v1796, %v1792
    %v1817 = vpack.c.bf16 %v1797, %v1793
    %v1818 = vpack.c.bf16 %v1798, %v1794
    %v1819 = vpack.c.bf16 %v1799, %v1799
    %v1820 = vpack.c.bf16 %v1800, %v1800
    %v1821 = vpack.c.bf16 %v1801, %v1801
    %v1822 = vpack.c.bf16 %v1802, %v1802
    %1824 = vset.pattern.permute.xlu0 0
    %1825 = vperm.xlu0 %1824, %v1602
    %v1826 = vpop.permute.xlu0 %1825
    %v1829 = vsel %vm492, %v1600, 0
    %v1832 = vsel %vm496, %v1819, 0
    %v1835 = vsel %vm496, %v1820, 0
    %v1838 = vsel %vm496, %v1821, 0
    %v1841 = vsel %vm496, %v1822, 0
    %1843 = vmatprep.subr.bf16.mxu0 %v1804
    %1844 = vmatpush1.bf16.msra.mxu0 %v1803
    %1845 = vmatprep.subr.bf16.mxu0 %v1808
    %1846 = vmatpush1.bf16.msra.mxu0 %v1807
    %1847 = vmatprep.subr.bf16.mxu0 %v1812
    %1848 = vmatpush1.bf16.msra.mxu0 %v1811
    %1849 = vmatprep.subr.bf16.mxu0 %v1816
    %1850 = vmatpush1.bf16.msra.mxu0 %v1815
    %1851 = vmatprep.subr.bf16.mxu0 %v1835
    %1852 = vmatpush1.bf16.msra.mxu0 %v1832
    %1853 = vmatprep.subr.bf16.mxu0 0
    %1854 = vmatpush1.bf16.msra.mxu0 0
    %1855 = vmatprep.subr.bf16.mxu0 0
    %1856 = vmatpush1.bf16.msra.mxu0 0
    %1857 = vmatprep.subr.bf16.mxu0 0
    %1858 = vmatpush1.bf16.msra.mxu0 0
    %1859 = vmatprep.subr.bf16.mxu0 0
    %1860 = vmatpush1.bf16.msra.mxu0 0
    %1861 = vmatprep.subr.bf16.mxu0 0
    %1862 = vmatpush1.bf16.msra.mxu0 0
    %1863 = vmatprep.subr.bf16.mxu0 0
    %1864 = vmatpush1.bf16.msra.mxu0 0
    %1865 = vmatprep.subr.bf16.mxu0 0
    %1866 = vmatpush1.bf16.msra.mxu0 0
    %1867 = vmatprep.subr.bf16.mxu0 0
    %1868 = vmatpush1.bf16.msra.mxu0 0
    %1869 = vmatprep.subr.bf16.mxu0 0
    %1870 = vmatpush1.bf16.msra.mxu0 0
    %1871 = vmatprep.subr.bf16.mxu0 0
    %1872 = vmatpush1.bf16.msra.mxu0 0
    %1873 = vmatprep.subr.bf16.mxu0 0
    %1874 = vmatpush1.bf16.msra.mxu0 0
    %1875 = vmatprep.mubr.bf16.mxu0 0
    %1876 = vmatmul.mubr.bf16.gmra.mrb[0].mxu0 %v1829
    %v1877 = vpop.f32.mrb[0].mxu0
    %v1878 = vadd.f32 %v1826, %v1877
    %v1879 = vpop.f32.mrb[0].mxu0
    %v1880 = vadd.f32 %v1826, %v1879
    %v1881 = vpop.f32.mrb[0].mxu0
    %v1882 = vpop.f32.mrb[0].mxu0
    %1883 = vdwg.mxu0
    %1884 = vmatprep.subr.bf16.mxu0 %v1806
    %1885 = vmatpush1.bf16.msra.mxu0 %v1805
    %1886 = vmatprep.subr.bf16.mxu0 %v1810
    %1887 = vmatpush1.bf16.msra.mxu0 %v1809
    %1888 = vmatprep.subr.bf16.mxu0 %v1814
    %1889 = vmatpush1.bf16.msra.mxu0 %v1813
    %1890 = vmatprep.subr.bf16.mxu0 %v1818
    %1891 = vmatpush1.bf16.msra.mxu0 %v1817
    %1892 = vmatprep.subr.bf16.mxu0 %v1841
    %1893 = vmatpush1.bf16.msra.mxu0 %v1838
    %1894 = vmatprep.subr.bf16.mxu0 0
    %1895 = vmatpush1.bf16.msra.mxu0 0
    %1896 = vmatprep.subr.bf16.mxu0 0
    %1897 = vmatpush1.bf16.msra.mxu0 0
    %1898 = vmatprep.subr.bf16.mxu0 0
    %1899 = vmatpush1.bf16.msra.mxu0 0
    %1900 = vmatprep.subr.bf16.mxu0 0
    %1901 = vmatpush1.bf16.msra.mxu0 0
    %1902 = vmatprep.subr.bf16.mxu0 0
    %1903 = vmatpush1.bf16.msra.mxu0 0
    %1904 = vmatprep.subr.bf16.mxu0 0
    %1905 = vmatpush1.bf16.msra.mxu0 0
    %1906 = vmatprep.subr.bf16.mxu0 0
    %1907 = vmatpush1.bf16.msra.mxu0 0
    %1908 = vmatprep.subr.bf16.mxu0 0
    %1909 = vmatpush1.bf16.msra.mxu0 0
    %1910 = vmatprep.subr.bf16.mxu0 0
    %1911 = vmatpush1.bf16.msra.mxu0 0
    %1912 = vmatprep.subr.bf16.mxu0 0
    %1913 = vmatpush1.bf16.msra.mxu0 0
    %1914 = vmatprep.subr.bf16.mxu0 0
    %1915 = vmatpush1.bf16.msra.mxu0 0
    %1916 = vmatprep.mubr.bf16.mxu0 0
    %1917 = vmatmul.mubr.bf16.gmra.mrb[0].mxu0 %v1829
    %v1918 = vpop.f32.mrb[0].mxu0
    %v1919 = vadd.f32 %v1826, %v1918
    %v1920 = vpop.f32.mrb[0].mxu0
    %v1921 = vadd.f32 %v1826, %v1920
    %v1922 = vpop.f32.mrb[0].mxu0
    %v1923 = vpop.f32.mrb[0].mxu0
    %1924 = vdwg.mxu0
    %v1925 = vstv %s1267
    %v1926 = vmul.f32 %v1925, %v1878
    %v1927 = vmul.f32 %v1925, %v1880
    %v1928 = vmul.f32 %v1925, %v1919
    %v1929 = vmul.f32 %v1925, %v1921
    %v1930 = vsub.f32 %v544, %v1263
    %v1931 = vsub.f32 %v546, %v1264
    %v1932 = vsub.f32 %v585, %v1265
    %v1933 = vsub.f32 %v587, %v1266
    %v1934 = vstv %s1268
    %v1935 = vmul.f32 %v1934, %v1930
    %v1936 = vmul.f32 %v1934, %v1931
    %v1937 = vmul.f32 %v1934, %v1932
    %v1938 = vmul.f32 %v1934, %v1933
    %v1939 = vadd.f32 %v1926, %v1935
    %v1940 = vadd.f32 %v1927, %v1936
    %v1941 = vadd.f32 %v1928, %v1937
    %v1942 = vadd.f32 %v1929, %v1938
    %v1943 = vadd.f32 %v1939, %v1263
    %v1944 = vadd.f32 %v1940, %v1264
    %v1945 = vadd.f32 %v1941, %v1265
    %v1946 = vadd.f32 %v1942, %v1266
    %v1947 = vld [vmem:[%s8] sm:$0xff]
    %1949 = vset.pattern.permute.xlu0 0
    %1950 = vperm.xlu0 %1949, %v1947
    %v1951 = vpop.permute.xlu0 %1950
    %v1953 = vmul.f32 %v1943, %v1951
    %v1954 = vmul.f32 %v1944, %v1951
    %v1955 = vmul.f32 %v1945, %v1951
    %v1956 = vmul.f32 %v1946, %v1951
    %v1957 = vld [vmem:[%s9] sm:$0xff]
    %1959 = vset.pattern.permute.xlu0 0
    %1960 = vperm.xlu0 %1959, %v1957
    %v1961 = vpop.permute.xlu0 %1960
    %v1963 = vadd.f32 %v1953, %v1961
    %v1964 = vadd.f32 %v1954, %v1961
    %v1965 = vadd.f32 %v1955, %v1961
    %v1966 = vadd.f32 %v1956, %v1961
    %v1967 = vld [vmem:[%s10] sm:$0xf]
    %v1968 = vld [vmem:[%s11] sm:$0xff]
    %1969 = vrot.lane.b32.xlu0 %v1963, 17
    %v1970 = vpop.permute.xlu0 %1969
    %1971 = vrot.lane.b32.xlu0 %v1964, 17
    %v1972 = vpop.permute.xlu0 %1971
    %1973 = vrot.lane.b32.xlu0 %v1965, 17
    %v1974 = vpop.permute.xlu0 %1973
    %1975 = vrot.lane.b32.xlu0 %v1966, 17
    %v1976 = vpop.permute.xlu0 %1975
    %v1977 = vsel %vm267, %v1974, %v1976
    %v1978 = vsel %vm267, %v1972, %v1974
    %v1979 = vsel %vm267, %v1970, %v1972
    %v1980 = vsel %vm267, %v1976, %v1970
    %v1981 = vmul.f32 %v1980, %v173
    %v1982 = vmul.f32 %v1979, %v174
    %v1983 = vmul.f32 %v1978, %v175
    %v1984 = vmul.f32 %v1977, %v176
    %1985 = vst [vmem:[#allocation2] sm:$0xff] %v1981
    %1986 = vst [vmem:[#allocation2 + $0x8] sm:$0xff] %v1982
    %1987 = vst [vmem:[#allocation2 + $0x10] sm:$0xff] %v1983
    %1988 = vst [vmem:[#allocation2 + $0x18] sm:$0xff] %v1984
    %1989 = vrot.lane.b32.xlu0 %v1963, 16
    %v1990 = vpop.permute.xlu0 %1989
    %1991 = vrot.lane.b32.xlu0 %v1964, 16
    %v1992 = vpop.permute.xlu0 %1991
    %1993 = vrot.lane.b32.xlu0 %v1965, 16
    %v1994 = vpop.permute.xlu0 %1993
    %1995 = vrot.lane.b32.xlu0 %v1966, 16
    %v1996 = vpop.permute.xlu0 %1995
    %v1997 = vsel %vm288, %v1994, %v1996
    %v1998 = vsel %vm288, %v1992, %v1994
    %v1999 = vsel %vm288, %v1990, %v1992
    %v2000 = vsel %vm288, %v1996, %v1990
    %v2001 = vmul.f32 %v2000, %v181
    %v2002 = vmul.f32 %v1999, %v182
    %v2003 = vmul.f32 %v1998, %v183
    %v2004 = vmul.f32 %v1997, %v184
    %2005 = vst [vmem:[#allocation2 + $0x20] sm:$0xff] %v2001
    %2006 = vst [vmem:[#allocation2 + $0x28] sm:$0xff] %v2002
    %2007 = vst [vmem:[#allocation2 + $0x30] sm:$0xff] %v2003
    %2008 = vst [vmem:[#allocation2 + $0x38] sm:$0xff] %v2004
    %2009 = vrot.lane.b32.xlu0 %v1963, 15
    %v2010 = vpop.permute.xlu0 %2009
    %2011 = vrot.lane.b32.xlu0 %v1964, 15
    %v2012 = vpop.permute.xlu0 %2011
    %2013 = vrot.lane.b32.xlu0 %v1965, 15
    %v2014 = vpop.permute.xlu0 %2013
    %2015 = vrot.lane.b32.xlu0 %v1966, 15
    %v2016 = vpop.permute.xlu0 %2015
    %v2017 = vsel %vm309, %v2014, %v2016
    %v2018 = vsel %vm309, %v2012, %v2014
    %v2019 = vsel %vm309, %v2010, %v2012
    %v2020 = vsel %vm309, %v2016, %v2010
    %v2021 = vmul.f32 %v2020, %v197
    %v2022 = vmul.f32 %v2019, %v198
    %v2023 = vmul.f32 %v2018, %v199
    %v2024 = vmul.f32 %v2017, %v200
    %2025 = vst [vmem:[#allocation2 + $0x40] sm:$0xff] %v2021
    %2026 = vst [vmem:[#allocation2 + $0x48] sm:$0xff] %v2022
    %2027 = vst [vmem:[#allocation2 + $0x50] sm:$0xff] %v2023
    %2028 = vst [vmem:[#allocation2 + $0x58] sm:$0xff] %v2024
    %2029 = vrot.lane.b32.xlu0 %v1963, 1
    %v2030 = vpop.permute.xlu0 %2029
    %2031 = vrot.lane.b32.xlu0 %v1964, 1
    %v2032 = vpop.permute.xlu0 %2031
    %2033 = vrot.lane.b32.xlu0 %v1965, 1
    %v2034 = vpop.permute.xlu0 %2033
    %2035 = vrot.lane.b32.xlu0 %v1966, 1
    %v2036 = vpop.permute.xlu0 %2035
    %v2037 = vsel %vm330, %v2034, %v2036
    %v2038 = vsel %vm330, %v2032, %v2034
    %v2039 = vsel %vm330, %v2030, %v2032
    %v2040 = vsel %vm330, %v2036, %v2030
    %v2041 = vmul.f32 %v2040, %v205
    %v2042 = vmul.f32 %v2039, %v206
    %v2043 = vmul.f32 %v2038, %v207
    %v2044 = vmul.f32 %v2037, %v208
    %2045 = vst [vmem:[#allocation2 + $0x60] sm:$0xff] %v2041
    %2046 = vst [vmem:[#allocation2 + $0x68] sm:$0xff] %v2042
    %2047 = vst [vmem:[#allocation2 + $0x70] sm:$0xff] %v2043
    %2048 = vst [vmem:[#allocation2 + $0x78] sm:$0xff] %v2044
    %2049 = vst [vmem:[#allocation2 + $0x80] sm:$0xff] %v1963
    %2050 = vst [vmem:[#allocation2 + $0x88] sm:$0xff] %v1964
    %2051 = vst [vmem:[#allocation2 + $0x90] sm:$0xff] %v1965
    %2052 = vst [vmem:[#allocation2 + $0x98] sm:$0xff] %v1966
    %2053 = vrot.lane.b32.xlu0 %v1963, 127
    %v2054 = vpop.permute.xlu0 %2053
    %2055 = vrot.lane.b32.xlu0 %v1964, 127
    %v2056 = vpop.permute.xlu0 %2055
    %2057 = vrot.lane.b32.xlu0 %v1965, 127
    %v2058 = vpop.permute.xlu0 %2057
    %2059 = vrot.lane.b32.xlu0 %v1966, 127
    %v2060 = vpop.permute.xlu0 %2059
    %v2061 = vsel %vm355, %v2058, %v2060
    %v2062 = vsel %vm355, %v2056, %v2058
    %v2063 = vsel %vm355, %v2054, %v2056
    %v2064 = vsel %vm355, %v2060, %v2054
    %v2065 = vmul.f32 %v2063, %v213
    %v2066 = vmul.f32 %v2062, %v214
    %v2067 = vmul.f32 %v2061, %v215
    %v2068 = vmul.f32 %v2064, %v216
    %2069 = vst [vmem:[#allocation2 + $0xa0] sm:$0xff] %v2065
    %2070 = vst [vmem:[#allocation2 + $0xa8] sm:$0xff] %v2066
    %2071 = vst [vmem:[#allocation2 + $0xb0] sm:$0xff] %v2067
    %2072 = vst [vmem:[#allocation2 + $0xb8] sm:$0xff] %v2068
    %2073 = vrot.lane.b32.xlu0 %v1963, 113
    %v2074 = vpop.permute.xlu0 %2073
    %2075 = vrot.lane.b32.xlu0 %v1964, 113
    %v2076 = vpop.permute.xlu0 %2075
    %2077 = vrot.lane.b32.xlu0 %v1965, 113
    %v2078 = vpop.permute.xlu0 %2077
    %2079 = vrot.lane.b32.xlu0 %v1966, 113
    %v2080 = vpop.permute.xlu0 %2079
    %v2081 = vsel %vm376, %v2078, %v2080
    %v2082 = vsel %vm376, %v2076, %v2078
    %v2083 = vsel %vm376, %v2074, %v2076
    %v2084 = vsel %vm376, %v2080, %v2074
    %v2085 = vmul.f32 %v2083, %v229
    %v2086 = vmul.f32 %v2082, %v230
    %v2087 = vmul.f32 %v2081, %v231
    %v2088 = vmul.f32 %v2084, %v232
    %2089 = vst [vmem:[#allocation2 + $0xc0] sm:$0xff] %v2085
    %2090 = vst [vmem:[#allocation2 + $0xc8] sm:$0xff] %v2086
    %2091 = vst [vmem:[#allocation2 + $0xd0] sm:$0xff] %v2087
    %2092 = vst [vmem:[#allocation2 + $0xd8] sm:$0xff] %v2088
    %2093 = vrot.lane.b32.xlu0 %v1963, 112
    %v2094 = vpop.permute.xlu0 %2093
    %2095 = vrot.lane.b32.xlu0 %v1964, 112
    %v2096 = vpop.permute.xlu0 %2095
    %2097 = vrot.lane.b32.xlu0 %v1965, 112
    %v2098 = vpop.permute.xlu0 %2097
    %2099 = vrot.lane.b32.xlu0 %v1966, 112
    %v2100 = vpop.permute.xlu0 %2099
    %v2101 = vsel %vm397, %v2098, %v2100
    %v2102 = vsel %vm397, %v2096, %v2098
    %v2103 = vsel %vm397, %v2094, %v2096
    %v2104 = vsel %vm397, %v2100, %v2094
    %v2105 = vmul.f32 %v2103, %v237
    %v2106 = vmul.f32 %v2102, %v238
    %v2107 = vmul.f32 %v2101, %v239
    %v2108 = vmul.f32 %v2104, %v240
    %2109 = vst [vmem:[#allocation2 + $0xe0] sm:$0xff] %v2105
    %2110 = vst [vmem:[#allocation2 + $0xe8] sm:$0xff] %v2106
    %2111 = vst [vmem:[#allocation2 + $0xf0] sm:$0xff] %v2107
    %2112 = vst [vmem:[#allocation2 + $0xf8] sm:$0xff] %v2108
    %2113 = vrot.lane.b32.xlu0 %v1963, 111
    %v2114 = vpop.permute.xlu0 %2113
    %2115 = vrot.lane.b32.xlu0 %v1964, 111
    %v2116 = vpop.permute.xlu0 %2115
    %2117 = vrot.lane.b32.xlu0 %v1965, 111
    %v2118 = vpop.permute.xlu0 %2117
    %2119 = vrot.lane.b32.xlu0 %v1966, 111
    %v2120 = vpop.permute.xlu0 %2119
    %v2121 = vsel %vm418, %v2118, %v2120
    %v2122 = vsel %vm418, %v2116, %v2118
    %v2123 = vsel %vm418, %v2114, %v2116
    %v2124 = vsel %vm418, %v2120, %v2114
    %v2125 = vmul.f32 %v2123, %v249
    %v2126 = vmul.f32 %v2122, %v250
    %v2127 = vmul.f32 %v2121, %v251
    %v2128 = vmul.f32 %v2124, %v252
    %2129 = vst [vmem:[#allocation2 + $0x100] sm:$0xff] %v2125
    %2130 = vst [vmem:[#allocation2 + $0x108] sm:$0xff] %v2126
    %2131 = vst [vmem:[#allocation2 + $0x110] sm:$0xff] %v2127
    %2132 = vst [vmem:[#allocation2 + $0x118] sm:$0xff] %v2128
    %v2133 = vld [vmem:[#allocation2] sm:$0xff]
    %v2134 = vld [vmem:[#allocation2 + $0x8] sm:$0xff]
    %v2135 = vld [vmem:[#allocation2 + $0x10] sm:$0xff]
    %v2136 = vld [vmem:[#allocation2 + $0x18] sm:$0xff]
    %v2137 = vld [vmem:[#allocation2 + $0x20] sm:$0xff]
    %v2138 = vld [vmem:[#allocation2 + $0x28] sm:$0xff]
    %v2139 = vld [vmem:[#allocation2 + $0x30] sm:$0xff]
    %v2140 = vld [vmem:[#allocation2 + $0x38] sm:$0xff]
    %v2141 = vld [vmem:[#allocation2 + $0x40] sm:$0xff]
    %v2142 = vld [vmem:[#allocation2 + $0x48] sm:$0xff]
    %v2143 = vld [vmem:[#allocation2 + $0x50] sm:$0xff]
    %v2144 = vld [vmem:[#allocation2 + $0x58] sm:$0xff]
    %v2145 = vld [vmem:[#allocation2 + $0x60] sm:$0xff]
    %v2146 = vld [vmem:[#allocation2 + $0x68] sm:$0xff]
    %v2147 = vld [vmem:[#allocation2 + $0x70] sm:$0xff]
    %v2148 = vld [vmem:[#allocation2 + $0x78] sm:$0xff]
    %v2149 = vld [vmem:[#allocation2 + $0x80] sm:$0xff]
    %v2150 = vld [vmem:[#allocation2 + $0x88] sm:$0xff]
    %v2151 = vld [vmem:[#allocation2 + $0x90] sm:$0xff]
    %v2152 = vld [vmem:[#allocation2 + $0x98] sm:$0xff]
    %v2153 = vld [vmem:[#allocation2 + $0xa0] sm:$0xff]
    %v2154 = vld [vmem:[#allocation2 + $0xa8] sm:$0xff]
    %v2155 = vld [vmem:[#allocation2 + $0xb0] sm:$0xff]
    %v2156 = vld [vmem:[#allocation2 + $0xb8] sm:$0xff]
    %v2157 = vld [vmem:[#allocation2 + $0xc0] sm:$0xff]
    %v2158 = vld [vmem:[#allocation2 + $0xc8] sm:$0xff]
    %v2159 = vld [vmem:[#allocation2 + $0xd0] sm:$0xff]
    %v2160 = vld [vmem:[#allocation2 + $0xd8] sm:$0xff]
    %v2161 = vld [vmem:[#allocation2 + $0xe0] sm:$0xff]
    %v2162 = vld [vmem:[#allocation2 + $0xe8] sm:$0xff]
    %v2163 = vld [vmem:[#allocation2 + $0xf0] sm:$0xff]
    %v2164 = vld [vmem:[#allocation2 + $0xf8] sm:$0xff]
    %v2165 = vld [vmem:[#allocation2 + $0x100] sm:$0xff]
    %v2166 = vld [vmem:[#allocation2 + $0x108] sm:$0xff]
    %v2167 = vld [vmem:[#allocation2 + $0x110] sm:$0xff]
    %v2168 = vld [vmem:[#allocation2 + $0x118] sm:$0xff]
    %v2169 = vpack.c.bf16 %v2137, %v2133
    %v2170 = vpack.c.bf16 %v2138, %v2134
    %v2171 = vpack.c.bf16 %v2139, %v2135
    %v2172 = vpack.c.bf16 %v2140, %v2136
    %v2173 = vpack.c.bf16 %v2145, %v2141
    %v2174 = vpack.c.bf16 %v2146, %v2142
    %v2175 = vpack.c.bf16 %v2147, %v2143
    %v2176 = vpack.c.bf16 %v2148, %v2144
    %v2177 = vpack.c.bf16 %v2153, %v2149
    %v2178 = vpack.c.bf16 %v2154, %v2150
    %v2179 = vpack.c.bf16 %v2155, %v2151
    %v2180 = vpack.c.bf16 %v2156, %v2152
    %v2181 = vpack.c.bf16 %v2161, %v2157
    %v2182 = vpack.c.bf16 %v2162, %v2158
    %v2183 = vpack.c.bf16 %v2163, %v2159
    %v2184 = vpack.c.bf16 %v2164, %v2160
    %v2185 = vpack.c.bf16 %v2165, %v2165
    %v2186 = vpack.c.bf16 %v2166, %v2166
    %v2187 = vpack.c.bf16 %v2167, %v2167
    %v2188 = vpack.c.bf16 %v2168, %v2168
    %2190 = vset.pattern.permute.xlu0 0
    %2191 = vperm.xlu0 %2190, %v1968
    %v2192 = vpop.permute.xlu0 %2191
    %v2195 = vsel %vm492, %v1967, 0
    %v2198 = vsel %vm496, %v2185, 0
    %v2201 = vsel %vm496, %v2186, 0
    %v2204 = vsel %vm496, %v2187, 0
    %v2207 = vsel %vm496, %v2188, 0
    %2209 = vmatprep.subr.bf16.mxu0 %v2170
    %2210 = vmatpush1.bf16.msra.mxu0 %v2169
    %2211 = vmatprep.subr.bf16.mxu0 %v2174
    %2212 = vmatpush1.bf16.msra.mxu0 %v2173
    %2213 = vmatprep.subr.bf16.mxu0 %v2178
    %2214 = vmatpush1.bf16.msra.mxu0 %v2177
    %2215 = vmatprep.subr.bf16.mxu0 %v2182
    %2216 = vmatpush1.bf16.msra.mxu0 %v2181
    %2217 = vmatprep.subr.bf16.mxu0 %v2201
    %2218 = vmatpush1.bf16.msra.mxu0 %v2198
    %2219 = vmatprep.subr.bf16.mxu0 0
    %2220 = vmatpush1.bf16.msra.mxu0 0
    %2221 = vmatprep.subr.bf16.mxu0 0
    %2222 = vmatpush1.bf16.msra.mxu0 0
    %2223 = vmatprep.subr.bf16.mxu0 0
    %2224 = vmatpush1.bf16.msra.mxu0 0
    %2225 = vmatprep.subr.bf16.mxu0 0
    %2226 = vmatpush1.bf16.msra.mxu0 0
    %2227 = vmatprep.subr.bf16.mxu0 0
    %2228 = vmatpush1.bf16.msra.mxu0 0
    %2229 = vmatprep.subr.bf16.mxu0 0
    %2230 = vmatpush1.bf16.msra.mxu0 0
    %2231 = vmatprep.subr.bf16.mxu0 0
    %2232 = vmatpush1.bf16.msra.mxu0 0
    %2233 = vmatprep.subr.bf16.mxu0 0
    %2234 = vmatpush1.bf16.msra.mxu0 0
    %2235 = vmatprep.subr.bf16.mxu0 0
    %2236 = vmatpush1.bf16.msra.mxu0 0
    %2237 = vmatprep.subr.bf16.mxu0 0
    %2238 = vmatpush1.bf16.msra.mxu0 0
    %2239 = vmatprep.subr.bf16.mxu0 0
    %2240 = vmatpush1.bf16.msra.mxu0 0
    %2241 = vmatprep.mubr.bf16.mxu0 0
    %2242 = vmatmul.mubr.bf16.gmra.mrb[0].mxu0 %v2195
    %v2243 = vpop.f32.mrb[0].mxu0
    %v2244 = vadd.f32 %v2192, %v2243
    %v2245 = vpop.f32.mrb[0].mxu0
    %v2246 = vadd.f32 %v2192, %v2245
    %v2247 = vpop.f32.mrb[0].mxu0
    %v2248 = vpop.f32.mrb[0].mxu0
    %2249 = vdwg.mxu0
    %2250 = vmatprep.subr.bf16.mxu0 %v2172
    %2251 = vmatpush1.bf16.msra.mxu0 %v2171
    %2252 = vmatprep.subr.bf16.mxu0 %v2176
    %2253 = vmatpush1.bf16.msra.mxu0 %v2175
    %2254 = vmatprep.subr.bf16.mxu0 %v2180
    %2255 = vmatpush1.bf16.msra.mxu0 %v2179
    %2256 = vmatprep.subr.bf16.mxu0 %v2184
    %2257 = vmatpush1.bf16.msra.mxu0 %v2183
    %2258 = vmatprep.subr.bf16.mxu0 %v2207
    %2259 = vmatpush1.bf16.msra.mxu0 %v2204
    %2260 = vmatprep.subr.bf16.mxu0 0
    %2261 = vmatpush1.bf16.msra.mxu0 0
    %2262 = vmatprep.subr.bf16.mxu0 0
    %2263 = vmatpush1.bf16.msra.mxu0 0
    %2264 = vmatprep.subr.bf16.mxu0 0
    %2265 = vmatpush1.bf16.msra.mxu0 0
    %2266 = vmatprep.subr.bf16.mxu0 0
    %2267 = vmatpush1.bf16.msra.mxu0 0
    %2268 = vmatprep.subr.bf16.mxu0 0
    %2269 = vmatpush1.bf16.msra.mxu0 0
    %2270 = vmatprep.subr.bf16.mxu0 0
    %2271 = vmatpush1.bf16.msra.mxu0 0
    %2272 = vmatprep.subr.bf16.mxu0 0
    %2273 = vmatpush1.bf16.msra.mxu0 0
    %2274 = vmatprep.subr.bf16.mxu0 0
    %2275 = vmatpush1.bf16.msra.mxu0 0
    %2276 = vmatprep.subr.bf16.mxu0 0
    %2277 = vmatpush1.bf16.msra.mxu0 0
    %2278 = vmatprep.subr.bf16.mxu0 0
    %2279 = vmatpush1.bf16.msra.mxu0 0
    %2280 = vmatprep.subr.bf16.mxu0 0
    %2281 = vmatpush1.bf16.msra.mxu0 0
    %2282 = vmatprep.mubr.bf16.mxu0 0
    %2283 = vmatmul.mubr.bf16.gmra.mrb[0].mxu0 %v2195
    %v2284 = vpop.f32.mrb[0].mxu0
    %v2285 = vadd.f32 %v2192, %v2284
    %v2286 = vpop.f32.mrb[0].mxu0
    %v2287 = vadd.f32 %v2192, %v2286
    %v2288 = vpop.f32.mrb[0].mxu0
    %v2289 = vpop.f32.mrb[0].mxu0
    %2290 = vdwg.mxu0
    %2291 = vst [vmem:[#allocation6] sm:$0xff] %v2244
    %2292 = vst [vmem:[#allocation6 + $0x8] sm:$0xff] %v2246
    %2293 = vst [vmem:[#allocation6 + $0x10] sm:$0xff] %v2285
    %2294 = vst [vmem:[#allocation6 + $0x18] sm:$0xff] %v2287
    // Predicated region
    $region54: #{tpu_custom_call.1} parent=1 // pred_check
      _
    $region55: #{tpu_custom_call.1} parent=1 // pred_check_branch
      %2296 = sbr.rel (0) target = $region57
    $region56: #{tpu_custom_call.1} parent=1 // pred_region
      %s2298 = ssub.s32 512, 512
      %2299 = vsyncadd [#allocation4], %s2298
      %s2301 = sshll.u32 [#allocation6], 4
      %s2302 = int_to_ptr.vmem [resolvable:$true] %s2301
      %2304 = dma.vmem_to_hbm [thread:$0]  %s2302, 512, %s12, [#allocation4]
    $region57: #{tpu_custom_call.1} parent=1 // pred_fallthru
      _
    // Predicated region
    $region58: #{tpu_custom_call.1} parent=1 // pred_check
      _
    $region59: #{tpu_custom_call.1} parent=1 // pred_check_branch
      %2306 = sbr.rel (0) target = $region61
    $region60: #{tpu_custom_call.1} parent=1 // pred_region
      %2307 = dma.done [#allocation4], 512
    $region61: #{tpu_custom_call.1} parent=1 // pred_fallthru
      _
    %2308 = vsyncpa [#allocation4], 1
    %2309 = vsyncpa [#allocation5], 1

</llo_original>
